<compile_context>
chip_gen: v7x
topology: tpu7x:2x2x1
jax: 0.10.0
libtpu: 0.0.40
codegen_flags: <defaults>
</compile_context>

<pallas_src>
import numpy as np
import jax
import jax.numpy as jnp
from jax import lax
from jax.experimental import pallas as pl
from jax.experimental.pallas import tpu as pltpu

F32 = jnp.float32


# --------------------------- fused forward kernel ----------------------------
def build_forward(P, B, S, n_int, trg_len_max):
    H = int(P["hidden_size"])
    I = int(P["input_size"])
    E = int(P["eid_size"])
    R = int(P["rate_size"])
    ODE = int(P["ode_step"])
    INV = 1.0 / float(ODE)
    ER = E + R

    # ---- in-kernel helpers (pure functions of VMEM-resident values) ----
    def gru_obs(xh, h, wobs, bobs):
        # Single fused matmul; columns: [r | z | n_x | n_h]
        g = jnp.dot(xh, wobs, preferred_element_type=F32) + bobs       # (B,4H)
        r = jax.nn.sigmoid(g[:, 0:H])
        z = jax.nn.sigmoid(g[:, H:2 * H])
        n = jnp.tanh(g[:, 2 * H:3 * H] + r * g[:, 3 * H:4 * H])
        return (1.0 - z) * n + z * h

    def euler(h, wzr, whh):
        zr = jnp.dot(h, wzr, preferred_element_type=F32)               # (B,2H) [z|r]
        z = jax.nn.sigmoid(zr[:, 0:H])
        r = jax.nn.sigmoid(zr[:, H:2 * H])
        h_tilde = jnp.tanh(jnp.dot(r * h, whh, preferred_element_type=F32))
        return h + INV * (1.0 - z) * (h_tilde - h)

    def head(h, w1, b1, embr1, wr2, br2):
        g = jnp.dot(h, w1, preferred_element_type=F32) + b1            # (B,E+H)
        logits = g[:, 0:E]
        r1_h = g[:, E:E + H]
        mx = jnp.max(logits, axis=1, keepdims=True)
        lse = jnp.log(jnp.sum(jnp.exp(logits - mx), axis=1, keepdims=True)) + mx
        logp = logits - lse
        # first-occurrence argmax -> one-hot; embedding@wr1_emb pre-fused host-side
        iota = lax.broadcasted_iota(jnp.int32, logits.shape, 1)
        cand = jnp.where(logits == mx, iota, E)
        first = jnp.min(cand, axis=1, keepdims=True)
        onehot = (iota == first).astype(F32)
        # TODO(synk): nn.Dropout on the embedding is identity (eval-mode).
        r1 = jnp.dot(onehot, embr1, preferred_element_type=F32) + r1_h
        r2 = jnp.dot(jnp.maximum(r1, 0.0), wr2,
                     preferred_element_type=F32) + br2
        return logp, jax.nn.sigmoid(r2)                                # (B,E),(B,R)

    def kernel(sched_ref,                               # SMEM: [dt | m | row], 3*n_int
               src_ref,                                 # (S,B,I) VMEM resident
               wobs_ref, bobs_ref,                      # gru_obs fused (I+H,4H)
               wzr_ref, whh_ref,                        # gru_ode fused z|r
               w1_ref, b1_ref, embr1_ref, wr2_ref, br2_ref,   # head fused
               out_ref):                                # (trg_len_max,B,E+R)
        # Weights load exactly once (grid collapsed to a single step).
        wobs, bobs = wobs_ref[...], bobs_ref[...]
        wzr, whh = wzr_ref[...], whh_ref[...]
        w1, b1 = w1_ref[...], b1_ref[...]
        embr1, wr2, br2 = embr1_ref[...], wr2_ref[...], br2_ref[...]

        # Zero the merged output once; the interval loop fills its rows.
        out_ref[...] = jnp.zeros_like(out_ref)

        # Initial hidden: h = gru_obs(src[0], hx=None -> zeros).
        zeros_h = jnp.zeros((B, H), F32)
        x0 = src_ref[0]
        h = gru_obs(jnp.concatenate([x0, zeros_h], axis=1), zeros_h, wobs, bobs)

        def macro_step(_, hh):
            # ode_step Euler micro-steps, statically unrolled (review item 7).
            for _ in range(ODE):
                hh = euler(hh, wzr, whh)
            return hh

        row_iota = lax.broadcasted_iota(jnp.int32, (B, 1), 0)

        # Interval loop fully inside the kernel (n_int is small and static).
        for k in range(n_int):
            dt = sched_ref[k]                       # >= 1 (asserted host-side)
            m = sched_ref[n_int + k]
            row = sched_ref[2 * n_int + k]

            # Euler to the surviving head point: traj[ode_step*(dt-1)].
            h_head = lax.fori_loop(0, dt - 1, macro_step, h)

            # Remaining micro-steps to traj[ode_step*dt - 1] (= h_ode[-1]).
            h_next = h_head
            for _ in range(ODE - 1):
                h_next = euler(h_next, wzr, whh)

            # Observation update (masked update == indexed update, row-indep).
            x_obs = src_ref[row]                                       # (B,I)
            h_upd = gru_obs(jnp.concatenate([x_obs, h_next], axis=1),
                            h_next, wobs, bobs)
            obs_mask = x_obs[:, I - 1:I] != -1.0                       # (B,1)
            h = jnp.where(obs_mask, h_upd, h_next)

            # Muti-task head: only the surviving write of the reference's
            # per-j loop is computed (last j; overwritten by h on the final
            # interval).
            h_for_head = h if k == n_int - 1 else h_head
            logp, rate = head(h_for_head, w1, b1, embr1, wr2, br2)

            # Mask inactive batch rows (>= m, incl. sublane padding) to zero
            # and store both outputs with one lane-packed write at row.
            vals = jnp.concatenate([logp, rate], axis=1)               # (B,E+R)
            out_ref[row] = jnp.where(row_iota < m, vals, 0.0)

    def const_spec(shape):
        return pl.BlockSpec(shape, lambda i, *pf: (0,) * len(shape))

    grid_spec = pltpu.PrefetchScalarGridSpec(
        num_scalar_prefetch=1,                      # packed [dt | m | row]
        grid=(1,),                                  # grid collapsed
        in_specs=[
            const_spec((S, B, I)),                                      # src
            const_spec((I + H, 4 * H)), const_spec((1, 4 * H)),         # gru_obs
            const_spec((H, 2 * H)), const_spec((H, H)),                 # gru_ode
            const_spec((H, E + H)), const_spec((1, E + H)),             # head lin1
            const_spec((E, H)),                                         # emb@wr1_emb
            const_spec((H, R)), const_spec((1, R)),                     # head lin2
        ],
        out_specs=pl.BlockSpec((trg_len_max, B, ER), lambda i, *pf: (0, 0, 0)),
    )

    return pl.pallas_call(
        kernel,
        grid_spec=grid_spec,
        out_shape=jax.ShapeDtypeStruct((trg_len_max, B, ER), F32),
        compiler_params=pltpu.CompilerParams(
            dimension_semantics=("arbitrary",)),
    )


# --------------------------- weight prep (host side) --------------------------
def prep_fused_weights(weights, P):
    H, I = int(P["hidden_size"]), int(P["input_size"])
    E, D, R = int(P["eid_size"]), int(P["embedding_size"]), int(P["rate_size"])
    go, ge, mt = weights["gru_obs"], weights["gru_ode"], weights["muti_task"]

    # gru_obs fused: (I+H, 4H); columns [r | z | n_x | n_h]
    w_obs = jnp.concatenate([
        jnp.concatenate([go["wi"], jnp.zeros((I, H), F32)], axis=1),
        jnp.concatenate([go["wh"][:, :2 * H], jnp.zeros((H, H), F32),
                         go["wh"][:, 2 * H:]], axis=1),
    ], axis=0)
    b_obs = jnp.concatenate([go["bi"][:2 * H] + go["bh"][:2 * H],
                             go["bi"][2 * H:], go["bh"][2 * H:]]).reshape(1, 4 * H)

    # gru_ode fused: (H, 2H) columns [z | r]; h_tilde matrix separate (serial dep).
    wzr = jnp.concatenate([ge["w_hz"], ge["w_hr"]], axis=1)
    whh = ge["w_hh"]

    # head fused: [weid | wr1_h] as (H, E+H); emb @ wr1_emb precomputed to (E,H).
    w_head1 = jnp.concatenate([mt["w_eid"], mt["w_r1"][D:, :]], axis=1)
    b_head1 = jnp.concatenate([mt["b_eid"], mt["b_r1"]]).reshape(1, E + H)
    emb_r1 = mt["emb"] @ mt["w_r1"][:D, :]
    wr2 = mt["w_r2"]
    br2 = mt["b_r2"].reshape(1, R)
    return (w_obs, b_obs, wzr, whh, w_head1, b_head1, emb_r1, wr2, br2)


# --------------------------------- wrapper -----------------------------------
def gru_ode_bayes_forward(weights, P, src, src_len, trg_len):
    """src: (S, B, I) jnp array; src_len/trg_len: host int arrays (mirrors the
    Python-level control flow on tensor scalars in the PyTorch reference)."""
    src_len = np.asarray(src_len)
    trg_len = np.asarray(trg_len)
    assert np.all(np.diff(src_len) >= 1), "src_len must be strictly increasing"
    trg_len_max = int(trg_len[0])
    S, B, I = src.shape
    E, R = int(P["eid_size"]), int(P["rate_size"])
    n_int = src_len.shape[0] - 1

    # Pad batch to a whole sublane tile; padded rows are masked in-kernel.
    B_pad = -(-B // 8) * 8
    src_pad = src
    if B_pad != B:
        src_pad = jnp.concatenate(
            [src, jnp.zeros((S, B_pad - B, I), F32)], axis=1)

    # Host-side schedule (pure integer bookkeeping; only SMEM *values* change
    # between calls with the same shapes -> no recompiles).
    dt_s = np.zeros(n_int, np.int32)
    m_s = np.zeros(n_int, np.int32)
    row_s = np.zeros(n_int, np.int32)
    min_len_idx = len(trg_len)
    for k, i in enumerate(range(1, src_len.shape[0])):
        while src_len[i] >= trg_len[min_len_idx - 1]:
            min_len_idx -= 1
        dt_s[k] = src_len[i] - src_len[i - 1]
        m_s[k] = min_len_idx
        row_s[k] = src_len[i]
    sched = jnp.asarray(np.concatenate([dt_s, m_s, row_s]).astype(np.int32))

    fused = build_forward(P, B_pad, S, n_int, trg_len_max)
    out = fused(sched, src_pad, *prep_fused_weights(weights, P))

    eid_result = out[:, :B, :E]
    rate_result = out[:, :B, E]
    return eid_result, rate_result


# -------------------- pure-JAX reference (PyTorch semantics) ------------------
def _gru_cell_ref(x, h, p, H):
    gi = x @ p["wi"] + p["bi"]
    gh = h @ p["wh"] + p["bh"]
    r = jax.nn.sigmoid(gi[:, :H] + gh[:, :H])
    z = jax.nn.sigmoid(gi[:, H:2 * H] + gh[:, H:2 * H])
    n = jnp.tanh(gi[:, 2 * H:] + r * gh[:, 2 * H:])
    return (1.0 - z) * n + z * h


def _ode_func_ref(h, p):
    z = jax.nn.sigmoid(h @ p["w_hz"])
    r = jax.nn.sigmoid(h @ p["w_hr"])
    h_tilde = jnp.tanh((r * h) @ p["w_hh"])
    return (1.0 - z) * (h_tilde - h)


def _head_ref(h, p):
    logits = h @ p["w_eid"] + p["b_eid"]
    logp = jax.nn.log_softmax(logits, axis=1)
    idx = jnp.argmax(logp, axis=1)
    emb_vec = p["emb"][idx]
    r1 = jnp.concatenate([emb_vec, h], axis=1) @ p["w_r1"] + p["b_r1"]
    r2 = jnp.maximum(r1, 0.0) @ p["w_r2"] + p["b_r2"]
    return logp, jax.nn.sigmoid(r2)[:, 0]


def reference_forward(weights, P, src, src_len, trg_len):
    src_len = np.asarray(src_len)
    trg_len = np.asarray(trg_len)
    H = int(P["hidden_size"])
    E = int(P["eid_size"])
    ODE = int(P["ode_step"])
    inv = 1.0 / ODE
    trg_len_max = int(trg_len[0])
    B = src.shape[1]
    go, ge, mt = weights["gru_obs"], weights["gru_ode"], weights["muti_task"]
    eid = jnp.zeros((trg_len_max, B, E), F32)
    rate = jnp.zeros((trg_len_max, B), F32)
    min_len_idx = len(trg_len)
    h = _gru_cell_ref(src[0], jnp.zeros((B, H), F32), go, H)
    for i in range(1, src_len.shape[0]):
        while src_len[i] >= trg_len[min_len_idx - 1]:
            min_len_idx -= 1
        m = int(min_len_idx)
        dt = int(src_len[i] - src_len[i - 1])
        T = ODE * dt + 1
        traj = [h[:m]]
        for _ in range(T - 1):
            traj.append(traj[-1] + inv * _ode_func_ref(traj[-1], ge))
        index = list(range(0, T - 1, ODE)) + [T - 2]
        h_ode = [traj[t] for t in index]
        h = h_ode[-1]
        row = int(src_len[i])
        x_obs = src[row, :m, :]
        mask = (x_obs[:, -1] != -1.0)[:, None]
        h = jnp.where(mask, _gru_cell_ref(x_obs, h, go, H), h)
        for j in range(len(h_ode) - 1):
            lp, rt = _head_ref(h_ode[j], mt)
            eid = eid.at[row, :m].set(lp)
            rate = rate.at[row, :m].set(rt)
        if i == src_len.shape[0] - 1:
            lp, rt = _head_ref(h, mt)
            eid = eid.at[row, :m].set(lp)
            rate = rate.at[row, :m].set(rt)
    return eid, rate


# ------------------------------- param init ----------------------------------
def init_weights(P, key):
    H, I = int(P["hidden_size"]), int(P["input_size"])
    E, D, R = int(P["eid_size"]), int(P["embedding_size"]), int(P["rate_size"])
    keys = iter(jax.random.split(key, 16))

    def nrm(shape, scale=0.1):
        return scale * jax.random.normal(next(keys), shape, dtype=F32)

    # Canonical (PyTorch-like) layouts: gru_obs gates ordered [r | z | n].
    gru_obs = dict(wi=nrm((I, 3 * H)), wh=nrm((H, 3 * H)),
                   bi=nrm((3 * H,)), bh=nrm((3 * H,)))
    gru_ode = dict(w_hz=nrm((H, H)), w_hr=nrm((H, H)), w_hh=nrm((H, H)))
    muti = dict(emb=nrm((E, D)), w_eid=nrm((H, E)), b_eid=nrm((E,)),
                w_r1=nrm((D + H, H)), b_r1=nrm((H,)),
                w_r2=nrm((H, R)), b_r2=nrm((R,)))
    return dict(gru_obs=gru_obs, gru_ode=gru_ode, muti_task=muti)


# ---------------------------------- main --------------------------------------
if __name__ == "__main__":
    P = dict(input_size=8, hidden_size=32, eid_size=16, embedding_size=8,
             rate_size=1, ode_step=2, dropout_rate=0.1, zeros_x=True)

    key = jax.random.PRNGKey(0)
    kw, kx = jax.random.split(key)
    weights = init_weights(P, kw)

    S, B = 8, 4
    src = jax.random.normal(kx, (S, B, P["input_size"]), dtype=F32)
    # Mark even batch rows as "no observation" at every timestep (last feat=-1).
    src = src.at[:, ::2, -1].set(-1.0)

    src_len = np.array([0, 2, 4, 6], dtype=np.int64)   # strictly increasing
    trg_len = np.array([8, 7, 6, 5], dtype=np.int64)   # sorted descending, len==batch

    eid_result, rate_result = gru_ode_bayes_forward(weights, P, src,
                                                    src_len, trg_len)
    jax.block_until_ready((eid_result, rate_result))
    assert eid_result.shape == (int(trg_len[0]), B, P["eid_size"])
    assert rate_result.shape == (int(trg_len[0]), B)

    # Cross-check the fused kernel against a pure-JAX port of the PyTorch loop.
    eid_ref, rate_ref = reference_forward(weights, P, src, src_len, trg_len)
    err_eid = float(jnp.max(jnp.abs(eid_result - eid_ref)))
    err_rate = float(jnp.max(jnp.abs(rate_result - rate_ref)))
    assert err_eid < 1e-3 and err_rate < 1e-3, (err_eid, err_rate)

    print("KERNEL_OK")
</pallas_src>

<mosaic_0001>
module attributes {stable_mosaic.version = 11 : i64} {
  func.func @kernel(%arg0: i32, %arg1: memref<9xi32, #tpu.memory_space<smem>>, %arg2: memref<8x8x8xf32, #tpu.memory_space<vmem>>, %arg3: memref<40x128xf32, #tpu.memory_space<vmem>>, %arg4: memref<1x128xf32, #tpu.memory_space<vmem>>, %arg5: memref<32x64xf32, #tpu.memory_space<vmem>>, %arg6: memref<32x32xf32, #tpu.memory_space<vmem>>, %arg7: memref<32x48xf32, #tpu.memory_space<vmem>>, %arg8: memref<1x48xf32, #tpu.memory_space<vmem>>, %arg9: memref<16x32xf32, #tpu.memory_space<vmem>>, %arg10: memref<32x1xf32, #tpu.memory_space<vmem>>, %arg11: memref<1x1xf32, #tpu.memory_space<vmem>>, %arg12: memref<8x8x17xf32, #tpu.memory_space<vmem>>) attributes {dimension_semantics = [#tpu.dimension_semantics<arbitrary>], iteration_bounds = array<i64: 1>, scalar_prefetch = 1 : i64, scratch_operands = 0 : i64, tpu.core_type = #tpu.core_type<tc>, window_params = [{pipeline_mode = #tpu.pipeline_mode<synchronous>, transform_indices = @transform_0, window_bounds = array<i64: 8, 8, 8>}, {pipeline_mode = #tpu.pipeline_mode<synchronous>, transform_indices = @transform_1, window_bounds = array<i64: 40, 128>}, {pipeline_mode = #tpu.pipeline_mode<synchronous>, transform_indices = @transform_2, window_bounds = array<i64: 1, 128>}, {pipeline_mode = #tpu.pipeline_mode<synchronous>, transform_indices = @transform_3, window_bounds = array<i64: 32, 64>}, {pipeline_mode = #tpu.pipeline_mode<synchronous>, transform_indices = @transform_4, window_bounds = array<i64: 32, 32>}, {pipeline_mode = #tpu.pipeline_mode<synchronous>, transform_indices = @transform_5, window_bounds = array<i64: 32, 48>}, {pipeline_mode = #tpu.pipeline_mode<synchronous>, transform_indices = @transform_6, window_bounds = array<i64: 1, 48>}, {pipeline_mode = #tpu.pipeline_mode<synchronous>, transform_indices = @transform_7, window_bounds = array<i64: 16, 32>}, {pipeline_mode = #tpu.pipeline_mode<synchronous>, transform_indices = @transform_8, window_bounds = array<i64: 32, 1>}, {pipeline_mode = #tpu.pipeline_mode<synchronous>, transform_indices = @transform_9, window_bounds = array<i64: 1, 1>}, {pipeline_mode = #tpu.pipeline_mode<synchronous>, transform_indices = @transform_10, window_bounds = array<i64: 8, 8, 17>}]} {
    %c0 = arith.constant 0 : index
    %c0_0 = arith.constant 0 : index
    %0 = vector.load %arg3[%c0, %c0_0] : memref<40x128xf32, #tpu.memory_space<vmem>>, vector<40x128xf32>
    %c0_1 = arith.constant 0 : index
    %c0_2 = arith.constant 0 : index
    %1 = vector.load %arg4[%c0_1, %c0_2] : memref<1x128xf32, #tpu.memory_space<vmem>>, vector<1x128xf32>
    %c0_3 = arith.constant 0 : index
    %c0_4 = arith.constant 0 : index
    %2 = vector.load %arg5[%c0_3, %c0_4] : memref<32x64xf32, #tpu.memory_space<vmem>>, vector<32x64xf32>
    %c0_5 = arith.constant 0 : index
    %c0_6 = arith.constant 0 : index
    %3 = vector.load %arg6[%c0_5, %c0_6] : memref<32x32xf32, #tpu.memory_space<vmem>>, vector<32x32xf32>
    %c0_7 = arith.constant 0 : index
    %c0_8 = arith.constant 0 : index
    %4 = vector.load %arg7[%c0_7, %c0_8] : memref<32x48xf32, #tpu.memory_space<vmem>>, vector<32x48xf32>
    %c0_9 = arith.constant 0 : index
    %c0_10 = arith.constant 0 : index
    %5 = vector.load %arg8[%c0_9, %c0_10] : memref<1x48xf32, #tpu.memory_space<vmem>>, vector<1x48xf32>
    %c0_11 = arith.constant 0 : index
    %c0_12 = arith.constant 0 : index
    %6 = vector.load %arg9[%c0_11, %c0_12] : memref<16x32xf32, #tpu.memory_space<vmem>>, vector<16x32xf32>
    %c0_13 = arith.constant 0 : index
    %c0_14 = arith.constant 0 : index
    %7 = vector.load %arg10[%c0_13, %c0_14] : memref<32x1xf32, #tpu.memory_space<vmem>>, vector<32x1xf32>
    %c0_15 = arith.constant 0 : index
    %c0_16 = arith.constant 0 : index
    %8 = vector.load %arg11[%c0_15, %c0_16] : memref<1x1xf32, #tpu.memory_space<vmem>>, vector<1x1xf32>
    %cst = arith.constant 0.000000e+00 : f32
    %9 = vector.broadcast %cst : f32 to vector<8x8x17xf32>
    %c0_17 = arith.constant 0 : index
    %c0_18 = arith.constant 0 : index
    %c0_19 = arith.constant 0 : index
    %10 = vector.load %arg12[%c0_17, %c0_18, %c0_19] : memref<8x8x17xf32, #tpu.memory_space<vmem>>, vector<8x8x17xf32>
    tpu.vector_store %arg12[%c0_17, %c0_18, %c0_19], %9 {strides = array<i32>} : memref<8x8x17xf32, #tpu.memory_space<vmem>>, vector<8x8x17xf32>,
    %cst_20 = arith.constant 0.000000e+00 : f32
    %11 = vector.broadcast %cst_20 : f32 to vector<8x32xf32>
    %c0_21 = arith.constant 0 : index
    %c0_22 = arith.constant 0 : index
    %c0_23 = arith.constant 0 : index
    %12 = vector.load %arg2[%c0_21, %c0_22, %c0_23] : memref<8x8x8xf32, #tpu.memory_space<vmem>>, vector<1x8x8xf32>
    %13 = vector.shape_cast %12 : vector<1x8x8xf32> to vector<8x8xf32>
    %14 = tpu.concatenate %13, %11 in 1 : vector<8x8xf32>, vector<8x32xf32> -> vector<8x40xf32>
    %cst_24 = arith.constant dense<0.000000e+00> : vector<8x128xf32>
    %15 = tpu.matmul %14, %0, %cst_24 {dimension_numbers = #tpu.dot_dimension_numbers<[1], [0], [0], [1], [0, 0, 1, 1], [], []>} : vector<8x40xf32>, vector<40x128xf32>, vector<8x128xf32> -> vector<8x128xf32>
    %16 = vector.broadcast %1 : vector<1x128xf32> to vector<8x128xf32>
    %17 = arith.addf %15, %16 : vector<8x128xf32>
    %18 = vector.extract_strided_slice %17 {offsets = [0, 0], sizes = [8, 32], strides = [1, 1]} : vector<8x128xf32> to vector<8x32xf32>
    %19 = arith.negf %18 : vector<8x32xf32>
    %20 = math.exp %19 : vector<8x32xf32>
    %cst_25 = arith.constant 1.000000e+00 : f32
    %21 = vector.broadcast %cst_25 : f32 to vector<8x32xf32>
    %22 = arith.addf %21, %20 : vector<8x32xf32>
    %23 = arith.divf %21, %22 : vector<8x32xf32>
    %24 = vector.extract_strided_slice %17 {offsets = [0, 32], sizes = [8, 32], strides = [1, 1]} : vector<8x128xf32> to vector<8x32xf32>
    %25 = arith.negf %24 : vector<8x32xf32>
    %26 = math.exp %25 : vector<8x32xf32>
    %cst_26 = arith.constant 1.000000e+00 : f32
    %27 = vector.broadcast %cst_26 : f32 to vector<8x32xf32>
    %28 = arith.addf %27, %26 : vector<8x32xf32>
    %29 = arith.divf %27, %28 : vector<8x32xf32>
    %30 = vector.extract_strided_slice %17 {offsets = [0, 64], sizes = [8, 32], strides = [1, 1]} : vector<8x128xf32> to vector<8x32xf32>
    %31 = vector.extract_strided_slice %17 {offsets = [0, 96], sizes = [8, 32], strides = [1, 1]} : vector<8x128xf32> to vector<8x32xf32>
    %32 = arith.mulf %23, %31 : vector<8x32xf32>
    %33 = arith.addf %30, %32 : vector<8x32xf32>
    %34 = math.tanh %33 : vector<8x32xf32>
    %cst_27 = arith.constant 1.000000e+00 : f32
    %35 = vector.broadcast %cst_27 : f32 to vector<8x32xf32>
    %36 = arith.subf %35, %29 : vector<8x32xf32>
    %37 = arith.mulf %36, %34 : vector<8x32xf32>
    %38 = arith.mulf %29, %11 : vector<8x32xf32>
    %39 = arith.addf %37, %38 : vector<8x32xf32>
    %40 = tpu.iota {dimensions = array<i32: 0>} : vector<8x1xi32>
    %c0_28 = arith.constant 0 : index
    %41 = memref.load %arg1[%c0_28] : memref<9xi32, #tpu.memory_space<smem>>
    %c3 = arith.constant 3 : index
    %42 = memref.load %arg1[%c3] : memref<9xi32, #tpu.memory_space<smem>>
    %c6 = arith.constant 6 : index
    %43 = memref.load %arg1[%c6] : memref<9xi32, #tpu.memory_space<smem>>
    %c1_i32 = arith.constant 1 : i32
    %44 = arith.subi %41, %c1_i32 : i32
    %c0_i32 = arith.constant 0 : i32
    %45 = arith.subi %44, %c0_i32 : i32
    %46 = arith.addi %c0_i32, %45 : i32
    %c1_i32_29 = arith.constant 1 : i32
    %47 = scf.for %arg13 = %c0_i32 to %46 step %c1_i32_29 iter_args(%arg14 = %39) -> (vector<8x32xf32>)  : i32 {
      %cst_110 = arith.constant dense<0.000000e+00> : vector<8x64xf32>
      %386 = tpu.matmul %arg14, %2, %cst_110 {dimension_numbers = #tpu.dot_dimension_numbers<[1], [0], [0], [1], [0, 0, 1, 1], [], []>} : vector<8x32xf32>, vector<32x64xf32>, vector<8x64xf32> -> vector<8x64xf32>
      %387 = vector.extract_strided_slice %386 {offsets = [0, 0], sizes = [8, 32], strides = [1, 1]} : vector<8x64xf32> to vector<8x32xf32>
      %388 = arith.negf %387 : vector<8x32xf32>
      %389 = math.exp %388 : vector<8x32xf32>
      %cst_111 = arith.constant 1.000000e+00 : f32
      %390 = vector.broadcast %cst_111 : f32 to vector<8x32xf32>
      %391 = arith.addf %390, %389 : vector<8x32xf32>
      %392 = arith.divf %390, %391 : vector<8x32xf32>
      %393 = vector.extract_strided_slice %386 {offsets = [0, 32], sizes = [8, 32], strides = [1, 1]} : vector<8x64xf32> to vector<8x32xf32>
      %394 = arith.negf %393 : vector<8x32xf32>
      %395 = math.exp %394 : vector<8x32xf32>
      %cst_112 = arith.constant 1.000000e+00 : f32
      %396 = vector.broadcast %cst_112 : f32 to vector<8x32xf32>
      %397 = arith.addf %396, %395 : vector<8x32xf32>
      %398 = arith.divf %396, %397 : vector<8x32xf32>
      %399 = arith.mulf %398, %arg14 : vector<8x32xf32>
      %cst_113 = arith.constant dense<0.000000e+00> : vector<8x32xf32>
      %400 = tpu.matmul %399, %3, %cst_113 {dimension_numbers = #tpu.dot_dimension_numbers<[1], [0], [0], [1], [0, 0, 1, 1], [], []>} : vector<8x32xf32>, vector<32x32xf32>, vector<8x32xf32> -> vector<8x32xf32>
      %401 = math.tanh %400 : vector<8x32xf32>
      %cst_114 = arith.constant 1.000000e+00 : f32
      %402 = vector.broadcast %cst_114 : f32 to vector<8x32xf32>
      %403 = arith.subf %402, %392 : vector<8x32xf32>
      %cst_115 = arith.constant 5.000000e-01 : f32
      %404 = vector.broadcast %cst_115 : f32 to vector<8x32xf32>
      %405 = arith.mulf %404, %403 : vector<8x32xf32>
      %406 = arith.subf %401, %arg14 : vector<8x32xf32>
      %407 = arith.mulf %405, %406 : vector<8x32xf32>
      %408 = arith.addf %arg14, %407 : vector<8x32xf32>
      %cst_116 = arith.constant dense<0.000000e+00> : vector<8x64xf32>
      %409 = tpu.matmul %408, %2, %cst_116 {dimension_numbers = #tpu.dot_dimension_numbers<[1], [0], [0], [1], [0, 0, 1, 1], [], []>} : vector<8x32xf32>, vector<32x64xf32>, vector<8x64xf32> -> vector<8x64xf32>
      %410 = vector.extract_strided_slice %409 {offsets = [0, 0], sizes = [8, 32], strides = [1, 1]} : vector<8x64xf32> to vector<8x32xf32>
      %411 = arith.negf %410 : vector<8x32xf32>
      %412 = math.exp %411 : vector<8x32xf32>
      %cst_117 = arith.constant 1.000000e+00 : f32
      %413 = vector.broadcast %cst_117 : f32 to vector<8x32xf32>
      %414 = arith.addf %413, %412 : vector<8x32xf32>
      %415 = arith.divf %413, %414 : vector<8x32xf32>
      %416 = vector.extract_strided_slice %409 {offsets = [0, 32], sizes = [8, 32], strides = [1, 1]} : vector<8x64xf32> to vector<8x32xf32>
      %417 = arith.negf %416 : vector<8x32xf32>
      %418 = math.exp %417 : vector<8x32xf32>
      %cst_118 = arith.constant 1.000000e+00 : f32
      %419 = vector.broadcast %cst_118 : f32 to vector<8x32xf32>
      %420 = arith.addf %419, %418 : vector<8x32xf32>
      %421 = arith.divf %419, %420 : vector<8x32xf32>
      %422 = arith.mulf %421, %408 : vector<8x32xf32>
      %cst_119 = arith.constant dense<0.000000e+00> : vector<8x32xf32>
      %423 = tpu.matmul %422, %3, %cst_119 {dimension_numbers = #tpu.dot_dimension_numbers<[1], [0], [0], [1], [0, 0, 1, 1], [], []>} : vector<8x32xf32>, vector<32x32xf32>, vector<8x32xf32> -> vector<8x32xf32>
      %424 = math.tanh %423 : vector<8x32xf32>
      %cst_120 = arith.constant 1.000000e+00 : f32
      %425 = vector.broadcast %cst_120 : f32 to vector<8x32xf32>
      %426 = arith.subf %425, %415 : vector<8x32xf32>
      %cst_121 = arith.constant 5.000000e-01 : f32
      %427 = vector.broadcast %cst_121 : f32 to vector<8x32xf32>
      %428 = arith.mulf %427, %426 : vector<8x32xf32>
      %429 = arith.subf %424, %408 : vector<8x32xf32>
      %430 = arith.mulf %428, %429 : vector<8x32xf32>
      %431 = arith.addf %408, %430 : vector<8x32xf32>
      scf.yield %431 : vector<8x32xf32>
    }
    %cst_30 = arith.constant dense<0.000000e+00> : vector<8x64xf32>
    %48 = tpu.matmul %47, %2, %cst_30 {dimension_numbers = #tpu.dot_dimension_numbers<[1], [0], [0], [1], [0, 0, 1, 1], [], []>} : vector<8x32xf32>, vector<32x64xf32>, vector<8x64xf32> -> vector<8x64xf32>
    %49 = vector.extract_strided_slice %48 {offsets = [0, 0], sizes = [8, 32], strides = [1, 1]} : vector<8x64xf32> to vector<8x32xf32>
    %50 = arith.negf %49 : vector<8x32xf32>
    %51 = math.exp %50 : vector<8x32xf32>
    %cst_31 = arith.constant 1.000000e+00 : f32
    %52 = vector.broadcast %cst_31 : f32 to vector<8x32xf32>
    %53 = arith.addf %52, %51 : vector<8x32xf32>
    %54 = arith.divf %52, %53 : vector<8x32xf32>
    %55 = vector.extract_strided_slice %48 {offsets = [0, 32], sizes = [8, 32], strides = [1, 1]} : vector<8x64xf32> to vector<8x32xf32>
    %56 = arith.negf %55 : vector<8x32xf32>
    %57 = math.exp %56 : vector<8x32xf32>
    %cst_32 = arith.constant 1.000000e+00 : f32
    %58 = vector.broadcast %cst_32 : f32 to vector<8x32xf32>
    %59 = arith.addf %58, %57 : vector<8x32xf32>
    %60 = arith.divf %58, %59 : vector<8x32xf32>
    %61 = arith.mulf %60, %47 : vector<8x32xf32>
    %cst_33 = arith.constant dense<0.000000e+00> : vector<8x32xf32>
    %62 = tpu.matmul %61, %3, %cst_33 {dimension_numbers = #tpu.dot_dimension_numbers<[1], [0], [0], [1], [0, 0, 1, 1], [], []>} : vector<8x32xf32>, vector<32x32xf32>, vector<8x32xf32> -> vector<8x32xf32>
    %63 = math.tanh %62 : vector<8x32xf32>
    %cst_34 = arith.constant 1.000000e+00 : f32
    %64 = vector.broadcast %cst_34 : f32 to vector<8x32xf32>
    %65 = arith.subf %64, %54 : vector<8x32xf32>
    %cst_35 = arith.constant 5.000000e-01 : f32
    %66 = vector.broadcast %cst_35 : f32 to vector<8x32xf32>
    %67 = arith.mulf %66, %65 : vector<8x32xf32>
    %68 = arith.subf %63, %47 : vector<8x32xf32>
    %69 = arith.mulf %67, %68 : vector<8x32xf32>
    %70 = arith.addf %47, %69 : vector<8x32xf32>
    %71 = arith.index_cast %43 : i32 to index
    %c0_36 = arith.constant 0 : index
    %c0_37 = arith.constant 0 : index
    %72 = vector.load %arg2[%71, %c0_36, %c0_37] : memref<8x8x8xf32, #tpu.memory_space<vmem>>, vector<1x8x8xf32>
    %73 = vector.shape_cast %72 : vector<1x8x8xf32> to vector<8x8xf32>
    %74 = tpu.concatenate %73, %70 in 1 : vector<8x8xf32>, vector<8x32xf32> -> vector<8x40xf32>
    %cst_38 = arith.constant dense<0.000000e+00> : vector<8x128xf32>
    %75 = tpu.matmul %74, %0, %cst_38 {dimension_numbers = #tpu.dot_dimension_numbers<[1], [0], [0], [1], [0, 0, 1, 1], [], []>} : vector<8x40xf32>, vector<40x128xf32>, vector<8x128xf32> -> vector<8x128xf32>
    %76 = vector.broadcast %1 : vector<1x128xf32> to vector<8x128xf32>
    %77 = arith.addf %75, %76 : vector<8x128xf32>
    %78 = vector.extract_strided_slice %77 {offsets = [0, 0], sizes = [8, 32], strides = [1, 1]} : vector<8x128xf32> to vector<8x32xf32>
    %79 = arith.negf %78 : vector<8x32xf32>
    %80 = math.exp %79 : vector<8x32xf32>
    %cst_39 = arith.constant 1.000000e+00 : f32
    %81 = vector.broadcast %cst_39 : f32 to vector<8x32xf32>
    %82 = arith.addf %81, %80 : vector<8x32xf32>
    %83 = arith.divf %81, %82 : vector<8x32xf32>
    %84 = vector.extract_strided_slice %77 {offsets = [0, 32], sizes = [8, 32], strides = [1, 1]} : vector<8x128xf32> to vector<8x32xf32>
    %85 = arith.negf %84 : vector<8x32xf32>
    %86 = math.exp %85 : vector<8x32xf32>
    %cst_40 = arith.constant 1.000000e+00 : f32
    %87 = vector.broadcast %cst_40 : f32 to vector<8x32xf32>
    %88 = arith.addf %87, %86 : vector<8x32xf32>
    %89 = arith.divf %87, %88 : vector<8x32xf32>
    %90 = vector.extract_strided_slice %77 {offsets = [0, 64], sizes = [8, 32], strides = [1, 1]} : vector<8x128xf32> to vector<8x32xf32>
    %91 = vector.extract_strided_slice %77 {offsets = [0, 96], sizes = [8, 32], strides = [1, 1]} : vector<8x128xf32> to vector<8x32xf32>
    %92 = arith.mulf %83, %91 : vector<8x32xf32>
    %93 = arith.addf %90, %92 : vector<8x32xf32>
    %94 = math.tanh %93 : vector<8x32xf32>
    %cst_41 = arith.constant 1.000000e+00 : f32
    %95 = vector.broadcast %cst_41 : f32 to vector<8x32xf32>
    %96 = arith.subf %95, %89 : vector<8x32xf32>
    %97 = arith.mulf %96, %94 : vector<8x32xf32>
    %98 = arith.mulf %89, %70 : vector<8x32xf32>
    %99 = arith.addf %97, %98 : vector<8x32xf32>
    %100 = vector.extract_strided_slice %73 {offsets = [0, 7], sizes = [8, 1], strides = [1, 1]} : vector<8x8xf32> to vector<8x1xf32>
    %cst_42 = arith.constant -1.000000e+00 : f32
    %101 = vector.broadcast %cst_42 : f32 to vector<8x1xf32>
    %102 = arith.cmpf one, %100, %101 : vector<8x1xf32>
    %103 = vector.shape_cast %102 : vector<8x1xi1> to vector<8x1xi1>
    %104 = vector.broadcast %103 : vector<8x1xi1> to vector<8x32xi1>
    %105 = arith.select %104, %99, %70 : vector<8x32xi1>, vector<8x32xf32>
    %cst_43 = arith.constant dense<0.000000e+00> : vector<8x48xf32>
    %106 = tpu.matmul %47, %4, %cst_43 {dimension_numbers = #tpu.dot_dimension_numbers<[1], [0], [0], [1], [0, 0, 1, 1], [], []>} : vector<8x32xf32>, vector<32x48xf32>, vector<8x48xf32> -> vector<8x48xf32>
    %107 = vector.broadcast %5 : vector<1x48xf32> to vector<8x48xf32>
    %108 = arith.addf %106, %107 : vector<8x48xf32>
    %109 = vector.extract_strided_slice %108 {offsets = [0, 0], sizes = [8, 16], strides = [1, 1]} : vector<8x48xf32> to vector<8x16xf32>
    %110 = vector.extract_strided_slice %108 {offsets = [0, 16], sizes = [8, 32], strides = [1, 1]} : vector<8x48xf32> to vector<8x32xf32>
    %cst_44 = arith.constant dense<0xFF800000> : vector<8xf32>
    %111 = vector.multi_reduction <maximumf>, %109, %cst_44 [1] : vector<8x16xf32> to vector<8xf32>
    %112 = vector.shape_cast %111 : vector<8xf32> to vector<8x1xf32>
    %113 = vector.broadcast %112 : vector<8x1xf32> to vector<8x16xf32>
    %114 = arith.subf %109, %113 : vector<8x16xf32>
    %115 = math.exp %114 : vector<8x16xf32>
    %cst_45 = arith.constant dense<0.000000e+00> : vector<8xf32>
    %116 = vector.multi_reduction <add>, %115, %cst_45 [1] : vector<8x16xf32> to vector<8xf32>
    %117 = vector.shape_cast %116 : vector<8xf32> to vector<8x1xf32>
    %118 = math.log %117 : vector<8x1xf32>
    %119 = arith.addf %118, %112 : vector<8x1xf32>
    %120 = vector.broadcast %119 : vector<8x1xf32> to vector<8x16xf32>
    %121 = arith.subf %109, %120 : vector<8x16xf32>
    %122 = tpu.iota {dimensions = array<i32: 1>} : vector<8x16xi32>
    %123 = vector.broadcast %112 : vector<8x1xf32> to vector<8x16xf32>
    %124 = arith.cmpf oeq, %109, %123 : vector<8x16xf32>
    %c16_i32 = arith.constant 16 : i32
    %125 = vector.broadcast %c16_i32 : i32 to vector<8x16xi32>
    %126 = arith.select %124, %122, %125 : vector<8x16xi1>, vector<8x16xi32>
    %cst_46 = arith.constant dense<2147483647> : vector<8xi32>
    %127 = vector.multi_reduction <minsi>, %126, %cst_46 [1] : vector<8x16xi32> to vector<8xi32>
    %128 = vector.shape_cast %127 : vector<8xi32> to vector<8x1xi32>
    %129 = vector.broadcast %128 : vector<8x1xi32> to vector<8x16xi32>
    %130 = arith.cmpi eq, %122, %129 : vector<8x16xi32>
    %131 = arith.extui %130 : vector<8x16xi1> to vector<8x16xi32>
    %132 = arith.sitofp %131 : vector<8x16xi32> to vector<8x16xf32>
    %cst_47 = arith.constant dense<0.000000e+00> : vector<8x32xf32>
    %133 = tpu.matmul %132, %6, %cst_47 {dimension_numbers = #tpu.dot_dimension_numbers<[1], [0], [0], [1], [0, 0, 1, 1], [], []>} : vector<8x16xf32>, vector<16x32xf32>, vector<8x32xf32> -> vector<8x32xf32>
    %134 = arith.addf %133, %110 : vector<8x32xf32>
    %cst_48 = arith.constant 0.000000e+00 : f32
    %135 = vector.broadcast %cst_48 : f32 to vector<8x32xf32>
    %136 = arith.maximumf %134, %135 : vector<8x32xf32>
    %cst_49 = arith.constant dense<0.000000e+00> : vector<8x1xf32>
    %137 = tpu.matmul %136, %7, %cst_49 {dimension_numbers = #tpu.dot_dimension_numbers<[1], [0], [0], [1], [0, 0, 1, 1], [], []>} : vector<8x32xf32>, vector<32x1xf32>, vector<8x1xf32> -> vector<8x1xf32>
    %138 = vector.broadcast %8 : vector<1x1xf32> to vector<8x1xf32>
    %139 = arith.addf %137, %138 : vector<8x1xf32>
    %140 = arith.negf %139 : vector<8x1xf32>
    %141 = math.exp %140 : vector<8x1xf32>
    %cst_50 = arith.constant 1.000000e+00 : f32
    %142 = vector.broadcast %cst_50 : f32 to vector<8x1xf32>
    %143 = arith.addf %142, %141 : vector<8x1xf32>
    %144 = arith.divf %142, %143 : vector<8x1xf32>
    %145 = tpu.concatenate %121, %144 in 1 : vector<8x16xf32>, vector<8x1xf32> -> vector<8x17xf32>
    %146 = vector.broadcast %42 : i32 to vector<8x1xi32>
    %147 = arith.cmpi slt, %40, %146 : vector<8x1xi32>
    %cst_51 = arith.constant 0.000000e+00 : f32
    %148 = vector.shape_cast %147 : vector<8x1xi1> to vector<8x1xi1>
    %149 = vector.broadcast %148 : vector<8x1xi1> to vector<8x17xi1>
    %150 = vector.broadcast %cst_51 : f32 to vector<8x17xf32>
    %151 = arith.select %149, %145, %150 : vector<8x17xi1>, vector<8x17xf32>
    %152 = arith.index_cast %43 : i32 to index
    %c0_52 = arith.constant 0 : index
    %c0_53 = arith.constant 0 : index
    %153 = vector.load %arg12[%152, %c0_52, %c0_53] : memref<8x8x17xf32, #tpu.memory_space<vmem>>, vector<1x8x17xf32>
    %154 = vector.shape_cast %153 : vector<1x8x17xf32> to vector<8x17xf32>
    %155 = vector.shape_cast %151 : vector<8x17xf32> to vector<1x8x17xf32>
    tpu.vector_store %arg12[%152, %c0_52, %c0_53], %155 {strides = array<i32>} : memref<8x8x17xf32, #tpu.memory_space<vmem>>, vector<1x8x17xf32>,
    %c1 = arith.constant 1 : index
    %156 = memref.load %arg1[%c1] : memref<9xi32, #tpu.memory_space<smem>>
    %c4 = arith.constant 4 : index
    %157 = memref.load %arg1[%c4] : memref<9xi32, #tpu.memory_space<smem>>
    %c7 = arith.constant 7 : index
    %158 = memref.load %arg1[%c7] : memref<9xi32, #tpu.memory_space<smem>>
    %c1_i32_54 = arith.constant 1 : i32
    %159 = arith.subi %156, %c1_i32_54 : i32
    %c0_i32_55 = arith.constant 0 : i32
    %160 = arith.subi %159, %c0_i32_55 : i32
    %161 = arith.addi %c0_i32_55, %160 : i32
    %c1_i32_56 = arith.constant 1 : i32
    %162 = scf.for %arg13 = %c0_i32_55 to %161 step %c1_i32_56 iter_args(%arg14 = %105) -> (vector<8x32xf32>)  : i32 {
      %cst_110 = arith.constant dense<0.000000e+00> : vector<8x64xf32>
      %386 = tpu.matmul %arg14, %2, %cst_110 {dimension_numbers = #tpu.dot_dimension_numbers<[1], [0], [0], [1], [0, 0, 1, 1], [], []>} : vector<8x32xf32>, vector<32x64xf32>, vector<8x64xf32> -> vector<8x64xf32>
      %387 = vector.extract_strided_slice %386 {offsets = [0, 0], sizes = [8, 32], strides = [1, 1]} : vector<8x64xf32> to vector<8x32xf32>
      %388 = arith.negf %387 : vector<8x32xf32>
      %389 = math.exp %388 : vector<8x32xf32>
      %cst_111 = arith.constant 1.000000e+00 : f32
      %390 = vector.broadcast %cst_111 : f32 to vector<8x32xf32>
      %391 = arith.addf %390, %389 : vector<8x32xf32>
      %392 = arith.divf %390, %391 : vector<8x32xf32>
      %393 = vector.extract_strided_slice %386 {offsets = [0, 32], sizes = [8, 32], strides = [1, 1]} : vector<8x64xf32> to vector<8x32xf32>
      %394 = arith.negf %393 : vector<8x32xf32>
      %395 = math.exp %394 : vector<8x32xf32>
      %cst_112 = arith.constant 1.000000e+00 : f32
      %396 = vector.broadcast %cst_112 : f32 to vector<8x32xf32>
      %397 = arith.addf %396, %395 : vector<8x32xf32>
      %398 = arith.divf %396, %397 : vector<8x32xf32>
      %399 = arith.mulf %398, %arg14 : vector<8x32xf32>
      %cst_113 = arith.constant dense<0.000000e+00> : vector<8x32xf32>
      %400 = tpu.matmul %399, %3, %cst_113 {dimension_numbers = #tpu.dot_dimension_numbers<[1], [0], [0], [1], [0, 0, 1, 1], [], []>} : vector<8x32xf32>, vector<32x32xf32>, vector<8x32xf32> -> vector<8x32xf32>
      %401 = math.tanh %400 : vector<8x32xf32>
      %cst_114 = arith.constant 1.000000e+00 : f32
      %402 = vector.broadcast %cst_114 : f32 to vector<8x32xf32>
      %403 = arith.subf %402, %392 : vector<8x32xf32>
      %cst_115 = arith.constant 5.000000e-01 : f32
      %404 = vector.broadcast %cst_115 : f32 to vector<8x32xf32>
      %405 = arith.mulf %404, %403 : vector<8x32xf32>
      %406 = arith.subf %401, %arg14 : vector<8x32xf32>
      %407 = arith.mulf %405, %406 : vector<8x32xf32>
      %408 = arith.addf %arg14, %407 : vector<8x32xf32>
      %cst_116 = arith.constant dense<0.000000e+00> : vector<8x64xf32>
      %409 = tpu.matmul %408, %2, %cst_116 {dimension_numbers = #tpu.dot_dimension_numbers<[1], [0], [0], [1], [0, 0, 1, 1], [], []>} : vector<8x32xf32>, vector<32x64xf32>, vector<8x64xf32> -> vector<8x64xf32>
      %410 = vector.extract_strided_slice %409 {offsets = [0, 0], sizes = [8, 32], strides = [1, 1]} : vector<8x64xf32> to vector<8x32xf32>
      %411 = arith.negf %410 : vector<8x32xf32>
      %412 = math.exp %411 : vector<8x32xf32>
      %cst_117 = arith.constant 1.000000e+00 : f32
      %413 = vector.broadcast %cst_117 : f32 to vector<8x32xf32>
      %414 = arith.addf %413, %412 : vector<8x32xf32>
      %415 = arith.divf %413, %414 : vector<8x32xf32>
      %416 = vector.extract_strided_slice %409 {offsets = [0, 32], sizes = [8, 32], strides = [1, 1]} : vector<8x64xf32> to vector<8x32xf32>
      %417 = arith.negf %416 : vector<8x32xf32>
      %418 = math.exp %417 : vector<8x32xf32>
      %cst_118 = arith.constant 1.000000e+00 : f32
      %419 = vector.broadcast %cst_118 : f32 to vector<8x32xf32>
      %420 = arith.addf %419, %418 : vector<8x32xf32>
      %421 = arith.divf %419, %420 : vector<8x32xf32>
      %422 = arith.mulf %421, %408 : vector<8x32xf32>
      %cst_119 = arith.constant dense<0.000000e+00> : vector<8x32xf32>
      %423 = tpu.matmul %422, %3, %cst_119 {dimension_numbers = #tpu.dot_dimension_numbers<[1], [0], [0], [1], [0, 0, 1, 1], [], []>} : vector<8x32xf32>, vector<32x32xf32>, vector<8x32xf32> -> vector<8x32xf32>
      %424 = math.tanh %423 : vector<8x32xf32>
      %cst_120 = arith.constant 1.000000e+00 : f32
      %425 = vector.broadcast %cst_120 : f32 to vector<8x32xf32>
      %426 = arith.subf %425, %415 : vector<8x32xf32>
      %cst_121 = arith.constant 5.000000e-01 : f32
      %427 = vector.broadcast %cst_121 : f32 to vector<8x32xf32>
      %428 = arith.mulf %427, %426 : vector<8x32xf32>
      %429 = arith.subf %424, %408 : vector<8x32xf32>
      %430 = arith.mulf %428, %429 : vector<8x32xf32>
      %431 = arith.addf %408, %430 : vector<8x32xf32>
      scf.yield %431 : vector<8x32xf32>
    }
    %cst_57 = arith.constant dense<0.000000e+00> : vector<8x64xf32>
    %163 = tpu.matmul %162, %2, %cst_57 {dimension_numbers = #tpu.dot_dimension_numbers<[1], [0], [0], [1], [0, 0, 1, 1], [], []>} : vector<8x32xf32>, vector<32x64xf32>, vector<8x64xf32> -> vector<8x64xf32>
    %164 = vector.extract_strided_slice %163 {offsets = [0, 0], sizes = [8, 32], strides = [1, 1]} : vector<8x64xf32> to vector<8x32xf32>
    %165 = arith.negf %164 : vector<8x32xf32>
    %166 = math.exp %165 : vector<8x32xf32>
    %cst_58 = arith.constant 1.000000e+00 : f32
    %167 = vector.broadcast %cst_58 : f32 to vector<8x32xf32>
    %168 = arith.addf %167, %166 : vector<8x32xf32>
    %169 = arith.divf %167, %168 : vector<8x32xf32>
    %170 = vector.extract_strided_slice %163 {offsets = [0, 32], sizes = [8, 32], strides = [1, 1]} : vector<8x64xf32> to vector<8x32xf32>
    %171 = arith.negf %170 : vector<8x32xf32>
    %172 = math.exp %171 : vector<8x32xf32>
    %cst_59 = arith.constant 1.000000e+00 : f32
    %173 = vector.broadcast %cst_59 : f32 to vector<8x32xf32>
    %174 = arith.addf %173, %172 : vector<8x32xf32>
    %175 = arith.divf %173, %174 : vector<8x32xf32>
    %176 = arith.mulf %175, %162 : vector<8x32xf32>
    %cst_60 = arith.constant dense<0.000000e+00> : vector<8x32xf32>
    %177 = tpu.matmul %176, %3, %cst_60 {dimension_numbers = #tpu.dot_dimension_numbers<[1], [0], [0], [1], [0, 0, 1, 1], [], []>} : vector<8x32xf32>, vector<32x32xf32>, vector<8x32xf32> -> vector<8x32xf32>
    %178 = math.tanh %177 : vector<8x32xf32>
    %cst_61 = arith.constant 1.000000e+00 : f32
    %179 = vector.broadcast %cst_61 : f32 to vector<8x32xf32>
    %180 = arith.subf %179, %169 : vector<8x32xf32>
    %cst_62 = arith.constant 5.000000e-01 : f32
    %181 = vector.broadcast %cst_62 : f32 to vector<8x32xf32>
    %182 = arith.mulf %181, %180 : vector<8x32xf32>
    %183 = arith.subf %178, %162 : vector<8x32xf32>
    %184 = arith.mulf %182, %183 : vector<8x32xf32>
    %185 = arith.addf %162, %184 : vector<8x32xf32>
    %186 = arith.index_cast %158 : i32 to index
    %c0_63 = arith.constant 0 : index
    %c0_64 = arith.constant 0 : index
    %187 = vector.load %arg2[%186, %c0_63, %c0_64] : memref<8x8x8xf32, #tpu.memory_space<vmem>>, vector<1x8x8xf32>
    %188 = vector.shape_cast %187 : vector<1x8x8xf32> to vector<8x8xf32>
    %189 = tpu.concatenate %188, %185 in 1 : vector<8x8xf32>, vector<8x32xf32> -> vector<8x40xf32>
    %cst_65 = arith.constant dense<0.000000e+00> : vector<8x128xf32>
    %190 = tpu.matmul %189, %0, %cst_65 {dimension_numbers = #tpu.dot_dimension_numbers<[1], [0], [0], [1], [0, 0, 1, 1], [], []>} : vector<8x40xf32>, vector<40x128xf32>, vector<8x128xf32> -> vector<8x128xf32>
    %191 = vector.broadcast %1 : vector<1x128xf32> to vector<8x128xf32>
    %192 = arith.addf %190, %191 : vector<8x128xf32>
    %193 = vector.extract_strided_slice %192 {offsets = [0, 0], sizes = [8, 32], strides = [1, 1]} : vector<8x128xf32> to vector<8x32xf32>
    %194 = arith.negf %193 : vector<8x32xf32>
    %195 = math.exp %194 : vector<8x32xf32>
    %cst_66 = arith.constant 1.000000e+00 : f32
    %196 = vector.broadcast %cst_66 : f32 to vector<8x32xf32>
    %197 = arith.addf %196, %195 : vector<8x32xf32>
    %198 = arith.divf %196, %197 : vector<8x32xf32>
    %199 = vector.extract_strided_slice %192 {offsets = [0, 32], sizes = [8, 32], strides = [1, 1]} : vector<8x128xf32> to vector<8x32xf32>
    %200 = arith.negf %199 : vector<8x32xf32>
    %201 = math.exp %200 : vector<8x32xf32>
    %cst_67 = arith.constant 1.000000e+00 : f32
    %202 = vector.broadcast %cst_67 : f32 to vector<8x32xf32>
    %203 = arith.addf %202, %201 : vector<8x32xf32>
    %204 = arith.divf %202, %203 : vector<8x32xf32>
    %205 = vector.extract_strided_slice %192 {offsets = [0, 64], sizes = [8, 32], strides = [1, 1]} : vector<8x128xf32> to vector<8x32xf32>
    %206 = vector.extract_strided_slice %192 {offsets = [0, 96], sizes = [8, 32], strides = [1, 1]} : vector<8x128xf32> to vector<8x32xf32>
    %207 = arith.mulf %198, %206 : vector<8x32xf32>
    %208 = arith.addf %205, %207 : vector<8x32xf32>
    %209 = math.tanh %208 : vector<8x32xf32>
    %cst_68 = arith.constant 1.000000e+00 : f32
    %210 = vector.broadcast %cst_68 : f32 to vector<8x32xf32>
    %211 = arith.subf %210, %204 : vector<8x32xf32>
    %212 = arith.mulf %211, %209 : vector<8x32xf32>
    %213 = arith.mulf %204, %185 : vector<8x32xf32>
    %214 = arith.addf %212, %213 : vector<8x32xf32>
    %215 = vector.extract_strided_slice %188 {offsets = [0, 7], sizes = [8, 1], strides = [1, 1]} : vector<8x8xf32> to vector<8x1xf32>
    %cst_69 = arith.constant -1.000000e+00 : f32
    %216 = vector.broadcast %cst_69 : f32 to vector<8x1xf32>
    %217 = arith.cmpf one, %215, %216 : vector<8x1xf32>
    %218 = vector.shape_cast %217 : vector<8x1xi1> to vector<8x1xi1>
    %219 = vector.broadcast %218 : vector<8x1xi1> to vector<8x32xi1>
    %220 = arith.select %219, %214, %185 : vector<8x32xi1>, vector<8x32xf32>
    %cst_70 = arith.constant dense<0.000000e+00> : vector<8x48xf32>
    %221 = tpu.matmul %162, %4, %cst_70 {dimension_numbers = #tpu.dot_dimension_numbers<[1], [0], [0], [1], [0, 0, 1, 1], [], []>} : vector<8x32xf32>, vector<32x48xf32>, vector<8x48xf32> -> vector<8x48xf32>
    %222 = vector.broadcast %5 : vector<1x48xf32> to vector<8x48xf32>
    %223 = arith.addf %221, %222 : vector<8x48xf32>
    %224 = vector.extract_strided_slice %223 {offsets = [0, 0], sizes = [8, 16], strides = [1, 1]} : vector<8x48xf32> to vector<8x16xf32>
    %225 = vector.extract_strided_slice %223 {offsets = [0, 16], sizes = [8, 32], strides = [1, 1]} : vector<8x48xf32> to vector<8x32xf32>
    %cst_71 = arith.constant dense<0xFF800000> : vector<8xf32>
    %226 = vector.multi_reduction <maximumf>, %224, %cst_71 [1] : vector<8x16xf32> to vector<8xf32>
    %227 = vector.shape_cast %226 : vector<8xf32> to vector<8x1xf32>
    %228 = vector.broadcast %227 : vector<8x1xf32> to vector<8x16xf32>
    %229 = arith.subf %224, %228 : vector<8x16xf32>
    %230 = math.exp %229 : vector<8x16xf32>
    %cst_72 = arith.constant dense<0.000000e+00> : vector<8xf32>
    %231 = vector.multi_reduction <add>, %230, %cst_72 [1] : vector<8x16xf32> to vector<8xf32>
    %232 = vector.shape_cast %231 : vector<8xf32> to vector<8x1xf32>
    %233 = math.log %232 : vector<8x1xf32>
    %234 = arith.addf %233, %227 : vector<8x1xf32>
    %235 = vector.broadcast %234 : vector<8x1xf32> to vector<8x16xf32>
    %236 = arith.subf %224, %235 : vector<8x16xf32>
    %237 = tpu.iota {dimensions = array<i32: 1>} : vector<8x16xi32>
    %238 = vector.broadcast %227 : vector<8x1xf32> to vector<8x16xf32>
    %239 = arith.cmpf oeq, %224, %238 : vector<8x16xf32>
    %c16_i32_73 = arith.constant 16 : i32
    %240 = vector.broadcast %c16_i32_73 : i32 to vector<8x16xi32>
    %241 = arith.select %239, %237, %240 : vector<8x16xi1>, vector<8x16xi32>
    %cst_74 = arith.constant dense<2147483647> : vector<8xi32>
    %242 = vector.multi_reduction <minsi>, %241, %cst_74 [1] : vector<8x16xi32> to vector<8xi32>
    %243 = vector.shape_cast %242 : vector<8xi32> to vector<8x1xi32>
    %244 = vector.broadcast %243 : vector<8x1xi32> to vector<8x16xi32>
    %245 = arith.cmpi eq, %237, %244 : vector<8x16xi32>
    %246 = arith.extui %245 : vector<8x16xi1> to vector<8x16xi32>
    %247 = arith.sitofp %246 : vector<8x16xi32> to vector<8x16xf32>
    %cst_75 = arith.constant dense<0.000000e+00> : vector<8x32xf32>
    %248 = tpu.matmul %247, %6, %cst_75 {dimension_numbers = #tpu.dot_dimension_numbers<[1], [0], [0], [1], [0, 0, 1, 1], [], []>} : vector<8x16xf32>, vector<16x32xf32>, vector<8x32xf32> -> vector<8x32xf32>
    %249 = arith.addf %248, %225 : vector<8x32xf32>
    %cst_76 = arith.constant 0.000000e+00 : f32
    %250 = vector.broadcast %cst_76 : f32 to vector<8x32xf32>
    %251 = arith.maximumf %249, %250 : vector<8x32xf32>
    %cst_77 = arith.constant dense<0.000000e+00> : vector<8x1xf32>
    %252 = tpu.matmul %251, %7, %cst_77 {dimension_numbers = #tpu.dot_dimension_numbers<[1], [0], [0], [1], [0, 0, 1, 1], [], []>} : vector<8x32xf32>, vector<32x1xf32>, vector<8x1xf32> -> vector<8x1xf32>
    %253 = vector.broadcast %8 : vector<1x1xf32> to vector<8x1xf32>
    %254 = arith.addf %252, %253 : vector<8x1xf32>
    %255 = arith.negf %254 : vector<8x1xf32>
    %256 = math.exp %255 : vector<8x1xf32>
    %cst_78 = arith.constant 1.000000e+00 : f32
    %257 = vector.broadcast %cst_78 : f32 to vector<8x1xf32>
    %258 = arith.addf %257, %256 : vector<8x1xf32>
    %259 = arith.divf %257, %258 : vector<8x1xf32>
    %260 = tpu.concatenate %236, %259 in 1 : vector<8x16xf32>, vector<8x1xf32> -> vector<8x17xf32>
    %261 = vector.broadcast %157 : i32 to vector<8x1xi32>
    %262 = arith.cmpi slt, %40, %261 : vector<8x1xi32>
    %cst_79 = arith.constant 0.000000e+00 : f32
    %263 = vector.shape_cast %262 : vector<8x1xi1> to vector<8x1xi1>
    %264 = vector.broadcast %263 : vector<8x1xi1> to vector<8x17xi1>
    %265 = vector.broadcast %cst_79 : f32 to vector<8x17xf32>
    %266 = arith.select %264, %260, %265 : vector<8x17xi1>, vector<8x17xf32>
    %267 = arith.index_cast %158 : i32 to index
    %c0_80 = arith.constant 0 : index
    %c0_81 = arith.constant 0 : index
    %268 = vector.load %arg12[%267, %c0_80, %c0_81] : memref<8x8x17xf32, #tpu.memory_space<vmem>>, vector<1x8x17xf32>
    %269 = vector.shape_cast %268 : vector<1x8x17xf32> to vector<8x17xf32>
    %270 = vector.shape_cast %266 : vector<8x17xf32> to vector<1x8x17xf32>
    tpu.vector_store %arg12[%267, %c0_80, %c0_81], %270 {strides = array<i32>} : memref<8x8x17xf32, #tpu.memory_space<vmem>>, vector<1x8x17xf32>,
    %c2 = arith.constant 2 : index
    %271 = memref.load %arg1[%c2] : memref<9xi32, #tpu.memory_space<smem>>
    %c5 = arith.constant 5 : index
    %272 = memref.load %arg1[%c5] : memref<9xi32, #tpu.memory_space<smem>>
    %c8 = arith.constant 8 : index
    %273 = memref.load %arg1[%c8] : memref<9xi32, #tpu.memory_space<smem>>
    %c1_i32_82 = arith.constant 1 : i32
    %274 = arith.subi %271, %c1_i32_82 : i32
    %c0_i32_83 = arith.constant 0 : i32
    %275 = arith.subi %274, %c0_i32_83 : i32
    %276 = arith.addi %c0_i32_83, %275 : i32
    %c1_i32_84 = arith.constant 1 : i32
    %277 = scf.for %arg13 = %c0_i32_83 to %276 step %c1_i32_84 iter_args(%arg14 = %220) -> (vector<8x32xf32>)  : i32 {
      %cst_110 = arith.constant dense<0.000000e+00> : vector<8x64xf32>
      %386 = tpu.matmul %arg14, %2, %cst_110 {dimension_numbers = #tpu.dot_dimension_numbers<[1], [0], [0], [1], [0, 0, 1, 1], [], []>} : vector<8x32xf32>, vector<32x64xf32>, vector<8x64xf32> -> vector<8x64xf32>
      %387 = vector.extract_strided_slice %386 {offsets = [0, 0], sizes = [8, 32], strides = [1, 1]} : vector<8x64xf32> to vector<8x32xf32>
      %388 = arith.negf %387 : vector<8x32xf32>
      %389 = math.exp %388 : vector<8x32xf32>
      %cst_111 = arith.constant 1.000000e+00 : f32
      %390 = vector.broadcast %cst_111 : f32 to vector<8x32xf32>
      %391 = arith.addf %390, %389 : vector<8x32xf32>
      %392 = arith.divf %390, %391 : vector<8x32xf32>
      %393 = vector.extract_strided_slice %386 {offsets = [0, 32], sizes = [8, 32], strides = [1, 1]} : vector<8x64xf32> to vector<8x32xf32>
      %394 = arith.negf %393 : vector<8x32xf32>
      %395 = math.exp %394 : vector<8x32xf32>
      %cst_112 = arith.constant 1.000000e+00 : f32
      %396 = vector.broadcast %cst_112 : f32 to vector<8x32xf32>
      %397 = arith.addf %396, %395 : vector<8x32xf32>
      %398 = arith.divf %396, %397 : vector<8x32xf32>
      %399 = arith.mulf %398, %arg14 : vector<8x32xf32>
      %cst_113 = arith.constant dense<0.000000e+00> : vector<8x32xf32>
      %400 = tpu.matmul %399, %3, %cst_113 {dimension_numbers = #tpu.dot_dimension_numbers<[1], [0], [0], [1], [0, 0, 1, 1], [], []>} : vector<8x32xf32>, vector<32x32xf32>, vector<8x32xf32> -> vector<8x32xf32>
      %401 = math.tanh %400 : vector<8x32xf32>
      %cst_114 = arith.constant 1.000000e+00 : f32
      %402 = vector.broadcast %cst_114 : f32 to vector<8x32xf32>
      %403 = arith.subf %402, %392 : vector<8x32xf32>
      %cst_115 = arith.constant 5.000000e-01 : f32
      %404 = vector.broadcast %cst_115 : f32 to vector<8x32xf32>
      %405 = arith.mulf %404, %403 : vector<8x32xf32>
      %406 = arith.subf %401, %arg14 : vector<8x32xf32>
      %407 = arith.mulf %405, %406 : vector<8x32xf32>
      %408 = arith.addf %arg14, %407 : vector<8x32xf32>
      %cst_116 = arith.constant dense<0.000000e+00> : vector<8x64xf32>
      %409 = tpu.matmul %408, %2, %cst_116 {dimension_numbers = #tpu.dot_dimension_numbers<[1], [0], [0], [1], [0, 0, 1, 1], [], []>} : vector<8x32xf32>, vector<32x64xf32>, vector<8x64xf32> -> vector<8x64xf32>
      %410 = vector.extract_strided_slice %409 {offsets = [0, 0], sizes = [8, 32], strides = [1, 1]} : vector<8x64xf32> to vector<8x32xf32>
      %411 = arith.negf %410 : vector<8x32xf32>
      %412 = math.exp %411 : vector<8x32xf32>
      %cst_117 = arith.constant 1.000000e+00 : f32
      %413 = vector.broadcast %cst_117 : f32 to vector<8x32xf32>
      %414 = arith.addf %413, %412 : vector<8x32xf32>
      %415 = arith.divf %413, %414 : vector<8x32xf32>
      %416 = vector.extract_strided_slice %409 {offsets = [0, 32], sizes = [8, 32], strides = [1, 1]} : vector<8x64xf32> to vector<8x32xf32>
      %417 = arith.negf %416 : vector<8x32xf32>
      %418 = math.exp %417 : vector<8x32xf32>
      %cst_118 = arith.constant 1.000000e+00 : f32
      %419 = vector.broadcast %cst_118 : f32 to vector<8x32xf32>
      %420 = arith.addf %419, %418 : vector<8x32xf32>
      %421 = arith.divf %419, %420 : vector<8x32xf32>
      %422 = arith.mulf %421, %408 : vector<8x32xf32>
      %cst_119 = arith.constant dense<0.000000e+00> : vector<8x32xf32>
      %423 = tpu.matmul %422, %3, %cst_119 {dimension_numbers = #tpu.dot_dimension_numbers<[1], [0], [0], [1], [0, 0, 1, 1], [], []>} : vector<8x32xf32>, vector<32x32xf32>, vector<8x32xf32> -> vector<8x32xf32>
      %424 = math.tanh %423 : vector<8x32xf32>
      %cst_120 = arith.constant 1.000000e+00 : f32
      %425 = vector.broadcast %cst_120 : f32 to vector<8x32xf32>
      %426 = arith.subf %425, %415 : vector<8x32xf32>
      %cst_121 = arith.constant 5.000000e-01 : f32
      %427 = vector.broadcast %cst_121 : f32 to vector<8x32xf32>
      %428 = arith.mulf %427, %426 : vector<8x32xf32>
      %429 = arith.subf %424, %408 : vector<8x32xf32>
      %430 = arith.mulf %428, %429 : vector<8x32xf32>
      %431 = arith.addf %408, %430 : vector<8x32xf32>
      scf.yield %431 : vector<8x32xf32>
    }
    %cst_85 = arith.constant dense<0.000000e+00> : vector<8x64xf32>
    %278 = tpu.matmul %277, %2, %cst_85 {dimension_numbers = #tpu.dot_dimension_numbers<[1], [0], [0], [1], [0, 0, 1, 1], [], []>} : vector<8x32xf32>, vector<32x64xf32>, vector<8x64xf32> -> vector<8x64xf32>
    %279 = vector.extract_strided_slice %278 {offsets = [0, 0], sizes = [8, 32], strides = [1, 1]} : vector<8x64xf32> to vector<8x32xf32>
    %280 = arith.negf %279 : vector<8x32xf32>
    %281 = math.exp %280 : vector<8x32xf32>
    %cst_86 = arith.constant 1.000000e+00 : f32
    %282 = vector.broadcast %cst_86 : f32 to vector<8x32xf32>
    %283 = arith.addf %282, %281 : vector<8x32xf32>
    %284 = arith.divf %282, %283 : vector<8x32xf32>
    %285 = vector.extract_strided_slice %278 {offsets = [0, 32], sizes = [8, 32], strides = [1, 1]} : vector<8x64xf32> to vector<8x32xf32>
    %286 = arith.negf %285 : vector<8x32xf32>
    %287 = math.exp %286 : vector<8x32xf32>
    %cst_87 = arith.constant 1.000000e+00 : f32
    %288 = vector.broadcast %cst_87 : f32 to vector<8x32xf32>
    %289 = arith.addf %288, %287 : vector<8x32xf32>
    %290 = arith.divf %288, %289 : vector<8x32xf32>
    %291 = arith.mulf %290, %277 : vector<8x32xf32>
    %cst_88 = arith.constant dense<0.000000e+00> : vector<8x32xf32>
    %292 = tpu.matmul %291, %3, %cst_88 {dimension_numbers = #tpu.dot_dimension_numbers<[1], [0], [0], [1], [0, 0, 1, 1], [], []>} : vector<8x32xf32>, vector<32x32xf32>, vector<8x32xf32> -> vector<8x32xf32>
    %293 = math.tanh %292 : vector<8x32xf32>
    %cst_89 = arith.constant 1.000000e+00 : f32
    %294 = vector.broadcast %cst_89 : f32 to vector<8x32xf32>
    %295 = arith.subf %294, %284 : vector<8x32xf32>
    %cst_90 = arith.constant 5.000000e-01 : f32
    %296 = vector.broadcast %cst_90 : f32 to vector<8x32xf32>
    %297 = arith.mulf %296, %295 : vector<8x32xf32>
    %298 = arith.subf %293, %277 : vector<8x32xf32>
    %299 = arith.mulf %297, %298 : vector<8x32xf32>
    %300 = arith.addf %277, %299 : vector<8x32xf32>
    %301 = arith.index_cast %273 : i32 to index
    %c0_91 = arith.constant 0 : index
    %c0_92 = arith.constant 0 : index
    %302 = vector.load %arg2[%301, %c0_91, %c0_92] : memref<8x8x8xf32, #tpu.memory_space<vmem>>, vector<1x8x8xf32>
    %303 = vector.shape_cast %302 : vector<1x8x8xf32> to vector<8x8xf32>
    %304 = tpu.concatenate %303, %300 in 1 : vector<8x8xf32>, vector<8x32xf32> -> vector<8x40xf32>
    %cst_93 = arith.constant dense<0.000000e+00> : vector<8x128xf32>
    %305 = tpu.matmul %304, %0, %cst_93 {dimension_numbers = #tpu.dot_dimension_numbers<[1], [0], [0], [1], [0, 0, 1, 1], [], []>} : vector<8x40xf32>, vector<40x128xf32>, vector<8x128xf32> -> vector<8x128xf32>
    %306 = vector.broadcast %1 : vector<1x128xf32> to vector<8x128xf32>
    %307 = arith.addf %305, %306 : vector<8x128xf32>
    %308 = vector.extract_strided_slice %307 {offsets = [0, 0], sizes = [8, 32], strides = [1, 1]} : vector<8x128xf32> to vector<8x32xf32>
    %309 = arith.negf %308 : vector<8x32xf32>
    %310 = math.exp %309 : vector<8x32xf32>
    %cst_94 = arith.constant 1.000000e+00 : f32
    %311 = vector.broadcast %cst_94 : f32 to vector<8x32xf32>
    %312 = arith.addf %311, %310 : vector<8x32xf32>
    %313 = arith.divf %311, %312 : vector<8x32xf32>
    %314 = vector.extract_strided_slice %307 {offsets = [0, 32], sizes = [8, 32], strides = [1, 1]} : vector<8x128xf32> to vector<8x32xf32>
    %315 = arith.negf %314 : vector<8x32xf32>
    %316 = math.exp %315 : vector<8x32xf32>
    %cst_95 = arith.constant 1.000000e+00 : f32
    %317 = vector.broadcast %cst_95 : f32 to vector<8x32xf32>
    %318 = arith.addf %317, %316 : vector<8x32xf32>
    %319 = arith.divf %317, %318 : vector<8x32xf32>
    %320 = vector.extract_strided_slice %307 {offsets = [0, 64], sizes = [8, 32], strides = [1, 1]} : vector<8x128xf32> to vector<8x32xf32>
    %321 = vector.extract_strided_slice %307 {offsets = [0, 96], sizes = [8, 32], strides = [1, 1]} : vector<8x128xf32> to vector<8x32xf32>
    %322 = arith.mulf %313, %321 : vector<8x32xf32>
    %323 = arith.addf %320, %322 : vector<8x32xf32>
    %324 = math.tanh %323 : vector<8x32xf32>
    %cst_96 = arith.constant 1.000000e+00 : f32
    %325 = vector.broadcast %cst_96 : f32 to vector<8x32xf32>
    %326 = arith.subf %325, %319 : vector<8x32xf32>
    %327 = arith.mulf %326, %324 : vector<8x32xf32>
    %328 = arith.mulf %319, %300 : vector<8x32xf32>
    %329 = arith.addf %327, %328 : vector<8x32xf32>
    %330 = vector.extract_strided_slice %303 {offsets = [0, 7], sizes = [8, 1], strides = [1, 1]} : vector<8x8xf32> to vector<8x1xf32>
    %cst_97 = arith.constant -1.000000e+00 : f32
    %331 = vector.broadcast %cst_97 : f32 to vector<8x1xf32>
    %332 = arith.cmpf one, %330, %331 : vector<8x1xf32>
    %333 = vector.shape_cast %332 : vector<8x1xi1> to vector<8x1xi1>
    %334 = vector.broadcast %333 : vector<8x1xi1> to vector<8x32xi1>
    %335 = arith.select %334, %329, %300 : vector<8x32xi1>, vector<8x32xf32>
    %cst_98 = arith.constant dense<0.000000e+00> : vector<8x48xf32>
    %336 = tpu.matmul %335, %4, %cst_98 {dimension_numbers = #tpu.dot_dimension_numbers<[1], [0], [0], [1], [0, 0, 1, 1], [], []>} : vector<8x32xf32>, vector<32x48xf32>, vector<8x48xf32> -> vector<8x48xf32>
    %337 = vector.broadcast %5 : vector<1x48xf32> to vector<8x48xf32>
    %338 = arith.addf %336, %337 : vector<8x48xf32>
    %339 = vector.extract_strided_slice %338 {offsets = [0, 0], sizes = [8, 16], strides = [1, 1]} : vector<8x48xf32> to vector<8x16xf32>
    %340 = vector.extract_strided_slice %338 {offsets = [0, 16], sizes = [8, 32], strides = [1, 1]} : vector<8x48xf32> to vector<8x32xf32>
    %cst_99 = arith.constant dense<0xFF800000> : vector<8xf32>
    %341 = vector.multi_reduction <maximumf>, %339, %cst_99 [1] : vector<8x16xf32> to vector<8xf32>
    %342 = vector.shape_cast %341 : vector<8xf32> to vector<8x1xf32>
    %343 = vector.broadcast %342 : vector<8x1xf32> to vector<8x16xf32>
    %344 = arith.subf %339, %343 : vector<8x16xf32>
    %345 = math.exp %344 : vector<8x16xf32>
    %cst_100 = arith.constant dense<0.000000e+00> : vector<8xf32>
    %346 = vector.multi_reduction <add>, %345, %cst_100 [1] : vector<8x16xf32> to vector<8xf32>
    %347 = vector.shape_cast %346 : vector<8xf32> to vector<8x1xf32>
    %348 = math.log %347 : vector<8x1xf32>
    %349 = arith.addf %348, %342 : vector<8x1xf32>
    %350 = vector.broadcast %349 : vector<8x1xf32> to vector<8x16xf32>
    %351 = arith.subf %339, %350 : vector<8x16xf32>
    %352 = tpu.iota {dimensions = array<i32: 1>} : vector<8x16xi32>
    %353 = vector.broadcast %342 : vector<8x1xf32> to vector<8x16xf32>
    %354 = arith.cmpf oeq, %339, %353 : vector<8x16xf32>
    %c16_i32_101 = arith.constant 16 : i32
    %355 = vector.broadcast %c16_i32_101 : i32 to vector<8x16xi32>
    %356 = arith.select %354, %352, %355 : vector<8x16xi1>, vector<8x16xi32>
    %cst_102 = arith.constant dense<2147483647> : vector<8xi32>
    %357 = vector.multi_reduction <minsi>, %356, %cst_102 [1] : vector<8x16xi32> to vector<8xi32>
    %358 = vector.shape_cast %357 : vector<8xi32> to vector<8x1xi32>
    %359 = vector.broadcast %358 : vector<8x1xi32> to vector<8x16xi32>
    %360 = arith.cmpi eq, %352, %359 : vector<8x16xi32>
    %361 = arith.extui %360 : vector<8x16xi1> to vector<8x16xi32>
    %362 = arith.sitofp %361 : vector<8x16xi32> to vector<8x16xf32>
    %cst_103 = arith.constant dense<0.000000e+00> : vector<8x32xf32>
    %363 = tpu.matmul %362, %6, %cst_103 {dimension_numbers = #tpu.dot_dimension_numbers<[1], [0], [0], [1], [0, 0, 1, 1], [], []>} : vector<8x16xf32>, vector<16x32xf32>, vector<8x32xf32> -> vector<8x32xf32>
    %364 = arith.addf %363, %340 : vector<8x32xf32>
    %cst_104 = arith.constant 0.000000e+00 : f32
    %365 = vector.broadcast %cst_104 : f32 to vector<8x32xf32>
    %366 = arith.maximumf %364, %365 : vector<8x32xf32>
    %cst_105 = arith.constant dense<0.000000e+00> : vector<8x1xf32>
    %367 = tpu.matmul %366, %7, %cst_105 {dimension_numbers = #tpu.dot_dimension_numbers<[1], [0], [0], [1], [0, 0, 1, 1], [], []>} : vector<8x32xf32>, vector<32x1xf32>, vector<8x1xf32> -> vector<8x1xf32>
    %368 = vector.broadcast %8 : vector<1x1xf32> to vector<8x1xf32>
    %369 = arith.addf %367, %368 : vector<8x1xf32>
    %370 = arith.negf %369 : vector<8x1xf32>
    %371 = math.exp %370 : vector<8x1xf32>
    %cst_106 = arith.constant 1.000000e+00 : f32
    %372 = vector.broadcast %cst_106 : f32 to vector<8x1xf32>
    %373 = arith.addf %372, %371 : vector<8x1xf32>
    %374 = arith.divf %372, %373 : vector<8x1xf32>
    %375 = tpu.concatenate %351, %374 in 1 : vector<8x16xf32>, vector<8x1xf32> -> vector<8x17xf32>
    %376 = vector.broadcast %272 : i32 to vector<8x1xi32>
    %377 = arith.cmpi slt, %40, %376 : vector<8x1xi32>
    %cst_107 = arith.constant 0.000000e+00 : f32
    %378 = vector.shape_cast %377 : vector<8x1xi1> to vector<8x1xi1>
    %379 = vector.broadcast %378 : vector<8x1xi1> to vector<8x17xi1>
    %380 = vector.broadcast %cst_107 : f32 to vector<8x17xf32>
    %381 = arith.select %379, %375, %380 : vector<8x17xi1>, vector<8x17xf32>
    %382 = arith.index_cast %273 : i32 to index
    %c0_108 = arith.constant 0 : index
    %c0_109 = arith.constant 0 : index
    %383 = vector.load %arg12[%382, %c0_108, %c0_109] : memref<8x8x17xf32, #tpu.memory_space<vmem>>, vector<1x8x17xf32>
    %384 = vector.shape_cast %383 : vector<1x8x17xf32> to vector<8x17xf32>
    %385 = vector.shape_cast %381 : vector<8x17xf32> to vector<1x8x17xf32>
    tpu.vector_store %arg12[%382, %c0_108, %c0_109], %385 {strides = array<i32>} : memref<8x8x17xf32, #tpu.memory_space<vmem>>, vector<1x8x17xf32>,
    return
  }
  func.func @transform_0(%arg0: i32, %arg1: memref<9xi32, #tpu.memory_space<smem>>) -> (i32, i32, i32) {
    %c0_i32 = arith.constant 0 : i32
    %c0_i32_0 = arith.constant 0 : i32
    %c0_i32_1 = arith.constant 0 : i32
    %c0_i32_2 = arith.constant 0 : i32
    return %c0_i32, %c0_i32_0, %c0_i32_1 : i32, i32, i32
  }
  func.func @transform_1(%arg0: i32, %arg1: memref<9xi32, #tpu.memory_space<smem>>) -> (i32, i32) {
    %c0_i32 = arith.constant 0 : i32
    %c0_i32_0 = arith.constant 0 : i32
    %c0_i32_1 = arith.constant 0 : i32
    return %c0_i32, %c0_i32_0 : i32, i32
  }
  func.func @transform_2(%arg0: i32, %arg1: memref<9xi32, #tpu.memory_space<smem>>) -> (i32, i32) {
    %c0_i32 = arith.constant 0 : i32
    %c0_i32_0 = arith.constant 0 : i32
    %c0_i32_1 = arith.constant 0 : i32
    return %c0_i32, %c0_i32_0 : i32, i32
  }
  func.func @transform_3(%arg0: i32, %arg1: memref<9xi32, #tpu.memory_space<smem>>) -> (i32, i32) {
    %c0_i32 = arith.constant 0 : i32
    %c0_i32_0 = arith.constant 0 : i32
    %c0_i32_1 = arith.constant 0 : i32
    return %c0_i32, %c0_i32_0 : i32, i32
  }
  func.func @transform_4(%arg0: i32, %arg1: memref<9xi32, #tpu.memory_space<smem>>) -> (i32, i32) {
    %c0_i32 = arith.constant 0 : i32
    %c0_i32_0 = arith.constant 0 : i32
    %c0_i32_1 = arith.constant 0 : i32
    return %c0_i32, %c0_i32_0 : i32, i32
  }
  func.func @transform_5(%arg0: i32, %arg1: memref<9xi32, #tpu.memory_space<smem>>) -> (i32, i32) {
    %c0_i32 = arith.constant 0 : i32
    %c0_i32_0 = arith.constant 0 : i32
    %c0_i32_1 = arith.constant 0 : i32
    return %c0_i32, %c0_i32_0 : i32, i32
  }
  func.func @transform_6(%arg0: i32, %arg1: memref<9xi32, #tpu.memory_space<smem>>) -> (i32, i32) {
    %c0_i32 = arith.constant 0 : i32
    %c0_i32_0 = arith.constant 0 : i32
    %c0_i32_1 = arith.constant 0 : i32
    return %c0_i32, %c0_i32_0 : i32, i32
  }
  func.func @transform_7(%arg0: i32, %arg1: memref<9xi32, #tpu.memory_space<smem>>) -> (i32, i32) {
    %c0_i32 = arith.constant 0 : i32
    %c0_i32_0 = arith.constant 0 : i32
    %c0_i32_1 = arith.constant 0 : i32
    return %c0_i32, %c0_i32_0 : i32, i32
  }
  func.func @transform_8(%arg0: i32, %arg1: memref<9xi32, #tpu.memory_space<smem>>) -> (i32, i32) {
    %c0_i32 = arith.constant 0 : i32
    %c0_i32_0 = arith.constant 0 : i32
    %c0_i32_1 = arith.constant 0 : i32
    return %c0_i32, %c0_i32_0 : i32, i32
  }
  func.func @transform_9(%arg0: i32, %arg1: memref<9xi32, #tpu.memory_space<smem>>) -> (i32, i32) {
    %c0_i32 = arith.constant 0 : i32
    %c0_i32_0 = arith.constant 0 : i32
    %c0_i32_1 = arith.constant 0 : i32
    return %c0_i32, %c0_i32_0 : i32, i32
  }
  func.func @transform_10(%arg0: i32, %arg1: memref<9xi32, #tpu.memory_space<smem>>) -> (i32, i32, i32) {
    %c0_i32 = arith.constant 0 : i32
    %c0_i32_0 = arith.constant 0 : i32
    %c0_i32_1 = arith.constant 0 : i32
    %c0_i32_2 = arith.constant 0 : i32
    return %c0_i32, %c0_i32_0, %c0_i32_1 : i32, i32, i32
  }
}

</mosaic_0001>

<llo_original>
// kernel: tpu_custom_call.1
$region0: #{tpu_custom_call.1}
  #allocation0 [shape = 'u32[]', space=smem, size = 0x4, offset = 0x4, fixed_abs, tag = 'smem constant byte address 0x4 - core index']
  #allocation1 [shape = 'u32[144,128]{1,0:T(1,128)}', space=vmem, size = 0x12000, scoped, tag = 'internal scratch']
  #allocation2 [shape = 's32[1]{0}', space=sflag, size = 0x4, scoped, tag = 'scoped memory for tpu_custom_call.1']
  #allocation3 [shape = 'u8[512]{0}', space=smem, size = 0x200, scoped, tag = 'prefetched SMEM operand 0']
  #allocation4 [shape = 'f32[1,1]{1,0:T(1,128)S(1)}', space=vmem, size = 0x200, scoped, tag = 'scoped memory for tpu_custom_call.1']
  %s0 = inlined_call_operand.vmem [shape: s32[9], index: 0, kind: input, shape index: {}]
  %s1 = inlined_call_operand.hbm [shape: f32[8,8,8], index: 1, kind: input, shape index: {}]
  %s2 = inlined_call_operand.vmem [shape: f32[40,128], index: 2, kind: input, shape index: {}]
  %s3 = inlined_call_operand.vmem [shape: f32[1,128], index: 3, kind: input, shape index: {}]
  %s4 = inlined_call_operand.hbm [shape: f32[32,64], index: 4, kind: input, shape index: {}]
  %s5 = inlined_call_operand.hbm [shape: f32[32,32], index: 5, kind: input, shape index: {}]
  %s6 = inlined_call_operand.hbm [shape: f32[32,48], index: 6, kind: input, shape index: {}]
  %s7 = inlined_call_operand.vmem [shape: f32[1,48], index: 7, kind: input, shape index: {}]
  %s8 = inlined_call_operand.vmem [shape: f32[16,32], index: 8, kind: input, shape index: {}]
  %s9 = inlined_call_operand.vmem [shape: f32[32,1], index: 9, kind: input, shape index: {}]
  %s10 = inlined_call_operand.<no memory space> [shape: f32[1,1], index: 10, kind: input, shape index: {}]
  %s11 = inlined_call_operand.hbm [shape: f32[8,8,17], index: 11, kind: output, shape index: {}]
  %s12 = sld [smem:[#allocation0]]
  $region87: #{tpu_custom_call.1} parent=0
    _
  %s14 = ssub.s32 1, %s12
  %s15 = scalar_select 0, %s14, %s12
  %s16 = sshll.u32 %s0, 4
  %s17 = int_to_ptr.vmem [resolvable:$true] %s16
  %19 = dma.vmem_to_smem %s17, 16, [#allocation3], [#allocation2]
  %v20 = vstv %s10
  %21 = vst [vmem:[#allocation4] sm:$0x1] %v20
  %22 = dma.done [#allocation2], 16
  %23 = sfence
  $region1: #{tpu_custom_call.1} parent=0
    #allocation5 [shape = 'u8[32768]{0}', space=vmem, size = 0x8000, scoped, tag = 'input window, operand 1, single buffered']
    #allocation6 [shape = 's32[1]{0}', space=sflag, size = 0x4, scoped, tag = 'scoped memory for tpu_custom_call.1']
    #allocation7 [shape = 's32[1]{0}', space=sflag, size = 0x4, scoped, tag = 'scoped memory for tpu_custom_call.1']
    #allocation8 [shape = 'u8[16384]{0}', space=vmem, size = 0x4000, scoped, tag = 'input window, operand 4, single buffered']
    #allocation9 [shape = 's32[1]{0}', space=sflag, size = 0x4, scoped, tag = 'scoped memory for tpu_custom_call.1']
    #allocation10 [shape = 'u8[16384]{0}', space=vmem, size = 0x4000, scoped, tag = 'input window, operand 5, single buffered']
    #allocation11 [shape = 'u8[16384]{0}', space=vmem, size = 0x4000, scoped, tag = 'input window, operand 6, single buffered']
    #allocation12 [shape = 's32[1]{0}', space=sflag, size = 0x4, scoped, tag = 'scoped memory for tpu_custom_call.1']
    #allocation13 [shape = 'u8[32768]{0}', space=vmem, size = 0x8000, scoped, tag = 'output window, operand 0, single buffered']
    %24 = vsyncpa [#allocation6], 0
    %25 = vsyncpa [#allocation9], 0
    %26 = vsyncpa [#allocation12], 0
    %27 = vsyncpa [#allocation7], 0
    // Predicated region
    $region2: #{tpu_custom_call.1} parent=1 // pred_check
      _
    $region3: #{tpu_custom_call.1} parent=1 // pred_check_branch
      %29 = sbr.rel (0) target = $region5
    $region4: #{tpu_custom_call.1} parent=1 // pred_region
      %s31 = ssub.s32 1024, 1024
      %32 = vsyncadd [#allocation6], %s31
      %s33 = sshll.u32 [#allocation5], 4
      %s34 = int_to_ptr.vmem [resolvable:$true] %s33
      %39 = dma.hbm_to_vmem [thread:$0]  %s1, 1024, %s34, [#allocation6], 128, 128, 8
    $region5: #{tpu_custom_call.1} parent=1 // pred_fallthru
      _
    // Predicated region
    $region6: #{tpu_custom_call.1} parent=1 // pred_check
      _
    $region7: #{tpu_custom_call.1} parent=1 // pred_check_branch
      %41 = sbr.rel (0) target = $region9
    $region8: #{tpu_custom_call.1} parent=1 // pred_region
      _
    $region9: #{tpu_custom_call.1} parent=1 // pred_fallthru
      _
    // Predicated region
    $region10: #{tpu_custom_call.1} parent=1 // pred_check
      _
    $region11: #{tpu_custom_call.1} parent=1 // pred_check_branch
      %43 = sbr.rel (0) target = $region13
    $region12: #{tpu_custom_call.1} parent=1 // pred_region
      _
    $region13: #{tpu_custom_call.1} parent=1 // pred_fallthru
      _
    // Predicated region
    $region14: #{tpu_custom_call.1} parent=1 // pred_check
      _
    $region15: #{tpu_custom_call.1} parent=1 // pred_check_branch
      %45 = sbr.rel (0) target = $region17
    $region16: #{tpu_custom_call.1} parent=1 // pred_region
      %s47 = ssub.s32 512, 512
      %48 = vsyncadd [#allocation9], %s47
      %s49 = sshll.u32 [#allocation8], 4
      %s50 = int_to_ptr.vmem [resolvable:$true] %s49
      %55 = dma.hbm_to_vmem [thread:$0]  %s4, 512, %s50, [#allocation9], 128, 128, 8
    $region17: #{tpu_custom_call.1} parent=1 // pred_fallthru
      _
    // Predicated region
    $region18: #{tpu_custom_call.1} parent=1 // pred_check
      _
    $region19: #{tpu_custom_call.1} parent=1 // pred_check_branch
      %57 = sbr.rel (0) target = $region21
    $region20: #{tpu_custom_call.1} parent=1 // pred_region
      %s59 = ssub.s32 512, 512
      %60 = vsyncadd [#allocation9], %s59
      %s61 = sshll.u32 [#allocation10], 4
      %s62 = int_to_ptr.vmem [resolvable:$true] %s61
      %67 = dma.hbm_to_vmem [thread:$0]  %s5, 512, %s62, [#allocation9], 128, 128, 8
    $region21: #{tpu_custom_call.1} parent=1 // pred_fallthru
      _
    // Predicated region
    $region22: #{tpu_custom_call.1} parent=1 // pred_check
      _
    $region23: #{tpu_custom_call.1} parent=1 // pred_check_branch
      %69 = sbr.rel (0) target = $region25
    $region24: #{tpu_custom_call.1} parent=1 // pred_region
      %s71 = ssub.s32 512, 512
      %72 = vsyncadd [#allocation12], %s71
      %s73 = sshll.u32 [#allocation11], 4
      %s74 = int_to_ptr.vmem [resolvable:$true] %s73
      %79 = dma.hbm_to_vmem [thread:$0]  %s6, 512, %s74, [#allocation12], 128, 128, 8
    $region25: #{tpu_custom_call.1} parent=1 // pred_fallthru
      _
    // Predicated region
    $region26: #{tpu_custom_call.1} parent=1 // pred_check
      _
    $region27: #{tpu_custom_call.1} parent=1 // pred_check_branch
      %81 = sbr.rel (0) target = $region29
    $region28: #{tpu_custom_call.1} parent=1 // pred_region
      _
    $region29: #{tpu_custom_call.1} parent=1 // pred_fallthru
      _
    // Predicated region
    $region30: #{tpu_custom_call.1} parent=1 // pred_check
      _
    $region31: #{tpu_custom_call.1} parent=1 // pred_check_branch
      %83 = sbr.rel (0) target = $region33
    $region32: #{tpu_custom_call.1} parent=1 // pred_region
      _
    $region33: #{tpu_custom_call.1} parent=1 // pred_fallthru
      _
    // Predicated region
    $region34: #{tpu_custom_call.1} parent=1 // pred_check
      _
    $region35: #{tpu_custom_call.1} parent=1 // pred_check_branch
      %85 = sbr.rel (0) target = $region37
    $region36: #{tpu_custom_call.1} parent=1 // pred_region
      _
    $region37: #{tpu_custom_call.1} parent=1 // pred_fallthru
      _
    // Predicated region
    $region38: #{tpu_custom_call.1} parent=1 // pred_check
      _
    $region39: #{tpu_custom_call.1} parent=1 // pred_check_branch
      %87 = sbr.rel (0) target = $region41
    $region40: #{tpu_custom_call.1} parent=1 // pred_region
      _
    $region41: #{tpu_custom_call.1} parent=1 // pred_fallthru
      _
    // Predicated region
    $region42: #{tpu_custom_call.1} parent=1 // pred_check
      _
    $region43: #{tpu_custom_call.1} parent=1 // pred_check_branch
      %89 = sbr.rel (0) target = $region45
    $region44: #{tpu_custom_call.1} parent=1 // pred_region
      %90 = dma.done [#allocation6], 1024
    $region45: #{tpu_custom_call.1} parent=1 // pred_fallthru
      _
    // Predicated region
    $region46: #{tpu_custom_call.1} parent=1 // pred_check
      _
    $region47: #{tpu_custom_call.1} parent=1 // pred_check_branch
      %92 = sbr.rel (0) target = $region49
    $region48: #{tpu_custom_call.1} parent=1 // pred_region
      %93 = dma.done [#allocation9], 512
    $region49: #{tpu_custom_call.1} parent=1 // pred_fallthru
      _
    // Predicated region
    $region50: #{tpu_custom_call.1} parent=1 // pred_check
      _
    $region51: #{tpu_custom_call.1} parent=1 // pred_check_branch
      %95 = sbr.rel (0) target = $region53
    $region52: #{tpu_custom_call.1} parent=1 // pred_region
      %96 = dma.done [#allocation9], 512
    $region53: #{tpu_custom_call.1} parent=1 // pred_fallthru
      _
    // Predicated region
    $region54: #{tpu_custom_call.1} parent=1 // pred_check
      _
    $region55: #{tpu_custom_call.1} parent=1 // pred_check_branch
      %98 = sbr.rel (0) target = $region57
    $region56: #{tpu_custom_call.1} parent=1 // pred_region
      %99 = dma.done [#allocation12], 512
    $region57: #{tpu_custom_call.1} parent=1 // pred_fallthru
      _
    %v100 = vld [vmem:[%s2] sm:$0xff]
    %v101 = vld [vmem:[%s2 + $0x8] sm:$0xff]
    %v102 = vld [vmem:[%s2 + $0x10] sm:$0xff]
    %v103 = vld [vmem:[%s2 + $0x18] sm:$0xff]
    %v104 = vld [vmem:[%s2 + $0x20] sm:$0xff]
    %v105 = vld [vmem:[%s3] sm:$0x1]
    %v106 = vld [vmem:[#allocation8] sm:$0xff]
    %v107 = vld [vmem:[#allocation8 + $0x8] sm:$0xff]
    %v108 = vld [vmem:[#allocation8 + $0x10] sm:$0xff]
    %v109 = vld [vmem:[#allocation8 + $0x18] sm:$0xff]
    %v110 = vld [vmem:[#allocation10] sm:$0xff]
    %v111 = vld [vmem:[#allocation10 + $0x8] sm:$0xff]
    %v112 = vld [vmem:[#allocation10 + $0x10] sm:$0xff]
    %v113 = vld [vmem:[#allocation10 + $0x18] sm:$0xff]
    %v114 = vld [vmem:[#allocation11] sm:$0xff]
    %v115 = vld [vmem:[#allocation11 + $0x8] sm:$0xff]
    %v116 = vld [vmem:[#allocation11 + $0x10] sm:$0xff]
    %v117 = vld [vmem:[#allocation11 + $0x18] sm:$0xff]
    %v118 = vld [vmem:[%s7] sm:$0x1]
    %v119 = vld [vmem:[%s8] sm:$0xff]
    %v120 = vld [vmem:[%s8 + $0x8] sm:$0xff]
    %v121 = vld [vmem:[%s9] sm:$0xff]
    %v122 = vld [vmem:[%s9 + $0x8] sm:$0xff]
    %v123 = vld [vmem:[%s9 + $0x10] sm:$0xff]
    %v124 = vld [vmem:[%s9 + $0x18] sm:$0xff]
    %v125 = vld [vmem:[#allocation4] sm:$0x1]
    %vm126 = vcmask 138240
    %127 = vst.msk [vmem:[#allocation13] sm:$0xff] %vm126, 0.0
    %128 = vst.msk [vmem:[#allocation13 + $0x8] sm:$0xff] %vm126, 0.0
    %129 = vst.msk [vmem:[#allocation13 + $0x10] sm:$0xff] %vm126, 0.0
    %130 = vst.msk [vmem:[#allocation13 + $0x18] sm:$0xff] %vm126, 0.0
    %131 = vst.msk [vmem:[#allocation13 + $0x20] sm:$0xff] %vm126, 0.0
    %132 = vst.msk [vmem:[#allocation13 + $0x28] sm:$0xff] %vm126, 0.0
    %133 = vst.msk [vmem:[#allocation13 + $0x30] sm:$0xff] %vm126, 0.0
    %134 = vst.msk [vmem:[#allocation13 + $0x38] sm:$0xff] %vm126, 0.0
    %v135 = vld [vmem:[#allocation5] sm:$0xff]
    %vm136 = vcmask 64512
    %v137 = vsel %vm136, %v135, 0.0
    %v139 = vlaneseq
    %v140 = vshrl.u32 %v139, 7
    %v141 = vsub.s32 0, %v140
    %v142 = vrot.slane %v105, %v141
    %vm144 = vcmask 326656
    %v146 = vsel %vm144, %v137, 0
    %148 = vmatprep.subr.mxu0 0.0
    %149 = vmatpush1.msra.mxu0 %v100
    %150 = vmatprep.subr.mxu0 0.0
    %151 = vmatpush1.msra.mxu0 %v101
    %152 = vmatprep.subr.mxu0 0.0
    %153 = vmatpush1.msra.mxu0 %v102
    %154 = vmatprep.subr.mxu0 0.0
    %155 = vmatpush1.msra.mxu0 %v103
    %156 = vmatprep.subr.mxu0 0.0
    %157 = vmatpush1.msra.mxu0 %v104
    %158 = vmatprep.subr.mxu0 0.0
    %159 = vmatpush1.msra.mxu0 0.0
    %160 = vmatprep.subr.mxu0 0.0
    %161 = vmatpush1.msra.mxu0 0.0
    %162 = vmatprep.subr.mxu0 0.0
    %163 = vmatpush1.msra.mxu0 0.0
    %164 = vmatprep.subr.mxu0 0.0
    %165 = vmatpush1.msra.mxu0 0.0
    %166 = vmatprep.subr.mxu0 0.0
    %167 = vmatpush1.msra.mxu0 0.0
    %168 = vmatprep.subr.mxu0 0.0
    %169 = vmatpush1.msra.mxu0 0.0
    %170 = vmatprep.subr.mxu0 0.0
    %171 = vmatpush1.msra.mxu0 0.0
    %172 = vmatprep.subr.mxu0 0.0
    %173 = vmatpush1.msra.mxu0 0.0
    %174 = vmatprep.subr.mxu0 0.0
    %175 = vmatpush1.msra.mxu0 0.0
    %176 = vmatprep.subr.mxu0 0.0
    %177 = vmatpush1.msra.mxu0 0.0
    %178 = vmatprep.subr.mxu0 0.0
    %179 = vmatpush1.msra.mxu0 0.0
    %180 = vmatprep.subr.mxu0 0.0
    %181 = vmatpush1.msra.mxu0 0.0
    %182 = vmatprep.subr.mxu0 0.0
    %183 = vmatpush1.msra.mxu0 0.0
    %184 = vmatprep.subr.mxu0 0.0
    %185 = vmatpush1.msra.mxu0 0.0
    %186 = vmatprep.subr.mxu0 0.0
    %187 = vmatpush1.msra.mxu0 0.0
    %188 = vmatprep.subr.mxu0 0.0
    %189 = vmatpush1.msra.mxu0 0.0
    %190 = vmatprep.subr.mxu0 0.0
    %191 = vmatpush1.msra.mxu0 0.0
    %192 = vmatprep.subr.mxu0 0.0
    %193 = vmatpush1.msra.mxu0 0.0
    %194 = vmatprep.subr.mxu0 0.0
    %195 = vmatpush1.msra.mxu0 0.0
    %196 = vmatprep.subr.mxu0 0.0
    %197 = vmatpush1.msra.mxu0 0.0
    %198 = vmatprep.subr.mxu0 0.0
    %199 = vmatpush1.msra.mxu0 0.0
    %200 = vmatprep.subr.mxu0 0.0
    %201 = vmatpush1.msra.mxu0 0.0
    %202 = vmatprep.subr.mxu0 0.0
    %203 = vmatpush1.msra.mxu0 0.0
    %204 = vmatprep.subr.mxu0 0.0
    %205 = vmatpush1.msra.mxu0 0.0
    %206 = vmatprep.subr.mxu0 0.0
    %207 = vmatpush1.msra.mxu0 0.0
    %208 = vmatprep.subr.mxu0 0.0
    %209 = vmatpush1.msra.mxu0 0.0
    %210 = vmatprep.subr.mxu0 0.0
    %211 = vmatpush1.msra.mxu0 0.0
    %212 = vmatprep.mubr.f32.mxu0 0.0
    %213 = vmatmul.mubr.f32.gmra.mrb[0].mxu0 %v146
    %v214 = vpop.f32.mrb[0].mxu0
    %v215 = vadd.f32 %v142, %v214
    %v216 = vpop.f32.mrb[0].mxu0
    %217 = vdwg.mxu0
    %v218 = vxor.u32 %v215, 2147483648
    %v219 = vmul.f32 %v218, 1.442695
    %v220 = vpow.pop %v219
    %v221 = vadd.f32 %v220, 1.0
    %v222 = vrcp.pop %v221
    %v223 = vmul.f32 1.0, %v222
    %225 = vrot.lane.b32.xlu0 %v215, 32
    %v226 = vpop.permute.xlu0 %225
    %v228 = vmul.f32 %v223, %v226
    %230 = vrot.lane.b32.xlu0 %v228, 64
    %v231 = vpop.permute.xlu0 %230
    %v233 = vadd.f32 %v215, %v231
    %v234 = vtanh.pop %v233
    %v235 = vsub.f32 1.0, %v223
    %237 = vrot.lane.b32.xlu0 %v234, 96
    %v238 = vpop.permute.xlu0 %237
    %v240 = vmul.f32 %v235, %v238
    %v241 = vmul.f32 %v223, 0.0
    %v242 = vadd.f32 %v240, %v241
    %v243 = vlaneseq
    %v244 = vshrl.u32 %v243, 7
    %s245 = sld [smem:[#allocation3]]
    %s246 = sld [smem:[#allocation3 + $0x3]]
    %s247 = sld [smem:[#allocation3 + $0x6]]
    %s248 = ssub.s32 %s245, 1
    // While loop
    $region58: #{tpu_custom_call.1} parent=1 // loop_pre_header
      _
    $region59: #{tpu_custom_call.1} parent=1 // loop_header
      %s250 = sphi 0, %s252
      %p251 = scmp.ge.s32.totalorder %s250, %s248
      %v255 = vphi %v242, %v592
    $region60: #{tpu_custom_call.1} parent=1 // loop_header_branch
      %254 = sbr.rel (%p251) target = $region64
    $region61: #{tpu_custom_call.1} parent=1 // loop_body
      %257 = vrot.lane.b32.xlu0 %v255, 96
      %v258 = vpop.permute.xlu0 %257
      %vm259 = vcmask 261120
      %v260 = vsel %vm259, %v258, 0
      %262 = vmatprep.subr.mxu0 0.0
      %263 = vmatpush1.msra.mxu0 %v106
      %264 = vmatprep.subr.mxu0 0.0
      %265 = vmatpush1.msra.mxu0 %v107
      %266 = vmatprep.subr.mxu0 0.0
      %267 = vmatpush1.msra.mxu0 %v108
      %268 = vmatprep.subr.mxu0 0.0
      %269 = vmatpush1.msra.mxu0 %v109
      %270 = vmatprep.subr.mxu0 0.0
      %271 = vmatpush1.msra.mxu0 0.0
      %272 = vmatprep.subr.mxu0 0.0
      %273 = vmatpush1.msra.mxu0 0.0
      %274 = vmatprep.subr.mxu0 0.0
      %275 = vmatpush1.msra.mxu0 0.0
      %276 = vmatprep.subr.mxu0 0.0
      %277 = vmatpush1.msra.mxu0 0.0
      %278 = vmatprep.subr.mxu0 0.0
      %279 = vmatpush1.msra.mxu0 0.0
      %280 = vmatprep.subr.mxu0 0.0
      %281 = vmatpush1.msra.mxu0 0.0
      %282 = vmatprep.subr.mxu0 0.0
      %283 = vmatpush1.msra.mxu0 0.0
      %284 = vmatprep.subr.mxu0 0.0
      %285 = vmatpush1.msra.mxu0 0.0
      %286 = vmatprep.subr.mxu0 0.0
      %287 = vmatpush1.msra.mxu0 0.0
      %288 = vmatprep.subr.mxu0 0.0
      %289 = vmatpush1.msra.mxu0 0.0
      %290 = vmatprep.subr.mxu0 0.0
      %291 = vmatpush1.msra.mxu0 0.0
      %292 = vmatprep.subr.mxu0 0.0
      %293 = vmatpush1.msra.mxu0 0.0
      %294 = vmatprep.subr.mxu0 0.0
      %295 = vmatpush1.msra.mxu0 0.0
      %296 = vmatprep.subr.mxu0 0.0
      %297 = vmatpush1.msra.mxu0 0.0
      %298 = vmatprep.subr.mxu0 0.0
      %299 = vmatpush1.msra.mxu0 0.0
      %300 = vmatprep.subr.mxu0 0.0
      %301 = vmatpush1.msra.mxu0 0.0
      %302 = vmatprep.subr.mxu0 0.0
      %303 = vmatpush1.msra.mxu0 0.0
      %304 = vmatprep.subr.mxu0 0.0
      %305 = vmatpush1.msra.mxu0 0.0
      %306 = vmatprep.subr.mxu0 0.0
      %307 = vmatpush1.msra.mxu0 0.0
      %308 = vmatprep.subr.mxu0 0.0
      %309 = vmatpush1.msra.mxu0 0.0
      %310 = vmatprep.subr.mxu0 0.0
      %311 = vmatpush1.msra.mxu0 0.0
      %312 = vmatprep.subr.mxu0 0.0
      %313 = vmatpush1.msra.mxu0 0.0
      %314 = vmatprep.subr.mxu0 0.0
      %315 = vmatpush1.msra.mxu0 0.0
      %316 = vmatprep.subr.mxu0 0.0
      %317 = vmatpush1.msra.mxu0 0.0
      %318 = vmatprep.subr.mxu0 0.0
      %319 = vmatpush1.msra.mxu0 0.0
      %320 = vmatprep.subr.mxu0 0.0
      %321 = vmatpush1.msra.mxu0 0.0
      %322 = vmatprep.subr.mxu0 0.0
      %323 = vmatpush1.msra.mxu0 0.0
      %324 = vmatprep.subr.mxu0 0.0
      %325 = vmatpush1.msra.mxu0 0.0
      %326 = vmatprep.mubr.f32.mxu0 0.0
      %327 = vmatmul.mubr.f32.gmra.mrb[0].mxu0 %v260
      %v328 = vpop.f32.mrb[0].mxu0
      %v329 = vadd.f32 0.0, %v328
      %v330 = vpop.f32.mrb[0].mxu0
      %331 = vdwg.mxu0
      %v332 = vxor.u32 %v329, 2147483648
      %v333 = vmul.f32 %v332, 1.442695
      %v334 = vpow.pop %v333
      %v335 = vadd.f32 %v334, 1.0
      %v336 = vrcp.pop %v335
      %v337 = vmul.f32 1.0, %v336
      %v338 = vmul.f32 %v337, %v255
      %340 = vrot.lane.b32.xlu0 %v338, 96
      %v341 = vpop.permute.xlu0 %340
      %v342 = vsel %vm259, %v341, 0
      %344 = vmatprep.subr.mxu0 0.0
      %345 = vmatpush1.msra.mxu0 %v110
      %346 = vmatprep.subr.mxu0 0.0
      %347 = vmatpush1.msra.mxu0 %v111
      %348 = vmatprep.subr.mxu0 0.0
      %349 = vmatpush1.msra.mxu0 %v112
      %350 = vmatprep.subr.mxu0 0.0
      %351 = vmatpush1.msra.mxu0 %v113
      %352 = vmatprep.subr.mxu0 0.0
      %353 = vmatpush1.msra.mxu0 0.0
      %354 = vmatprep.subr.mxu0 0.0
      %355 = vmatpush1.msra.mxu0 0.0
      %356 = vmatprep.subr.mxu0 0.0
      %357 = vmatpush1.msra.mxu0 0.0
      %358 = vmatprep.subr.mxu0 0.0
      %359 = vmatpush1.msra.mxu0 0.0
      %360 = vmatprep.subr.mxu0 0.0
      %361 = vmatpush1.msra.mxu0 0.0
      %362 = vmatprep.subr.mxu0 0.0
      %363 = vmatpush1.msra.mxu0 0.0
      %364 = vmatprep.subr.mxu0 0.0
      %365 = vmatpush1.msra.mxu0 0.0
      %366 = vmatprep.subr.mxu0 0.0
      %367 = vmatpush1.msra.mxu0 0.0
      %368 = vmatprep.subr.mxu0 0.0
      %369 = vmatpush1.msra.mxu0 0.0
      %370 = vmatprep.subr.mxu0 0.0
      %371 = vmatpush1.msra.mxu0 0.0
      %372 = vmatprep.subr.mxu0 0.0
      %373 = vmatpush1.msra.mxu0 0.0
      %374 = vmatprep.subr.mxu0 0.0
      %375 = vmatpush1.msra.mxu0 0.0
      %376 = vmatprep.subr.mxu0 0.0
      %377 = vmatpush1.msra.mxu0 0.0
      %378 = vmatprep.subr.mxu0 0.0
      %379 = vmatpush1.msra.mxu0 0.0
      %380 = vmatprep.subr.mxu0 0.0
      %381 = vmatpush1.msra.mxu0 0.0
      %382 = vmatprep.subr.mxu0 0.0
      %383 = vmatpush1.msra.mxu0 0.0
      %384 = vmatprep.subr.mxu0 0.0
      %385 = vmatpush1.msra.mxu0 0.0
      %386 = vmatprep.subr.mxu0 0.0
      %387 = vmatpush1.msra.mxu0 0.0
      %388 = vmatprep.subr.mxu0 0.0
      %389 = vmatpush1.msra.mxu0 0.0
      %390 = vmatprep.subr.mxu0 0.0
      %391 = vmatpush1.msra.mxu0 0.0
      %392 = vmatprep.subr.mxu0 0.0
      %393 = vmatpush1.msra.mxu0 0.0
      %394 = vmatprep.subr.mxu0 0.0
      %395 = vmatpush1.msra.mxu0 0.0
      %396 = vmatprep.subr.mxu0 0.0
      %397 = vmatpush1.msra.mxu0 0.0
      %398 = vmatprep.subr.mxu0 0.0
      %399 = vmatpush1.msra.mxu0 0.0
      %400 = vmatprep.subr.mxu0 0.0
      %401 = vmatpush1.msra.mxu0 0.0
      %402 = vmatprep.subr.mxu0 0.0
      %403 = vmatpush1.msra.mxu0 0.0
      %404 = vmatprep.subr.mxu0 0.0
      %405 = vmatpush1.msra.mxu0 0.0
      %406 = vmatprep.subr.mxu0 0.0
      %407 = vmatpush1.msra.mxu0 0.0
      %408 = vmatprep.mubr.f32.mxu0 0.0
      %409 = vmatmul.mubr.f32.gmra.mrb[0].mxu0 %v342
      %v410 = vpop.f32.mrb[0].mxu0
      %v411 = vadd.f32 0.0, %v410
      %v412 = vpop.f32.mrb[0].mxu0
      %413 = vdwg.mxu0
      %v414 = vtanh.pop %v411
      %v415 = vsub.f32 1.0, %v337
      %v416 = vmul.f32 %v415, 0.5
      %v418 = vsub.f32 %v414, %v258
      %v419 = vmul.f32 %v416, %v418
      %421 = vrot.lane.b32.xlu0 %v419, 32
      %v422 = vpop.permute.xlu0 %421
      %v424 = vadd.f32 %v255, %v422
      %426 = vrot.lane.b32.xlu0 %v424, 96
      %v427 = vpop.permute.xlu0 %426
      %v428 = vsel %vm259, %v427, 0
      %430 = vmatprep.subr.mxu0 0.0
      %431 = vmatpush1.msra.mxu0 %v106
      %432 = vmatprep.subr.mxu0 0.0
      %433 = vmatpush1.msra.mxu0 %v107
      %434 = vmatprep.subr.mxu0 0.0
      %435 = vmatpush1.msra.mxu0 %v108
      %436 = vmatprep.subr.mxu0 0.0
      %437 = vmatpush1.msra.mxu0 %v109
      %438 = vmatprep.subr.mxu0 0.0
      %439 = vmatpush1.msra.mxu0 0.0
      %440 = vmatprep.subr.mxu0 0.0
      %441 = vmatpush1.msra.mxu0 0.0
      %442 = vmatprep.subr.mxu0 0.0
      %443 = vmatpush1.msra.mxu0 0.0
      %444 = vmatprep.subr.mxu0 0.0
      %445 = vmatpush1.msra.mxu0 0.0
      %446 = vmatprep.subr.mxu0 0.0
      %447 = vmatpush1.msra.mxu0 0.0
      %448 = vmatprep.subr.mxu0 0.0
      %449 = vmatpush1.msra.mxu0 0.0
      %450 = vmatprep.subr.mxu0 0.0
      %451 = vmatpush1.msra.mxu0 0.0
      %452 = vmatprep.subr.mxu0 0.0
      %453 = vmatpush1.msra.mxu0 0.0
      %454 = vmatprep.subr.mxu0 0.0
      %455 = vmatpush1.msra.mxu0 0.0
      %456 = vmatprep.subr.mxu0 0.0
      %457 = vmatpush1.msra.mxu0 0.0
      %458 = vmatprep.subr.mxu0 0.0
      %459 = vmatpush1.msra.mxu0 0.0
      %460 = vmatprep.subr.mxu0 0.0
      %461 = vmatpush1.msra.mxu0 0.0
      %462 = vmatprep.subr.mxu0 0.0
      %463 = vmatpush1.msra.mxu0 0.0
      %464 = vmatprep.subr.mxu0 0.0
      %465 = vmatpush1.msra.mxu0 0.0
      %466 = vmatprep.subr.mxu0 0.0
      %467 = vmatpush1.msra.mxu0 0.0
      %468 = vmatprep.subr.mxu0 0.0
      %469 = vmatpush1.msra.mxu0 0.0
      %470 = vmatprep.subr.mxu0 0.0
      %471 = vmatpush1.msra.mxu0 0.0
      %472 = vmatprep.subr.mxu0 0.0
      %473 = vmatpush1.msra.mxu0 0.0
      %474 = vmatprep.subr.mxu0 0.0
      %475 = vmatpush1.msra.mxu0 0.0
      %476 = vmatprep.subr.mxu0 0.0
      %477 = vmatpush1.msra.mxu0 0.0
      %478 = vmatprep.subr.mxu0 0.0
      %479 = vmatpush1.msra.mxu0 0.0
      %480 = vmatprep.subr.mxu0 0.0
      %481 = vmatpush1.msra.mxu0 0.0
      %482 = vmatprep.subr.mxu0 0.0
      %483 = vmatpush1.msra.mxu0 0.0
      %484 = vmatprep.subr.mxu0 0.0
      %485 = vmatpush1.msra.mxu0 0.0
      %486 = vmatprep.subr.mxu0 0.0
      %487 = vmatpush1.msra.mxu0 0.0
      %488 = vmatprep.subr.mxu0 0.0
      %489 = vmatpush1.msra.mxu0 0.0
      %490 = vmatprep.subr.mxu0 0.0
      %491 = vmatpush1.msra.mxu0 0.0
      %492 = vmatprep.subr.mxu0 0.0
      %493 = vmatpush1.msra.mxu0 0.0
      %494 = vmatprep.mubr.f32.mxu0 0.0
      %495 = vmatmul.mubr.f32.gmra.mrb[0].mxu0 %v428
      %v496 = vpop.f32.mrb[0].mxu0
      %v497 = vadd.f32 0.0, %v496
      %v498 = vpop.f32.mrb[0].mxu0
      %499 = vdwg.mxu0
      %v500 = vxor.u32 %v497, 2147483648
      %v501 = vmul.f32 %v500, 1.442695
      %v502 = vpow.pop %v501
      %v503 = vadd.f32 %v502, 1.0
      %v504 = vrcp.pop %v503
      %v505 = vmul.f32 1.0, %v504
      %v506 = vmul.f32 %v505, %v424
      %508 = vrot.lane.b32.xlu0 %v506, 96
      %v509 = vpop.permute.xlu0 %508
      %v510 = vsel %vm259, %v509, 0
      %512 = vmatprep.subr.mxu0 0.0
      %513 = vmatpush1.msra.mxu0 %v110
      %514 = vmatprep.subr.mxu0 0.0
      %515 = vmatpush1.msra.mxu0 %v111
      %516 = vmatprep.subr.mxu0 0.0
      %517 = vmatpush1.msra.mxu0 %v112
      %518 = vmatprep.subr.mxu0 0.0
      %519 = vmatpush1.msra.mxu0 %v113
      %520 = vmatprep.subr.mxu0 0.0
      %521 = vmatpush1.msra.mxu0 0.0
      %522 = vmatprep.subr.mxu0 0.0
      %523 = vmatpush1.msra.mxu0 0.0
      %524 = vmatprep.subr.mxu0 0.0
      %525 = vmatpush1.msra.mxu0 0.0
      %526 = vmatprep.subr.mxu0 0.0
      %527 = vmatpush1.msra.mxu0 0.0
      %528 = vmatprep.subr.mxu0 0.0
      %529 = vmatpush1.msra.mxu0 0.0
      %530 = vmatprep.subr.mxu0 0.0
      %531 = vmatpush1.msra.mxu0 0.0
      %532 = vmatprep.subr.mxu0 0.0
      %533 = vmatpush1.msra.mxu0 0.0
      %534 = vmatprep.subr.mxu0 0.0
      %535 = vmatpush1.msra.mxu0 0.0
      %536 = vmatprep.subr.mxu0 0.0
      %537 = vmatpush1.msra.mxu0 0.0
      %538 = vmatprep.subr.mxu0 0.0
      %539 = vmatpush1.msra.mxu0 0.0
      %540 = vmatprep.subr.mxu0 0.0
      %541 = vmatpush1.msra.mxu0 0.0
      %542 = vmatprep.subr.mxu0 0.0
      %543 = vmatpush1.msra.mxu0 0.0
      %544 = vmatprep.subr.mxu0 0.0
      %545 = vmatpush1.msra.mxu0 0.0
      %546 = vmatprep.subr.mxu0 0.0
      %547 = vmatpush1.msra.mxu0 0.0
      %548 = vmatprep.subr.mxu0 0.0
      %549 = vmatpush1.msra.mxu0 0.0
      %550 = vmatprep.subr.mxu0 0.0
      %551 = vmatpush1.msra.mxu0 0.0
      %552 = vmatprep.subr.mxu0 0.0
      %553 = vmatpush1.msra.mxu0 0.0
      %554 = vmatprep.subr.mxu0 0.0
      %555 = vmatpush1.msra.mxu0 0.0
      %556 = vmatprep.subr.mxu0 0.0
      %557 = vmatpush1.msra.mxu0 0.0
      %558 = vmatprep.subr.mxu0 0.0
      %559 = vmatpush1.msra.mxu0 0.0
      %560 = vmatprep.subr.mxu0 0.0
      %561 = vmatpush1.msra.mxu0 0.0
      %562 = vmatprep.subr.mxu0 0.0
      %563 = vmatpush1.msra.mxu0 0.0
      %564 = vmatprep.subr.mxu0 0.0
      %565 = vmatpush1.msra.mxu0 0.0
      %566 = vmatprep.subr.mxu0 0.0
      %567 = vmatpush1.msra.mxu0 0.0
      %568 = vmatprep.subr.mxu0 0.0
      %569 = vmatpush1.msra.mxu0 0.0
      %570 = vmatprep.subr.mxu0 0.0
      %571 = vmatpush1.msra.mxu0 0.0
      %572 = vmatprep.subr.mxu0 0.0
      %573 = vmatpush1.msra.mxu0 0.0
      %574 = vmatprep.subr.mxu0 0.0
      %575 = vmatpush1.msra.mxu0 0.0
      %576 = vmatprep.mubr.f32.mxu0 0.0
      %577 = vmatmul.mubr.f32.gmra.mrb[0].mxu0 %v510
      %v578 = vpop.f32.mrb[0].mxu0
      %v579 = vadd.f32 0.0, %v578
      %v580 = vpop.f32.mrb[0].mxu0
      %581 = vdwg.mxu0
      %v582 = vtanh.pop %v579
      %v583 = vsub.f32 1.0, %v505
      %v584 = vmul.f32 %v583, 0.5
      %v586 = vsub.f32 %v582, %v427
      %v587 = vmul.f32 %v584, %v586
      %589 = vrot.lane.b32.xlu0 %v587, 32
      %v590 = vpop.permute.xlu0 %589
      %v592 = vadd.f32 %v424, %v590
    $region62: #{tpu_custom_call.1} parent=1 // loop_footer
      %s252 = sadd.s32 %s250, 1
    $region63: #{tpu_custom_call.1} parent=1 // loop_footer_branch
      %249 = sbr.rel target = $region59
    $region64: #{tpu_custom_call.1} parent=1 // loop_exit
      _
    %594 = vrot.lane.b32.xlu0 %v255, 96
    %v595 = vpop.permute.xlu0 %594
    %vm596 = vcmask 261120
    %v597 = vsel %vm596, %v595, 0
    %599 = vmatprep.subr.mxu0 0.0
    %600 = vmatpush1.msra.mxu0 %v106
    %601 = vmatprep.subr.mxu0 0.0
    %602 = vmatpush1.msra.mxu0 %v107
    %603 = vmatprep.subr.mxu0 0.0
    %604 = vmatpush1.msra.mxu0 %v108
    %605 = vmatprep.subr.mxu0 0.0
    %606 = vmatpush1.msra.mxu0 %v109
    %607 = vmatprep.subr.mxu0 0.0
    %608 = vmatpush1.msra.mxu0 0.0
    %609 = vmatprep.subr.mxu0 0.0
    %610 = vmatpush1.msra.mxu0 0.0
    %611 = vmatprep.subr.mxu0 0.0
    %612 = vmatpush1.msra.mxu0 0.0
    %613 = vmatprep.subr.mxu0 0.0
    %614 = vmatpush1.msra.mxu0 0.0
    %615 = vmatprep.subr.mxu0 0.0
    %616 = vmatpush1.msra.mxu0 0.0
    %617 = vmatprep.subr.mxu0 0.0
    %618 = vmatpush1.msra.mxu0 0.0
    %619 = vmatprep.subr.mxu0 0.0
    %620 = vmatpush1.msra.mxu0 0.0
    %621 = vmatprep.subr.mxu0 0.0
    %622 = vmatpush1.msra.mxu0 0.0
    %623 = vmatprep.subr.mxu0 0.0
    %624 = vmatpush1.msra.mxu0 0.0
    %625 = vmatprep.subr.mxu0 0.0
    %626 = vmatpush1.msra.mxu0 0.0
    %627 = vmatprep.subr.mxu0 0.0
    %628 = vmatpush1.msra.mxu0 0.0
    %629 = vmatprep.subr.mxu0 0.0
    %630 = vmatpush1.msra.mxu0 0.0
    %631 = vmatprep.subr.mxu0 0.0
    %632 = vmatpush1.msra.mxu0 0.0
    %633 = vmatprep.subr.mxu0 0.0
    %634 = vmatpush1.msra.mxu0 0.0
    %635 = vmatprep.subr.mxu0 0.0
    %636 = vmatpush1.msra.mxu0 0.0
    %637 = vmatprep.subr.mxu0 0.0
    %638 = vmatpush1.msra.mxu0 0.0
    %639 = vmatprep.subr.mxu0 0.0
    %640 = vmatpush1.msra.mxu0 0.0
    %641 = vmatprep.subr.mxu0 0.0
    %642 = vmatpush1.msra.mxu0 0.0
    %643 = vmatprep.subr.mxu0 0.0
    %644 = vmatpush1.msra.mxu0 0.0
    %645 = vmatprep.subr.mxu0 0.0
    %646 = vmatpush1.msra.mxu0 0.0
    %647 = vmatprep.subr.mxu0 0.0
    %648 = vmatpush1.msra.mxu0 0.0
    %649 = vmatprep.subr.mxu0 0.0
    %650 = vmatpush1.msra.mxu0 0.0
    %651 = vmatprep.subr.mxu0 0.0
    %652 = vmatpush1.msra.mxu0 0.0
    %653 = vmatprep.subr.mxu0 0.0
    %654 = vmatpush1.msra.mxu0 0.0
    %655 = vmatprep.subr.mxu0 0.0
    %656 = vmatpush1.msra.mxu0 0.0
    %657 = vmatprep.subr.mxu0 0.0
    %658 = vmatpush1.msra.mxu0 0.0
    %659 = vmatprep.subr.mxu0 0.0
    %660 = vmatpush1.msra.mxu0 0.0
    %661 = vmatprep.subr.mxu0 0.0
    %662 = vmatpush1.msra.mxu0 0.0
    %663 = vmatprep.mubr.f32.mxu0 0.0
    %664 = vmatmul.mubr.f32.gmra.mrb[0].mxu0 %v597
    %v665 = vpop.f32.mrb[0].mxu0
    %v666 = vadd.f32 0.0, %v665
    %v667 = vpop.f32.mrb[0].mxu0
    %668 = vdwg.mxu0
    %v669 = vxor.u32 %v666, 2147483648
    %v670 = vmul.f32 %v669, 1.442695
    %v671 = vpow.pop %v670
    %v672 = vadd.f32 %v671, 1.0
    %v673 = vrcp.pop %v672
    %v674 = vmul.f32 1.0, %v673
    %v675 = vmul.f32 %v674, %v255
    %677 = vrot.lane.b32.xlu0 %v675, 96
    %v678 = vpop.permute.xlu0 %677
    %v679 = vsel %vm596, %v678, 0
    %681 = vmatprep.subr.mxu0 0.0
    %682 = vmatpush1.msra.mxu0 %v110
    %683 = vmatprep.subr.mxu0 0.0
    %684 = vmatpush1.msra.mxu0 %v111
    %685 = vmatprep.subr.mxu0 0.0
    %686 = vmatpush1.msra.mxu0 %v112
    %687 = vmatprep.subr.mxu0 0.0
    %688 = vmatpush1.msra.mxu0 %v113
    %689 = vmatprep.subr.mxu0 0.0
    %690 = vmatpush1.msra.mxu0 0.0
    %691 = vmatprep.subr.mxu0 0.0
    %692 = vmatpush1.msra.mxu0 0.0
    %693 = vmatprep.subr.mxu0 0.0
    %694 = vmatpush1.msra.mxu0 0.0
    %695 = vmatprep.subr.mxu0 0.0
    %696 = vmatpush1.msra.mxu0 0.0
    %697 = vmatprep.subr.mxu0 0.0
    %698 = vmatpush1.msra.mxu0 0.0
    %699 = vmatprep.subr.mxu0 0.0
    %700 = vmatpush1.msra.mxu0 0.0
    %701 = vmatprep.subr.mxu0 0.0
    %702 = vmatpush1.msra.mxu0 0.0
    %703 = vmatprep.subr.mxu0 0.0
    %704 = vmatpush1.msra.mxu0 0.0
    %705 = vmatprep.subr.mxu0 0.0
    %706 = vmatpush1.msra.mxu0 0.0
    %707 = vmatprep.subr.mxu0 0.0
    %708 = vmatpush1.msra.mxu0 0.0
    %709 = vmatprep.subr.mxu0 0.0
    %710 = vmatpush1.msra.mxu0 0.0
    %711 = vmatprep.subr.mxu0 0.0
    %712 = vmatpush1.msra.mxu0 0.0
    %713 = vmatprep.subr.mxu0 0.0
    %714 = vmatpush1.msra.mxu0 0.0
    %715 = vmatprep.subr.mxu0 0.0
    %716 = vmatpush1.msra.mxu0 0.0
    %717 = vmatprep.subr.mxu0 0.0
    %718 = vmatpush1.msra.mxu0 0.0
    %719 = vmatprep.subr.mxu0 0.0
    %720 = vmatpush1.msra.mxu0 0.0
    %721 = vmatprep.subr.mxu0 0.0
    %722 = vmatpush1.msra.mxu0 0.0
    %723 = vmatprep.subr.mxu0 0.0
    %724 = vmatpush1.msra.mxu0 0.0
    %725 = vmatprep.subr.mxu0 0.0
    %726 = vmatpush1.msra.mxu0 0.0
    %727 = vmatprep.subr.mxu0 0.0
    %728 = vmatpush1.msra.mxu0 0.0
    %729 = vmatprep.subr.mxu0 0.0
    %730 = vmatpush1.msra.mxu0 0.0
    %731 = vmatprep.subr.mxu0 0.0
    %732 = vmatpush1.msra.mxu0 0.0
    %733 = vmatprep.subr.mxu0 0.0
    %734 = vmatpush1.msra.mxu0 0.0
    %735 = vmatprep.subr.mxu0 0.0
    %736 = vmatpush1.msra.mxu0 0.0
    %737 = vmatprep.subr.mxu0 0.0
    %738 = vmatpush1.msra.mxu0 0.0
    %739 = vmatprep.subr.mxu0 0.0
    %740 = vmatpush1.msra.mxu0 0.0
    %741 = vmatprep.subr.mxu0 0.0
    %742 = vmatpush1.msra.mxu0 0.0
    %743 = vmatprep.subr.mxu0 0.0
    %744 = vmatpush1.msra.mxu0 0.0
    %745 = vmatprep.mubr.f32.mxu0 0.0
    %746 = vmatmul.mubr.f32.gmra.mrb[0].mxu0 %v679
    %v747 = vpop.f32.mrb[0].mxu0
    %v748 = vadd.f32 0.0, %v747
    %v749 = vpop.f32.mrb[0].mxu0
    %750 = vdwg.mxu0
    %v751 = vtanh.pop %v748
    %v752 = vsub.f32 1.0, %v674
    %v753 = vmul.f32 %v752, 0.5
    %v755 = vsub.f32 %v751, %v595
    %v756 = vmul.f32 %v753, %v755
    %758 = vrot.lane.b32.xlu0 %v756, 32
    %v759 = vpop.permute.xlu0 %758
    %v761 = vadd.f32 %v255, %v759
    %s762 = smul.u32 %s247, 8
    %s763 = scalar_lea.vmem [#allocation5], %s762
    %v764 = vld [vmem:[%s763] sm:$0xff]
    %766 = vrot.lane.b32.xlu0 %v761, 104
    %v767 = vpop.permute.xlu0 %766
    %v769 = vsel %vm136, %v764, %v767
    %v771 = vsel %vm144, %v769, 0
    %773 = vmatprep.subr.mxu0 0.0
    %774 = vmatpush1.msra.mxu0 %v100
    %775 = vmatprep.subr.mxu0 0.0
    %776 = vmatpush1.msra.mxu0 %v101
    %777 = vmatprep.subr.mxu0 0.0
    %778 = vmatpush1.msra.mxu0 %v102
    %779 = vmatprep.subr.mxu0 0.0
    %780 = vmatpush1.msra.mxu0 %v103
    %781 = vmatprep.subr.mxu0 0.0
    %782 = vmatpush1.msra.mxu0 %v104
    %783 = vmatprep.subr.mxu0 0.0
    %784 = vmatpush1.msra.mxu0 0.0
    %785 = vmatprep.subr.mxu0 0.0
    %786 = vmatpush1.msra.mxu0 0.0
    %787 = vmatprep.subr.mxu0 0.0
    %788 = vmatpush1.msra.mxu0 0.0
    %789 = vmatprep.subr.mxu0 0.0
    %790 = vmatpush1.msra.mxu0 0.0
    %791 = vmatprep.subr.mxu0 0.0
    %792 = vmatpush1.msra.mxu0 0.0
    %793 = vmatprep.subr.mxu0 0.0
    %794 = vmatpush1.msra.mxu0 0.0
    %795 = vmatprep.subr.mxu0 0.0
    %796 = vmatpush1.msra.mxu0 0.0
    %797 = vmatprep.subr.mxu0 0.0
    %798 = vmatpush1.msra.mxu0 0.0
    %799 = vmatprep.subr.mxu0 0.0
    %800 = vmatpush1.msra.mxu0 0.0
    %801 = vmatprep.subr.mxu0 0.0
    %802 = vmatpush1.msra.mxu0 0.0
    %803 = vmatprep.subr.mxu0 0.0
    %804 = vmatpush1.msra.mxu0 0.0
    %805 = vmatprep.subr.mxu0 0.0
    %806 = vmatpush1.msra.mxu0 0.0
    %807 = vmatprep.subr.mxu0 0.0
    %808 = vmatpush1.msra.mxu0 0.0
    %809 = vmatprep.subr.mxu0 0.0
    %810 = vmatpush1.msra.mxu0 0.0
    %811 = vmatprep.subr.mxu0 0.0
    %812 = vmatpush1.msra.mxu0 0.0
    %813 = vmatprep.subr.mxu0 0.0
    %814 = vmatpush1.msra.mxu0 0.0
    %815 = vmatprep.subr.mxu0 0.0
    %816 = vmatpush1.msra.mxu0 0.0
    %817 = vmatprep.subr.mxu0 0.0
    %818 = vmatpush1.msra.mxu0 0.0
    %819 = vmatprep.subr.mxu0 0.0
    %820 = vmatpush1.msra.mxu0 0.0
    %821 = vmatprep.subr.mxu0 0.0
    %822 = vmatpush1.msra.mxu0 0.0
    %823 = vmatprep.subr.mxu0 0.0
    %824 = vmatpush1.msra.mxu0 0.0
    %825 = vmatprep.subr.mxu0 0.0
    %826 = vmatpush1.msra.mxu0 0.0
    %827 = vmatprep.subr.mxu0 0.0
    %828 = vmatpush1.msra.mxu0 0.0
    %829 = vmatprep.subr.mxu0 0.0
    %830 = vmatpush1.msra.mxu0 0.0
    %831 = vmatprep.subr.mxu0 0.0
    %832 = vmatpush1.msra.mxu0 0.0
    %833 = vmatprep.subr.mxu0 0.0
    %834 = vmatpush1.msra.mxu0 0.0
    %835 = vmatprep.subr.mxu0 0.0
    %836 = vmatpush1.msra.mxu0 0.0
    %837 = vmatprep.mubr.f32.mxu0 0.0
    %838 = vmatmul.mubr.f32.gmra.mrb[0].mxu0 %v771
    %v839 = vpop.f32.mrb[0].mxu0
    %v840 = vadd.f32 %v142, %v839
    %v841 = vpop.f32.mrb[0].mxu0
    %842 = vdwg.mxu0
    %v843 = vxor.u32 %v840, 2147483648
    %v844 = vmul.f32 %v843, 1.442695
    %v845 = vpow.pop %v844
    %v846 = vadd.f32 %v845, 1.0
    %v847 = vrcp.pop %v846
    %v848 = vmul.f32 1.0, %v847
    %850 = vrot.lane.b32.xlu0 %v840, 32
    %v851 = vpop.permute.xlu0 %850
    %v853 = vmul.f32 %v848, %v851
    %855 = vrot.lane.b32.xlu0 %v853, 64
    %v856 = vpop.permute.xlu0 %855
    %v858 = vadd.f32 %v840, %v856
    %v859 = vtanh.pop %v858
    %v860 = vsub.f32 1.0, %v848
    %862 = vrot.lane.b32.xlu0 %v859, 96
    %v863 = vpop.permute.xlu0 %862
    %v865 = vmul.f32 %v860, %v863
    %v866 = vmul.f32 %v848, %v761
    %v867 = vadd.f32 %v865, %v866
    %vm868 = vcmp.ne.f32.partialorder %v764, -1.0
    %v869 = vsel %vm868, 1, 0
    %870 = vset.pattern.permute.xlu0 7
    %871 = vperm.xlu0 %870, %v869
    %v872 = vpop.permute.xlu0 %871
    %vm873 = vcmp.eq.s32.totalorder %v872, 1
    %v874 = vsel %vm873, %v867, %v761
    %v876 = vlaneseq
    %v877 = vshrl.u32 %v876, 7
    %v878 = vsub.s32 0, %v877
    %v879 = vrot.slane %v118, %v878
    %881 = vmatprep.subr.mxu0 0.0
    %882 = vmatpush1.msra.mxu0 %v114
    %883 = vmatprep.subr.mxu0 0.0
    %884 = vmatpush1.msra.mxu0 %v115
    %885 = vmatprep.subr.mxu0 0.0
    %886 = vmatpush1.msra.mxu0 %v116
    %887 = vmatprep.subr.mxu0 0.0
    %888 = vmatpush1.msra.mxu0 %v117
    %889 = vmatprep.subr.mxu0 0.0
    %890 = vmatpush1.msra.mxu0 0.0
    %891 = vmatprep.subr.mxu0 0.0
    %892 = vmatpush1.msra.mxu0 0.0
    %893 = vmatprep.subr.mxu0 0.0
    %894 = vmatpush1.msra.mxu0 0.0
    %895 = vmatprep.subr.mxu0 0.0
    %896 = vmatpush1.msra.mxu0 0.0
    %897 = vmatprep.subr.mxu0 0.0
    %898 = vmatpush1.msra.mxu0 0.0
    %899 = vmatprep.subr.mxu0 0.0
    %900 = vmatpush1.msra.mxu0 0.0
    %901 = vmatprep.subr.mxu0 0.0
    %902 = vmatpush1.msra.mxu0 0.0
    %903 = vmatprep.subr.mxu0 0.0
    %904 = vmatpush1.msra.mxu0 0.0
    %905 = vmatprep.subr.mxu0 0.0
    %906 = vmatpush1.msra.mxu0 0.0
    %907 = vmatprep.subr.mxu0 0.0
    %908 = vmatpush1.msra.mxu0 0.0
    %909 = vmatprep.subr.mxu0 0.0
    %910 = vmatpush1.msra.mxu0 0.0
    %911 = vmatprep.subr.mxu0 0.0
    %912 = vmatpush1.msra.mxu0 0.0
    %913 = vmatprep.subr.mxu0 0.0
    %914 = vmatpush1.msra.mxu0 0.0
    %915 = vmatprep.subr.mxu0 0.0
    %916 = vmatpush1.msra.mxu0 0.0
    %917 = vmatprep.subr.mxu0 0.0
    %918 = vmatpush1.msra.mxu0 0.0
    %919 = vmatprep.subr.mxu0 0.0
    %920 = vmatpush1.msra.mxu0 0.0
    %921 = vmatprep.subr.mxu0 0.0
    %922 = vmatpush1.msra.mxu0 0.0
    %923 = vmatprep.subr.mxu0 0.0
    %924 = vmatpush1.msra.mxu0 0.0
    %925 = vmatprep.subr.mxu0 0.0
    %926 = vmatpush1.msra.mxu0 0.0
    %927 = vmatprep.subr.mxu0 0.0
    %928 = vmatpush1.msra.mxu0 0.0
    %929 = vmatprep.subr.mxu0 0.0
    %930 = vmatpush1.msra.mxu0 0.0
    %931 = vmatprep.subr.mxu0 0.0
    %932 = vmatpush1.msra.mxu0 0.0
    %933 = vmatprep.subr.mxu0 0.0
    %934 = vmatpush1.msra.mxu0 0.0
    %935 = vmatprep.subr.mxu0 0.0
    %936 = vmatpush1.msra.mxu0 0.0
    %937 = vmatprep.subr.mxu0 0.0
    %938 = vmatpush1.msra.mxu0 0.0
    %939 = vmatprep.subr.mxu0 0.0
    %940 = vmatpush1.msra.mxu0 0.0
    %941 = vmatprep.subr.mxu0 0.0
    %942 = vmatpush1.msra.mxu0 0.0
    %943 = vmatprep.subr.mxu0 0.0
    %944 = vmatpush1.msra.mxu0 0.0
    %945 = vmatprep.mubr.f32.mxu0 0.0
    %946 = vmatmul.mubr.f32.gmra.mrb[0].mxu0 %v597
    %v947 = vpop.f32.mrb[0].mxu0
    %v948 = vadd.f32 %v879, %v947
    %v949 = vpop.f32.mrb[0].mxu0
    %950 = vdwg.mxu0
    %vm951 = vcmask 130048
    %v952 = vsel %vm951, %v948, -inf
    %953 = vmax.xlane.f32.xlu0 %v952
    %v954 = vpop.xlane.xlu0 %953
    %v955 = vsub.f32 %v948, %v954
    %v956 = vmul.f32 %v955, 1.442695
    %v957 = vpow.pop %v956
    %v958 = vsel %vm951, %v957, 0.0
    %959 = vadd.xlane.f32.xlu0 %v958
    %v960 = vpop.xlane.xlu0 %959
    %v961 = vlog2.pop %v960
    %v962 = vmul.f32 %v961, 0.6931472
    %v963 = vadd.f32 %v962, %v954
    %v964 = vsub.f32 %v948, %v963
    %v965 = vlaneseq
    %v966 = vand.u32 %v965, 127
    %vm967 = vcmp.eq.f32.partialorder %v948, %v954
    %v968 = vsel %vm967, %v966, 16
    %v969 = vsel %vm951, %v968, 2147483647
    %v970 = vand.u32 %v969, 65535
    %v971 = vshra.s32 %v969, 16
    %v972 = vcvt.s32.f32 %v970
    %v973 = vcvt.s32.f32 %v971
    %974 = vmin.xlane.f32.xlu0 %v973
    %v975 = vpop.xlane.xlu0 %974
    %vm976 = vcmp.eq.f32.partialorder %v973, %v975
    %v977 = vsel %vm976, %v972, inf
    %978 = vmin.xlane.f32.xlu0 %v977
    %v979 = vpop.xlane.xlu0 %978
    %v980 = vcvt.f32.s32 %v979
    %v981 = vcvt.f32.s32 %v975
    %v982 = vshll.u32 %v981, 16
    %v983 = vadd.s32 %v982, %v980
    %vm984 = vcmp.eq.s32.totalorder %v966, %v983
    %v985 = vsel %vm984, 1, 0
    %v986 = vcvt.s32.f32 %v985
    %988 = vrot.lane.b32.xlu0 %v948, 112
    %v989 = vpop.permute.xlu0 %988
    %v992 = vsel %vm951, %v986, 0
    %994 = vmatprep.subr.mxu0 0.0
    %995 = vmatpush1.msra.mxu0 %v119
    %996 = vmatprep.subr.mxu0 0.0
    %997 = vmatpush1.msra.mxu0 %v120
    %998 = vmatprep.subr.mxu0 0.0
    %999 = vmatpush1.msra.mxu0 0.0
    %1000 = vmatprep.subr.mxu0 0.0
    %1001 = vmatpush1.msra.mxu0 0.0
    %1002 = vmatprep.subr.mxu0 0.0
    %1003 = vmatpush1.msra.mxu0 0.0
    %1004 = vmatprep.subr.mxu0 0.0
    %1005 = vmatpush1.msra.mxu0 0.0
    %1006 = vmatprep.subr.mxu0 0.0
    %1007 = vmatpush1.msra.mxu0 0.0
    %1008 = vmatprep.subr.mxu0 0.0
    %1009 = vmatpush1.msra.mxu0 0.0
    %1010 = vmatprep.subr.mxu0 0.0
    %1011 = vmatpush1.msra.mxu0 0.0
    %1012 = vmatprep.subr.mxu0 0.0
    %1013 = vmatpush1.msra.mxu0 0.0
    %1014 = vmatprep.subr.mxu0 0.0
    %1015 = vmatpush1.msra.mxu0 0.0
    %1016 = vmatprep.subr.mxu0 0.0
    %1017 = vmatpush1.msra.mxu0 0.0
    %1018 = vmatprep.subr.mxu0 0.0
    %1019 = vmatpush1.msra.mxu0 0.0
    %1020 = vmatprep.subr.mxu0 0.0
    %1021 = vmatpush1.msra.mxu0 0.0
    %1022 = vmatprep.subr.mxu0 0.0
    %1023 = vmatpush1.msra.mxu0 0.0
    %1024 = vmatprep.subr.mxu0 0.0
    %1025 = vmatpush1.msra.mxu0 0.0
    %1026 = vmatprep.subr.mxu0 0.0
    %1027 = vmatpush1.msra.mxu0 0.0
    %1028 = vmatprep.subr.mxu0 0.0
    %1029 = vmatpush1.msra.mxu0 0.0
    %1030 = vmatprep.subr.mxu0 0.0
    %1031 = vmatpush1.msra.mxu0 0.0
    %1032 = vmatprep.subr.mxu0 0.0
    %1033 = vmatpush1.msra.mxu0 0.0
    %1034 = vmatprep.subr.mxu0 0.0
    %1035 = vmatpush1.msra.mxu0 0.0
    %1036 = vmatprep.subr.mxu0 0.0
    %1037 = vmatpush1.msra.mxu0 0.0
    %1038 = vmatprep.subr.mxu0 0.0
    %1039 = vmatpush1.msra.mxu0 0.0
    %1040 = vmatprep.subr.mxu0 0.0
    %1041 = vmatpush1.msra.mxu0 0.0
    %1042 = vmatprep.subr.mxu0 0.0
    %1043 = vmatpush1.msra.mxu0 0.0
    %1044 = vmatprep.subr.mxu0 0.0
    %1045 = vmatpush1.msra.mxu0 0.0
    %1046 = vmatprep.subr.mxu0 0.0
    %1047 = vmatpush1.msra.mxu0 0.0
    %1048 = vmatprep.subr.mxu0 0.0
    %1049 = vmatpush1.msra.mxu0 0.0
    %1050 = vmatprep.subr.mxu0 0.0
    %1051 = vmatpush1.msra.mxu0 0.0
    %1052 = vmatprep.subr.mxu0 0.0
    %1053 = vmatpush1.msra.mxu0 0.0
    %1054 = vmatprep.subr.mxu0 0.0
    %1055 = vmatpush1.msra.mxu0 0.0
    %1056 = vmatprep.subr.mxu0 0.0
    %1057 = vmatpush1.msra.mxu0 0.0
    %1058 = vmatprep.mubr.f32.mxu0 0.0
    %1059 = vmatmul.mubr.f32.gmra.mrb[0].mxu0 %v992
    %v1060 = vpop.f32.mrb[0].mxu0
    %v1061 = vadd.f32 %v989, %v1060
    %v1062 = vpop.f32.mrb[0].mxu0
    %1063 = vdwg.mxu0
    %v1064 = vmax.f32 %v1061, 0.0
    %v1066 = vlaneseq
    %v1067 = vshrl.u32 %v1066, 7
    %v1068 = vsub.s32 0, %v1067
    %v1069 = vrot.slane %v125, %v1068
    %v1072 = vsel %vm596, %v1064, 0
    %1074 = vmatprep.subr.mxu0 0.0
    %1075 = vmatpush1.msra.mxu0 %v121
    %1076 = vmatprep.subr.mxu0 0.0
    %1077 = vmatpush1.msra.mxu0 %v122
    %1078 = vmatprep.subr.mxu0 0.0
    %1079 = vmatpush1.msra.mxu0 %v123
    %1080 = vmatprep.subr.mxu0 0.0
    %1081 = vmatpush1.msra.mxu0 %v124
    %1082 = vmatprep.subr.mxu0 0.0
    %1083 = vmatpush1.msra.mxu0 0.0
    %1084 = vmatprep.subr.mxu0 0.0
    %1085 = vmatpush1.msra.mxu0 0.0
    %1086 = vmatprep.subr.mxu0 0.0
    %1087 = vmatpush1.msra.mxu0 0.0
    %1088 = vmatprep.subr.mxu0 0.0
    %1089 = vmatpush1.msra.mxu0 0.0
    %1090 = vmatprep.subr.mxu0 0.0
    %1091 = vmatpush1.msra.mxu0 0.0
    %1092 = vmatprep.subr.mxu0 0.0
    %1093 = vmatpush1.msra.mxu0 0.0
    %1094 = vmatprep.subr.mxu0 0.0
    %1095 = vmatpush1.msra.mxu0 0.0
    %1096 = vmatprep.subr.mxu0 0.0
    %1097 = vmatpush1.msra.mxu0 0.0
    %1098 = vmatprep.subr.mxu0 0.0
    %1099 = vmatpush1.msra.mxu0 0.0
    %1100 = vmatprep.subr.mxu0 0.0
    %1101 = vmatpush1.msra.mxu0 0.0
    %1102 = vmatprep.subr.mxu0 0.0
    %1103 = vmatpush1.msra.mxu0 0.0
    %1104 = vmatprep.subr.mxu0 0.0
    %1105 = vmatpush1.msra.mxu0 0.0
    %1106 = vmatprep.subr.mxu0 0.0
    %1107 = vmatpush1.msra.mxu0 0.0
    %1108 = vmatprep.subr.mxu0 0.0
    %1109 = vmatpush1.msra.mxu0 0.0
    %1110 = vmatprep.subr.mxu0 0.0
    %1111 = vmatpush1.msra.mxu0 0.0
    %1112 = vmatprep.subr.mxu0 0.0
    %1113 = vmatpush1.msra.mxu0 0.0
    %1114 = vmatprep.subr.mxu0 0.0
    %1115 = vmatpush1.msra.mxu0 0.0
    %1116 = vmatprep.subr.mxu0 0.0
    %1117 = vmatpush1.msra.mxu0 0.0
    %1118 = vmatprep.subr.mxu0 0.0
    %1119 = vmatpush1.msra.mxu0 0.0
    %1120 = vmatprep.subr.mxu0 0.0
    %1121 = vmatpush1.msra.mxu0 0.0
    %1122 = vmatprep.subr.mxu0 0.0
    %1123 = vmatpush1.msra.mxu0 0.0
    %1124 = vmatprep.subr.mxu0 0.0
    %1125 = vmatpush1.msra.mxu0 0.0
    %1126 = vmatprep.subr.mxu0 0.0
    %1127 = vmatpush1.msra.mxu0 0.0
    %1128 = vmatprep.subr.mxu0 0.0
    %1129 = vmatpush1.msra.mxu0 0.0
    %1130 = vmatprep.subr.mxu0 0.0
    %1131 = vmatpush1.msra.mxu0 0.0
    %1132 = vmatprep.subr.mxu0 0.0
    %1133 = vmatpush1.msra.mxu0 0.0
    %1134 = vmatprep.subr.mxu0 0.0
    %1135 = vmatpush1.msra.mxu0 0.0
    %1136 = vmatprep.subr.mxu0 0.0
    %1137 = vmatpush1.msra.mxu0 0.0
    %1138 = vmatprep.mubr.f32.mxu0 0.0
    %1139 = vmatmul.mubr.f32.gmra.mrb[0].mxu0 %v1072
    %v1140 = vpop.f32.mrb[0].mxu0
    %v1141 = vadd.f32 %v1069, %v1140
    %v1142 = vpop.f32.mrb[0].mxu0
    %1143 = vdwg.mxu0
    %v1144 = vxor.u32 %v1141, 2147483648
    %v1145 = vmul.f32 %v1144, 1.442695
    %v1146 = vpow.pop %v1145
    %v1147 = vadd.f32 %v1146, 1.0
    %v1148 = vrcp.pop %v1147
    %v1149 = vmul.f32 1.0, %v1148
    %1151 = vrot.lane.b32.xlu0 %v1149, 16
    %v1152 = vpop.permute.xlu0 %1151
    %v1154 = vsel %vm951, %v964, %v1152
    %v1155 = vstv %s246
    %vm1156 = vcmp.lt.s32.totalorder %v244, %v1155
    %v1157 = vsel %vm1156, 1, 0
    %vm1158 = vcmp.eq.s32.totalorder %v1157, 1
    %v1159 = vsel %vm1158, %v1154, 0.0
    %s1160 = scalar_lea.vmem [#allocation13], %s762
    %1161 = vst.msk [vmem:[%s1160] sm:$0xff] %vm126, %v1159
    %s1162 = sld [smem:[#allocation3 + $0x1]]
    %s1163 = sld [smem:[#allocation3 + $0x4]]
    %s1164 = sld [smem:[#allocation3 + $0x7]]
    %s1165 = ssub.s32 %s1162, 1
    // While loop
    $region65: #{tpu_custom_call.1} parent=1 // loop_pre_header
      _
    $region66: #{tpu_custom_call.1} parent=1 // loop_header
      %s1167 = sphi 0, %s1169
      %p1168 = scmp.ge.s32.totalorder %s1167, %s1165
      %v1172 = vphi %v874, %v1508
    $region67: #{tpu_custom_call.1} parent=1 // loop_header_branch
      %1171 = sbr.rel (%p1168) target = $region71
    $region68: #{tpu_custom_call.1} parent=1 // loop_body
      %1174 = vrot.lane.b32.xlu0 %v1172, 96
      %v1175 = vpop.permute.xlu0 %1174
      %v1176 = vsel %vm596, %v1175, 0
      %1178 = vmatprep.subr.mxu0 0.0
      %1179 = vmatpush1.msra.mxu0 %v106
      %1180 = vmatprep.subr.mxu0 0.0
      %1181 = vmatpush1.msra.mxu0 %v107
      %1182 = vmatprep.subr.mxu0 0.0
      %1183 = vmatpush1.msra.mxu0 %v108
      %1184 = vmatprep.subr.mxu0 0.0
      %1185 = vmatpush1.msra.mxu0 %v109
      %1186 = vmatprep.subr.mxu0 0.0
      %1187 = vmatpush1.msra.mxu0 0.0
      %1188 = vmatprep.subr.mxu0 0.0
      %1189 = vmatpush1.msra.mxu0 0.0
      %1190 = vmatprep.subr.mxu0 0.0
      %1191 = vmatpush1.msra.mxu0 0.0
      %1192 = vmatprep.subr.mxu0 0.0
      %1193 = vmatpush1.msra.mxu0 0.0
      %1194 = vmatprep.subr.mxu0 0.0
      %1195 = vmatpush1.msra.mxu0 0.0
      %1196 = vmatprep.subr.mxu0 0.0
      %1197 = vmatpush1.msra.mxu0 0.0
      %1198 = vmatprep.subr.mxu0 0.0
      %1199 = vmatpush1.msra.mxu0 0.0
      %1200 = vmatprep.subr.mxu0 0.0
      %1201 = vmatpush1.msra.mxu0 0.0
      %1202 = vmatprep.subr.mxu0 0.0
      %1203 = vmatpush1.msra.mxu0 0.0
      %1204 = vmatprep.subr.mxu0 0.0
      %1205 = vmatpush1.msra.mxu0 0.0
      %1206 = vmatprep.subr.mxu0 0.0
      %1207 = vmatpush1.msra.mxu0 0.0
      %1208 = vmatprep.subr.mxu0 0.0
      %1209 = vmatpush1.msra.mxu0 0.0
      %1210 = vmatprep.subr.mxu0 0.0
      %1211 = vmatpush1.msra.mxu0 0.0
      %1212 = vmatprep.subr.mxu0 0.0
      %1213 = vmatpush1.msra.mxu0 0.0
      %1214 = vmatprep.subr.mxu0 0.0
      %1215 = vmatpush1.msra.mxu0 0.0
      %1216 = vmatprep.subr.mxu0 0.0
      %1217 = vmatpush1.msra.mxu0 0.0
      %1218 = vmatprep.subr.mxu0 0.0
      %1219 = vmatpush1.msra.mxu0 0.0
      %1220 = vmatprep.subr.mxu0 0.0
      %1221 = vmatpush1.msra.mxu0 0.0
      %1222 = vmatprep.subr.mxu0 0.0
      %1223 = vmatpush1.msra.mxu0 0.0
      %1224 = vmatprep.subr.mxu0 0.0
      %1225 = vmatpush1.msra.mxu0 0.0
      %1226 = vmatprep.subr.mxu0 0.0
      %1227 = vmatpush1.msra.mxu0 0.0
      %1228 = vmatprep.subr.mxu0 0.0
      %1229 = vmatpush1.msra.mxu0 0.0
      %1230 = vmatprep.subr.mxu0 0.0
      %1231 = vmatpush1.msra.mxu0 0.0
      %1232 = vmatprep.subr.mxu0 0.0
      %1233 = vmatpush1.msra.mxu0 0.0
      %1234 = vmatprep.subr.mxu0 0.0
      %1235 = vmatpush1.msra.mxu0 0.0
      %1236 = vmatprep.subr.mxu0 0.0
      %1237 = vmatpush1.msra.mxu0 0.0
      %1238 = vmatprep.subr.mxu0 0.0
      %1239 = vmatpush1.msra.mxu0 0.0
      %1240 = vmatprep.subr.mxu0 0.0
      %1241 = vmatpush1.msra.mxu0 0.0
      %1242 = vmatprep.mubr.f32.mxu0 0.0
      %1243 = vmatmul.mubr.f32.gmra.mrb[0].mxu0 %v1176
      %v1244 = vpop.f32.mrb[0].mxu0
      %v1245 = vadd.f32 0.0, %v1244
      %v1246 = vpop.f32.mrb[0].mxu0
      %1247 = vdwg.mxu0
      %v1248 = vxor.u32 %v1245, 2147483648
      %v1249 = vmul.f32 %v1248, 1.442695
      %v1250 = vpow.pop %v1249
      %v1251 = vadd.f32 %v1250, 1.0
      %v1252 = vrcp.pop %v1251
      %v1253 = vmul.f32 1.0, %v1252
      %v1254 = vmul.f32 %v1253, %v1172
      %1256 = vrot.lane.b32.xlu0 %v1254, 96
      %v1257 = vpop.permute.xlu0 %1256
      %v1258 = vsel %vm596, %v1257, 0
      %1260 = vmatprep.subr.mxu0 0.0
      %1261 = vmatpush1.msra.mxu0 %v110
      %1262 = vmatprep.subr.mxu0 0.0
      %1263 = vmatpush1.msra.mxu0 %v111
      %1264 = vmatprep.subr.mxu0 0.0
      %1265 = vmatpush1.msra.mxu0 %v112
      %1266 = vmatprep.subr.mxu0 0.0
      %1267 = vmatpush1.msra.mxu0 %v113
      %1268 = vmatprep.subr.mxu0 0.0
      %1269 = vmatpush1.msra.mxu0 0.0
      %1270 = vmatprep.subr.mxu0 0.0
      %1271 = vmatpush1.msra.mxu0 0.0
      %1272 = vmatprep.subr.mxu0 0.0
      %1273 = vmatpush1.msra.mxu0 0.0
      %1274 = vmatprep.subr.mxu0 0.0
      %1275 = vmatpush1.msra.mxu0 0.0
      %1276 = vmatprep.subr.mxu0 0.0
      %1277 = vmatpush1.msra.mxu0 0.0
      %1278 = vmatprep.subr.mxu0 0.0
      %1279 = vmatpush1.msra.mxu0 0.0
      %1280 = vmatprep.subr.mxu0 0.0
      %1281 = vmatpush1.msra.mxu0 0.0
      %1282 = vmatprep.subr.mxu0 0.0
      %1283 = vmatpush1.msra.mxu0 0.0
      %1284 = vmatprep.subr.mxu0 0.0
      %1285 = vmatpush1.msra.mxu0 0.0
      %1286 = vmatprep.subr.mxu0 0.0
      %1287 = vmatpush1.msra.mxu0 0.0
      %1288 = vmatprep.subr.mxu0 0.0
      %1289 = vmatpush1.msra.mxu0 0.0
      %1290 = vmatprep.subr.mxu0 0.0
      %1291 = vmatpush1.msra.mxu0 0.0
      %1292 = vmatprep.subr.mxu0 0.0
      %1293 = vmatpush1.msra.mxu0 0.0
      %1294 = vmatprep.subr.mxu0 0.0
      %1295 = vmatpush1.msra.mxu0 0.0
      %1296 = vmatprep.subr.mxu0 0.0
      %1297 = vmatpush1.msra.mxu0 0.0
      %1298 = vmatprep.subr.mxu0 0.0
      %1299 = vmatpush1.msra.mxu0 0.0
      %1300 = vmatprep.subr.mxu0 0.0
      %1301 = vmatpush1.msra.mxu0 0.0
      %1302 = vmatprep.subr.mxu0 0.0
      %1303 = vmatpush1.msra.mxu0 0.0
      %1304 = vmatprep.subr.mxu0 0.0
      %1305 = vmatpush1.msra.mxu0 0.0
      %1306 = vmatprep.subr.mxu0 0.0
      %1307 = vmatpush1.msra.mxu0 0.0
      %1308 = vmatprep.subr.mxu0 0.0
      %1309 = vmatpush1.msra.mxu0 0.0
      %1310 = vmatprep.subr.mxu0 0.0
      %1311 = vmatpush1.msra.mxu0 0.0
      %1312 = vmatprep.subr.mxu0 0.0
      %1313 = vmatpush1.msra.mxu0 0.0
      %1314 = vmatprep.subr.mxu0 0.0
      %1315 = vmatpush1.msra.mxu0 0.0
      %1316 = vmatprep.subr.mxu0 0.0
      %1317 = vmatpush1.msra.mxu0 0.0
      %1318 = vmatprep.subr.mxu0 0.0
      %1319 = vmatpush1.msra.mxu0 0.0
      %1320 = vmatprep.subr.mxu0 0.0
      %1321 = vmatpush1.msra.mxu0 0.0
      %1322 = vmatprep.subr.mxu0 0.0
      %1323 = vmatpush1.msra.mxu0 0.0
      %1324 = vmatprep.mubr.f32.mxu0 0.0
      %1325 = vmatmul.mubr.f32.gmra.mrb[0].mxu0 %v1258
      %v1326 = vpop.f32.mrb[0].mxu0
      %v1327 = vadd.f32 0.0, %v1326
      %v1328 = vpop.f32.mrb[0].mxu0
      %1329 = vdwg.mxu0
      %v1330 = vtanh.pop %v1327
      %v1331 = vsub.f32 1.0, %v1253
      %v1332 = vmul.f32 %v1331, 0.5
      %v1334 = vsub.f32 %v1330, %v1175
      %v1335 = vmul.f32 %v1332, %v1334
      %1337 = vrot.lane.b32.xlu0 %v1335, 32
      %v1338 = vpop.permute.xlu0 %1337
      %v1340 = vadd.f32 %v1172, %v1338
      %1342 = vrot.lane.b32.xlu0 %v1340, 96
      %v1343 = vpop.permute.xlu0 %1342
      %v1344 = vsel %vm596, %v1343, 0
      %1346 = vmatprep.subr.mxu0 0.0
      %1347 = vmatpush1.msra.mxu0 %v106
      %1348 = vmatprep.subr.mxu0 0.0
      %1349 = vmatpush1.msra.mxu0 %v107
      %1350 = vmatprep.subr.mxu0 0.0
      %1351 = vmatpush1.msra.mxu0 %v108
      %1352 = vmatprep.subr.mxu0 0.0
      %1353 = vmatpush1.msra.mxu0 %v109
      %1354 = vmatprep.subr.mxu0 0.0
      %1355 = vmatpush1.msra.mxu0 0.0
      %1356 = vmatprep.subr.mxu0 0.0
      %1357 = vmatpush1.msra.mxu0 0.0
      %1358 = vmatprep.subr.mxu0 0.0
      %1359 = vmatpush1.msra.mxu0 0.0
      %1360 = vmatprep.subr.mxu0 0.0
      %1361 = vmatpush1.msra.mxu0 0.0
      %1362 = vmatprep.subr.mxu0 0.0
      %1363 = vmatpush1.msra.mxu0 0.0
      %1364 = vmatprep.subr.mxu0 0.0
      %1365 = vmatpush1.msra.mxu0 0.0
      %1366 = vmatprep.subr.mxu0 0.0
      %1367 = vmatpush1.msra.mxu0 0.0
      %1368 = vmatprep.subr.mxu0 0.0
      %1369 = vmatpush1.msra.mxu0 0.0
      %1370 = vmatprep.subr.mxu0 0.0
      %1371 = vmatpush1.msra.mxu0 0.0
      %1372 = vmatprep.subr.mxu0 0.0
      %1373 = vmatpush1.msra.mxu0 0.0
      %1374 = vmatprep.subr.mxu0 0.0
      %1375 = vmatpush1.msra.mxu0 0.0
      %1376 = vmatprep.subr.mxu0 0.0
      %1377 = vmatpush1.msra.mxu0 0.0
      %1378 = vmatprep.subr.mxu0 0.0
      %1379 = vmatpush1.msra.mxu0 0.0
      %1380 = vmatprep.subr.mxu0 0.0
      %1381 = vmatpush1.msra.mxu0 0.0
      %1382 = vmatprep.subr.mxu0 0.0
      %1383 = vmatpush1.msra.mxu0 0.0
      %1384 = vmatprep.subr.mxu0 0.0
      %1385 = vmatpush1.msra.mxu0 0.0
      %1386 = vmatprep.subr.mxu0 0.0
      %1387 = vmatpush1.msra.mxu0 0.0
      %1388 = vmatprep.subr.mxu0 0.0
      %1389 = vmatpush1.msra.mxu0 0.0
      %1390 = vmatprep.subr.mxu0 0.0
      %1391 = vmatpush1.msra.mxu0 0.0
      %1392 = vmatprep.subr.mxu0 0.0
      %1393 = vmatpush1.msra.mxu0 0.0
      %1394 = vmatprep.subr.mxu0 0.0
      %1395 = vmatpush1.msra.mxu0 0.0
      %1396 = vmatprep.subr.mxu0 0.0
      %1397 = vmatpush1.msra.mxu0 0.0
      %1398 = vmatprep.subr.mxu0 0.0
      %1399 = vmatpush1.msra.mxu0 0.0
      %1400 = vmatprep.subr.mxu0 0.0
      %1401 = vmatpush1.msra.mxu0 0.0
      %1402 = vmatprep.subr.mxu0 0.0
      %1403 = vmatpush1.msra.mxu0 0.0
      %1404 = vmatprep.subr.mxu0 0.0
      %1405 = vmatpush1.msra.mxu0 0.0
      %1406 = vmatprep.subr.mxu0 0.0
      %1407 = vmatpush1.msra.mxu0 0.0
      %1408 = vmatprep.subr.mxu0 0.0
      %1409 = vmatpush1.msra.mxu0 0.0
      %1410 = vmatprep.mubr.f32.mxu0 0.0
      %1411 = vmatmul.mubr.f32.gmra.mrb[0].mxu0 %v1344
      %v1412 = vpop.f32.mrb[0].mxu0
      %v1413 = vadd.f32 0.0, %v1412
      %v1414 = vpop.f32.mrb[0].mxu0
      %1415 = vdwg.mxu0
      %v1416 = vxor.u32 %v1413, 2147483648
      %v1417 = vmul.f32 %v1416, 1.442695
      %v1418 = vpow.pop %v1417
      %v1419 = vadd.f32 %v1418, 1.0
      %v1420 = vrcp.pop %v1419
      %v1421 = vmul.f32 1.0, %v1420
      %v1422 = vmul.f32 %v1421, %v1340
      %1424 = vrot.lane.b32.xlu0 %v1422, 96
      %v1425 = vpop.permute.xlu0 %1424
      %v1426 = vsel %vm596, %v1425, 0
      %1428 = vmatprep.subr.mxu0 0.0
      %1429 = vmatpush1.msra.mxu0 %v110
      %1430 = vmatprep.subr.mxu0 0.0
      %1431 = vmatpush1.msra.mxu0 %v111
      %1432 = vmatprep.subr.mxu0 0.0
      %1433 = vmatpush1.msra.mxu0 %v112
      %1434 = vmatprep.subr.mxu0 0.0
      %1435 = vmatpush1.msra.mxu0 %v113
      %1436 = vmatprep.subr.mxu0 0.0
      %1437 = vmatpush1.msra.mxu0 0.0
      %1438 = vmatprep.subr.mxu0 0.0
      %1439 = vmatpush1.msra.mxu0 0.0
      %1440 = vmatprep.subr.mxu0 0.0
      %1441 = vmatpush1.msra.mxu0 0.0
      %1442 = vmatprep.subr.mxu0 0.0
      %1443 = vmatpush1.msra.mxu0 0.0
      %1444 = vmatprep.subr.mxu0 0.0
      %1445 = vmatpush1.msra.mxu0 0.0
      %1446 = vmatprep.subr.mxu0 0.0
      %1447 = vmatpush1.msra.mxu0 0.0
      %1448 = vmatprep.subr.mxu0 0.0
      %1449 = vmatpush1.msra.mxu0 0.0
      %1450 = vmatprep.subr.mxu0 0.0
      %1451 = vmatpush1.msra.mxu0 0.0
      %1452 = vmatprep.subr.mxu0 0.0
      %1453 = vmatpush1.msra.mxu0 0.0
      %1454 = vmatprep.subr.mxu0 0.0
      %1455 = vmatpush1.msra.mxu0 0.0
      %1456 = vmatprep.subr.mxu0 0.0
      %1457 = vmatpush1.msra.mxu0 0.0
      %1458 = vmatprep.subr.mxu0 0.0
      %1459 = vmatpush1.msra.mxu0 0.0
      %1460 = vmatprep.subr.mxu0 0.0
      %1461 = vmatpush1.msra.mxu0 0.0
      %1462 = vmatprep.subr.mxu0 0.0
      %1463 = vmatpush1.msra.mxu0 0.0
      %1464 = vmatprep.subr.mxu0 0.0
      %1465 = vmatpush1.msra.mxu0 0.0
      %1466 = vmatprep.subr.mxu0 0.0
      %1467 = vmatpush1.msra.mxu0 0.0
      %1468 = vmatprep.subr.mxu0 0.0
      %1469 = vmatpush1.msra.mxu0 0.0
      %1470 = vmatprep.subr.mxu0 0.0
      %1471 = vmatpush1.msra.mxu0 0.0
      %1472 = vmatprep.subr.mxu0 0.0
      %1473 = vmatpush1.msra.mxu0 0.0
      %1474 = vmatprep.subr.mxu0 0.0
      %1475 = vmatpush1.msra.mxu0 0.0
      %1476 = vmatprep.subr.mxu0 0.0
      %1477 = vmatpush1.msra.mxu0 0.0
      %1478 = vmatprep.subr.mxu0 0.0
      %1479 = vmatpush1.msra.mxu0 0.0
      %1480 = vmatprep.subr.mxu0 0.0
      %1481 = vmatpush1.msra.mxu0 0.0
      %1482 = vmatprep.subr.mxu0 0.0
      %1483 = vmatpush1.msra.mxu0 0.0
      %1484 = vmatprep.subr.mxu0 0.0
      %1485 = vmatpush1.msra.mxu0 0.0
      %1486 = vmatprep.subr.mxu0 0.0
      %1487 = vmatpush1.msra.mxu0 0.0
      %1488 = vmatprep.subr.mxu0 0.0
      %1489 = vmatpush1.msra.mxu0 0.0
      %1490 = vmatprep.subr.mxu0 0.0
      %1491 = vmatpush1.msra.mxu0 0.0
      %1492 = vmatprep.mubr.f32.mxu0 0.0
      %1493 = vmatmul.mubr.f32.gmra.mrb[0].mxu0 %v1426
      %v1494 = vpop.f32.mrb[0].mxu0
      %v1495 = vadd.f32 0.0, %v1494
      %v1496 = vpop.f32.mrb[0].mxu0
      %1497 = vdwg.mxu0
      %v1498 = vtanh.pop %v1495
      %v1499 = vsub.f32 1.0, %v1421
      %v1500 = vmul.f32 %v1499, 0.5
      %v1502 = vsub.f32 %v1498, %v1343
      %v1503 = vmul.f32 %v1500, %v1502
      %1505 = vrot.lane.b32.xlu0 %v1503, 32
      %v1506 = vpop.permute.xlu0 %1505
      %v1508 = vadd.f32 %v1340, %v1506
    $region69: #{tpu_custom_call.1} parent=1 // loop_footer
      %s1169 = sadd.s32 %s1167, 1
    $region70: #{tpu_custom_call.1} parent=1 // loop_footer_branch
      %1166 = sbr.rel target = $region66
    $region71: #{tpu_custom_call.1} parent=1 // loop_exit
      _
    %1510 = vrot.lane.b32.xlu0 %v1172, 96
    %v1511 = vpop.permute.xlu0 %1510
    %v1512 = vsel %vm596, %v1511, 0
    %1514 = vmatprep.subr.mxu0 0.0
    %1515 = vmatpush1.msra.mxu0 %v106
    %1516 = vmatprep.subr.mxu0 0.0
    %1517 = vmatpush1.msra.mxu0 %v107
    %1518 = vmatprep.subr.mxu0 0.0
    %1519 = vmatpush1.msra.mxu0 %v108
    %1520 = vmatprep.subr.mxu0 0.0
    %1521 = vmatpush1.msra.mxu0 %v109
    %1522 = vmatprep.subr.mxu0 0.0
    %1523 = vmatpush1.msra.mxu0 0.0
    %1524 = vmatprep.subr.mxu0 0.0
    %1525 = vmatpush1.msra.mxu0 0.0
    %1526 = vmatprep.subr.mxu0 0.0
    %1527 = vmatpush1.msra.mxu0 0.0
    %1528 = vmatprep.subr.mxu0 0.0
    %1529 = vmatpush1.msra.mxu0 0.0
    %1530 = vmatprep.subr.mxu0 0.0
    %1531 = vmatpush1.msra.mxu0 0.0
    %1532 = vmatprep.subr.mxu0 0.0
    %1533 = vmatpush1.msra.mxu0 0.0
    %1534 = vmatprep.subr.mxu0 0.0
    %1535 = vmatpush1.msra.mxu0 0.0
    %1536 = vmatprep.subr.mxu0 0.0
    %1537 = vmatpush1.msra.mxu0 0.0
    %1538 = vmatprep.subr.mxu0 0.0
    %1539 = vmatpush1.msra.mxu0 0.0
    %1540 = vmatprep.subr.mxu0 0.0
    %1541 = vmatpush1.msra.mxu0 0.0
    %1542 = vmatprep.subr.mxu0 0.0
    %1543 = vmatpush1.msra.mxu0 0.0
    %1544 = vmatprep.subr.mxu0 0.0
    %1545 = vmatpush1.msra.mxu0 0.0
    %1546 = vmatprep.subr.mxu0 0.0
    %1547 = vmatpush1.msra.mxu0 0.0
    %1548 = vmatprep.subr.mxu0 0.0
    %1549 = vmatpush1.msra.mxu0 0.0
    %1550 = vmatprep.subr.mxu0 0.0
    %1551 = vmatpush1.msra.mxu0 0.0
    %1552 = vmatprep.subr.mxu0 0.0
    %1553 = vmatpush1.msra.mxu0 0.0
    %1554 = vmatprep.subr.mxu0 0.0
    %1555 = vmatpush1.msra.mxu0 0.0
    %1556 = vmatprep.subr.mxu0 0.0
    %1557 = vmatpush1.msra.mxu0 0.0
    %1558 = vmatprep.subr.mxu0 0.0
    %1559 = vmatpush1.msra.mxu0 0.0
    %1560 = vmatprep.subr.mxu0 0.0
    %1561 = vmatpush1.msra.mxu0 0.0
    %1562 = vmatprep.subr.mxu0 0.0
    %1563 = vmatpush1.msra.mxu0 0.0
    %1564 = vmatprep.subr.mxu0 0.0
    %1565 = vmatpush1.msra.mxu0 0.0
    %1566 = vmatprep.subr.mxu0 0.0
    %1567 = vmatpush1.msra.mxu0 0.0
    %1568 = vmatprep.subr.mxu0 0.0
    %1569 = vmatpush1.msra.mxu0 0.0
    %1570 = vmatprep.subr.mxu0 0.0
    %1571 = vmatpush1.msra.mxu0 0.0
    %1572 = vmatprep.subr.mxu0 0.0
    %1573 = vmatpush1.msra.mxu0 0.0
    %1574 = vmatprep.subr.mxu0 0.0
    %1575 = vmatpush1.msra.mxu0 0.0
    %1576 = vmatprep.subr.mxu0 0.0
    %1577 = vmatpush1.msra.mxu0 0.0
    %1578 = vmatprep.mubr.f32.mxu0 0.0
    %1579 = vmatmul.mubr.f32.gmra.mrb[0].mxu0 %v1512
    %v1580 = vpop.f32.mrb[0].mxu0
    %v1581 = vadd.f32 0.0, %v1580
    %v1582 = vpop.f32.mrb[0].mxu0
    %1583 = vdwg.mxu0
    %v1584 = vxor.u32 %v1581, 2147483648
    %v1585 = vmul.f32 %v1584, 1.442695
    %v1586 = vpow.pop %v1585
    %v1587 = vadd.f32 %v1586, 1.0
    %v1588 = vrcp.pop %v1587
    %v1589 = vmul.f32 1.0, %v1588
    %v1590 = vmul.f32 %v1589, %v1172
    %1592 = vrot.lane.b32.xlu0 %v1590, 96
    %v1593 = vpop.permute.xlu0 %1592
    %v1594 = vsel %vm596, %v1593, 0
    %1596 = vmatprep.subr.mxu0 0.0
    %1597 = vmatpush1.msra.mxu0 %v110
    %1598 = vmatprep.subr.mxu0 0.0
    %1599 = vmatpush1.msra.mxu0 %v111
    %1600 = vmatprep.subr.mxu0 0.0
    %1601 = vmatpush1.msra.mxu0 %v112
    %1602 = vmatprep.subr.mxu0 0.0
    %1603 = vmatpush1.msra.mxu0 %v113
    %1604 = vmatprep.subr.mxu0 0.0
    %1605 = vmatpush1.msra.mxu0 0.0
    %1606 = vmatprep.subr.mxu0 0.0
    %1607 = vmatpush1.msra.mxu0 0.0
    %1608 = vmatprep.subr.mxu0 0.0
    %1609 = vmatpush1.msra.mxu0 0.0
    %1610 = vmatprep.subr.mxu0 0.0
    %1611 = vmatpush1.msra.mxu0 0.0
    %1612 = vmatprep.subr.mxu0 0.0
    %1613 = vmatpush1.msra.mxu0 0.0
    %1614 = vmatprep.subr.mxu0 0.0
    %1615 = vmatpush1.msra.mxu0 0.0
    %1616 = vmatprep.subr.mxu0 0.0
    %1617 = vmatpush1.msra.mxu0 0.0
    %1618 = vmatprep.subr.mxu0 0.0
    %1619 = vmatpush1.msra.mxu0 0.0
    %1620 = vmatprep.subr.mxu0 0.0
    %1621 = vmatpush1.msra.mxu0 0.0
    %1622 = vmatprep.subr.mxu0 0.0
    %1623 = vmatpush1.msra.mxu0 0.0
    %1624 = vmatprep.subr.mxu0 0.0
    %1625 = vmatpush1.msra.mxu0 0.0
    %1626 = vmatprep.subr.mxu0 0.0
    %1627 = vmatpush1.msra.mxu0 0.0
    %1628 = vmatprep.subr.mxu0 0.0
    %1629 = vmatpush1.msra.mxu0 0.0
    %1630 = vmatprep.subr.mxu0 0.0
    %1631 = vmatpush1.msra.mxu0 0.0
    %1632 = vmatprep.subr.mxu0 0.0
    %1633 = vmatpush1.msra.mxu0 0.0
    %1634 = vmatprep.subr.mxu0 0.0
    %1635 = vmatpush1.msra.mxu0 0.0
    %1636 = vmatprep.subr.mxu0 0.0
    %1637 = vmatpush1.msra.mxu0 0.0
    %1638 = vmatprep.subr.mxu0 0.0
    %1639 = vmatpush1.msra.mxu0 0.0
    %1640 = vmatprep.subr.mxu0 0.0
    %1641 = vmatpush1.msra.mxu0 0.0
    %1642 = vmatprep.subr.mxu0 0.0
    %1643 = vmatpush1.msra.mxu0 0.0
    %1644 = vmatprep.subr.mxu0 0.0
    %1645 = vmatpush1.msra.mxu0 0.0
    %1646 = vmatprep.subr.mxu0 0.0
    %1647 = vmatpush1.msra.mxu0 0.0
    %1648 = vmatprep.subr.mxu0 0.0
    %1649 = vmatpush1.msra.mxu0 0.0
    %1650 = vmatprep.subr.mxu0 0.0
    %1651 = vmatpush1.msra.mxu0 0.0
    %1652 = vmatprep.subr.mxu0 0.0
    %1653 = vmatpush1.msra.mxu0 0.0
    %1654 = vmatprep.subr.mxu0 0.0
    %1655 = vmatpush1.msra.mxu0 0.0
    %1656 = vmatprep.subr.mxu0 0.0
    %1657 = vmatpush1.msra.mxu0 0.0
    %1658 = vmatprep.subr.mxu0 0.0
    %1659 = vmatpush1.msra.mxu0 0.0
    %1660 = vmatprep.mubr.f32.mxu0 0.0
    %1661 = vmatmul.mubr.f32.gmra.mrb[0].mxu0 %v1594
    %v1662 = vpop.f32.mrb[0].mxu0
    %v1663 = vadd.f32 0.0, %v1662
    %v1664 = vpop.f32.mrb[0].mxu0
    %1665 = vdwg.mxu0
    %v1666 = vtanh.pop %v1663
    %v1667 = vsub.f32 1.0, %v1589
    %v1668 = vmul.f32 %v1667, 0.5
    %v1670 = vsub.f32 %v1666, %v1511
    %v1671 = vmul.f32 %v1668, %v1670
    %1673 = vrot.lane.b32.xlu0 %v1671, 32
    %v1674 = vpop.permute.xlu0 %1673
    %v1676 = vadd.f32 %v1172, %v1674
    %s1677 = smul.u32 %s1164, 8
    %s1678 = scalar_lea.vmem [#allocation5], %s1677
    %v1679 = vld [vmem:[%s1678] sm:$0xff]
    %1681 = vrot.lane.b32.xlu0 %v1676, 104
    %v1682 = vpop.permute.xlu0 %1681
    %v1684 = vsel %vm136, %v1679, %v1682
    %v1686 = vsel %vm144, %v1684, 0
    %1688 = vmatprep.subr.mxu0 0.0
    %1689 = vmatpush1.msra.mxu0 %v100
    %1690 = vmatprep.subr.mxu0 0.0
    %1691 = vmatpush1.msra.mxu0 %v101
    %1692 = vmatprep.subr.mxu0 0.0
    %1693 = vmatpush1.msra.mxu0 %v102
    %1694 = vmatprep.subr.mxu0 0.0
    %1695 = vmatpush1.msra.mxu0 %v103
    %1696 = vmatprep.subr.mxu0 0.0
    %1697 = vmatpush1.msra.mxu0 %v104
    %1698 = vmatprep.subr.mxu0 0.0
    %1699 = vmatpush1.msra.mxu0 0.0
    %1700 = vmatprep.subr.mxu0 0.0
    %1701 = vmatpush1.msra.mxu0 0.0
    %1702 = vmatprep.subr.mxu0 0.0
    %1703 = vmatpush1.msra.mxu0 0.0
    %1704 = vmatprep.subr.mxu0 0.0
    %1705 = vmatpush1.msra.mxu0 0.0
    %1706 = vmatprep.subr.mxu0 0.0
    %1707 = vmatpush1.msra.mxu0 0.0
    %1708 = vmatprep.subr.mxu0 0.0
    %1709 = vmatpush1.msra.mxu0 0.0
    %1710 = vmatprep.subr.mxu0 0.0
    %1711 = vmatpush1.msra.mxu0 0.0
    %1712 = vmatprep.subr.mxu0 0.0
    %1713 = vmatpush1.msra.mxu0 0.0
    %1714 = vmatprep.subr.mxu0 0.0
    %1715 = vmatpush1.msra.mxu0 0.0
    %1716 = vmatprep.subr.mxu0 0.0
    %1717 = vmatpush1.msra.mxu0 0.0
    %1718 = vmatprep.subr.mxu0 0.0
    %1719 = vmatpush1.msra.mxu0 0.0
    %1720 = vmatprep.subr.mxu0 0.0
    %1721 = vmatpush1.msra.mxu0 0.0
    %1722 = vmatprep.subr.mxu0 0.0
    %1723 = vmatpush1.msra.mxu0 0.0
    %1724 = vmatprep.subr.mxu0 0.0
    %1725 = vmatpush1.msra.mxu0 0.0
    %1726 = vmatprep.subr.mxu0 0.0
    %1727 = vmatpush1.msra.mxu0 0.0
    %1728 = vmatprep.subr.mxu0 0.0
    %1729 = vmatpush1.msra.mxu0 0.0
    %1730 = vmatprep.subr.mxu0 0.0
    %1731 = vmatpush1.msra.mxu0 0.0
    %1732 = vmatprep.subr.mxu0 0.0
    %1733 = vmatpush1.msra.mxu0 0.0
    %1734 = vmatprep.subr.mxu0 0.0
    %1735 = vmatpush1.msra.mxu0 0.0
    %1736 = vmatprep.subr.mxu0 0.0
    %1737 = vmatpush1.msra.mxu0 0.0
    %1738 = vmatprep.subr.mxu0 0.0
    %1739 = vmatpush1.msra.mxu0 0.0
    %1740 = vmatprep.subr.mxu0 0.0
    %1741 = vmatpush1.msra.mxu0 0.0
    %1742 = vmatprep.subr.mxu0 0.0
    %1743 = vmatpush1.msra.mxu0 0.0
    %1744 = vmatprep.subr.mxu0 0.0
    %1745 = vmatpush1.msra.mxu0 0.0
    %1746 = vmatprep.subr.mxu0 0.0
    %1747 = vmatpush1.msra.mxu0 0.0
    %1748 = vmatprep.subr.mxu0 0.0
    %1749 = vmatpush1.msra.mxu0 0.0
    %1750 = vmatprep.subr.mxu0 0.0
    %1751 = vmatpush1.msra.mxu0 0.0
    %1752 = vmatprep.mubr.f32.mxu0 0.0
    %1753 = vmatmul.mubr.f32.gmra.mrb[0].mxu0 %v1686
    %v1754 = vpop.f32.mrb[0].mxu0
    %v1755 = vadd.f32 %v142, %v1754
    %v1756 = vpop.f32.mrb[0].mxu0
    %1757 = vdwg.mxu0
    %v1758 = vxor.u32 %v1755, 2147483648
    %v1759 = vmul.f32 %v1758, 1.442695
    %v1760 = vpow.pop %v1759
    %v1761 = vadd.f32 %v1760, 1.0
    %v1762 = vrcp.pop %v1761
    %v1763 = vmul.f32 1.0, %v1762
    %1765 = vrot.lane.b32.xlu0 %v1755, 32
    %v1766 = vpop.permute.xlu0 %1765
    %v1768 = vmul.f32 %v1763, %v1766
    %1770 = vrot.lane.b32.xlu0 %v1768, 64
    %v1771 = vpop.permute.xlu0 %1770
    %v1773 = vadd.f32 %v1755, %v1771
    %v1774 = vtanh.pop %v1773
    %v1775 = vsub.f32 1.0, %v1763
    %1777 = vrot.lane.b32.xlu0 %v1774, 96
    %v1778 = vpop.permute.xlu0 %1777
    %v1780 = vmul.f32 %v1775, %v1778
    %v1781 = vmul.f32 %v1763, %v1676
    %v1782 = vadd.f32 %v1780, %v1781
    %vm1783 = vcmp.ne.f32.partialorder %v1679, -1.0
    %v1784 = vsel %vm1783, 1, 0
    %1785 = vset.pattern.permute.xlu0 7
    %1786 = vperm.xlu0 %1785, %v1784
    %v1787 = vpop.permute.xlu0 %1786
    %vm1788 = vcmp.eq.s32.totalorder %v1787, 1
    %v1789 = vsel %vm1788, %v1782, %v1676
    %1790 = vmatprep.subr.mxu0 0.0
    %1791 = vmatpush1.msra.mxu0 %v114
    %1792 = vmatprep.subr.mxu0 0.0
    %1793 = vmatpush1.msra.mxu0 %v115
    %1794 = vmatprep.subr.mxu0 0.0
    %1795 = vmatpush1.msra.mxu0 %v116
    %1796 = vmatprep.subr.mxu0 0.0
    %1797 = vmatpush1.msra.mxu0 %v117
    %1798 = vmatprep.subr.mxu0 0.0
    %1799 = vmatpush1.msra.mxu0 0.0
    %1800 = vmatprep.subr.mxu0 0.0
    %1801 = vmatpush1.msra.mxu0 0.0
    %1802 = vmatprep.subr.mxu0 0.0
    %1803 = vmatpush1.msra.mxu0 0.0
    %1804 = vmatprep.subr.mxu0 0.0
    %1805 = vmatpush1.msra.mxu0 0.0
    %1806 = vmatprep.subr.mxu0 0.0
    %1807 = vmatpush1.msra.mxu0 0.0
    %1808 = vmatprep.subr.mxu0 0.0
    %1809 = vmatpush1.msra.mxu0 0.0
    %1810 = vmatprep.subr.mxu0 0.0
    %1811 = vmatpush1.msra.mxu0 0.0
    %1812 = vmatprep.subr.mxu0 0.0
    %1813 = vmatpush1.msra.mxu0 0.0
    %1814 = vmatprep.subr.mxu0 0.0
    %1815 = vmatpush1.msra.mxu0 0.0
    %1816 = vmatprep.subr.mxu0 0.0
    %1817 = vmatpush1.msra.mxu0 0.0
    %1818 = vmatprep.subr.mxu0 0.0
    %1819 = vmatpush1.msra.mxu0 0.0
    %1820 = vmatprep.subr.mxu0 0.0
    %1821 = vmatpush1.msra.mxu0 0.0
    %1822 = vmatprep.subr.mxu0 0.0
    %1823 = vmatpush1.msra.mxu0 0.0
    %1824 = vmatprep.subr.mxu0 0.0
    %1825 = vmatpush1.msra.mxu0 0.0
    %1826 = vmatprep.subr.mxu0 0.0
    %1827 = vmatpush1.msra.mxu0 0.0
    %1828 = vmatprep.subr.mxu0 0.0
    %1829 = vmatpush1.msra.mxu0 0.0
    %1830 = vmatprep.subr.mxu0 0.0
    %1831 = vmatpush1.msra.mxu0 0.0
    %1832 = vmatprep.subr.mxu0 0.0
    %1833 = vmatpush1.msra.mxu0 0.0
    %1834 = vmatprep.subr.mxu0 0.0
    %1835 = vmatpush1.msra.mxu0 0.0
    %1836 = vmatprep.subr.mxu0 0.0
    %1837 = vmatpush1.msra.mxu0 0.0
    %1838 = vmatprep.subr.mxu0 0.0
    %1839 = vmatpush1.msra.mxu0 0.0
    %1840 = vmatprep.subr.mxu0 0.0
    %1841 = vmatpush1.msra.mxu0 0.0
    %1842 = vmatprep.subr.mxu0 0.0
    %1843 = vmatpush1.msra.mxu0 0.0
    %1844 = vmatprep.subr.mxu0 0.0
    %1845 = vmatpush1.msra.mxu0 0.0
    %1846 = vmatprep.subr.mxu0 0.0
    %1847 = vmatpush1.msra.mxu0 0.0
    %1848 = vmatprep.subr.mxu0 0.0
    %1849 = vmatpush1.msra.mxu0 0.0
    %1850 = vmatprep.subr.mxu0 0.0
    %1851 = vmatpush1.msra.mxu0 0.0
    %1852 = vmatprep.subr.mxu0 0.0
    %1853 = vmatpush1.msra.mxu0 0.0
    %1854 = vmatprep.mubr.f32.mxu0 0.0
    %1855 = vmatmul.mubr.f32.gmra.mrb[0].mxu0 %v1512
    %v1856 = vpop.f32.mrb[0].mxu0
    %v1857 = vadd.f32 %v879, %v1856
    %v1858 = vpop.f32.mrb[0].mxu0
    %1859 = vdwg.mxu0
    %v1860 = vsel %vm951, %v1857, -inf
    %1861 = vmax.xlane.f32.xlu0 %v1860
    %v1862 = vpop.xlane.xlu0 %1861
    %v1863 = vsub.f32 %v1857, %v1862
    %v1864 = vmul.f32 %v1863, 1.442695
    %v1865 = vpow.pop %v1864
    %v1866 = vsel %vm951, %v1865, 0.0
    %1867 = vadd.xlane.f32.xlu0 %v1866
    %v1868 = vpop.xlane.xlu0 %1867
    %v1869 = vlog2.pop %v1868
    %v1870 = vmul.f32 %v1869, 0.6931472
    %v1871 = vadd.f32 %v1870, %v1862
    %v1872 = vsub.f32 %v1857, %v1871
    %vm1873 = vcmp.eq.f32.partialorder %v1857, %v1862
    %v1874 = vsel %vm1873, %v966, 16
    %v1875 = vsel %vm951, %v1874, 2147483647
    %v1876 = vand.u32 %v1875, 65535
    %v1877 = vshra.s32 %v1875, 16
    %v1878 = vcvt.s32.f32 %v1876
    %v1879 = vcvt.s32.f32 %v1877
    %1880 = vmin.xlane.f32.xlu0 %v1879
    %v1881 = vpop.xlane.xlu0 %1880
    %vm1882 = vcmp.eq.f32.partialorder %v1879, %v1881
    %v1883 = vsel %vm1882, %v1878, inf
    %1884 = vmin.xlane.f32.xlu0 %v1883
    %v1885 = vpop.xlane.xlu0 %1884
    %v1886 = vcvt.f32.s32 %v1885
    %v1887 = vcvt.f32.s32 %v1881
    %v1888 = vshll.u32 %v1887, 16
    %v1889 = vadd.s32 %v1888, %v1886
    %vm1890 = vcmp.eq.s32.totalorder %v966, %v1889
    %v1891 = vsel %vm1890, 1, 0
    %v1892 = vcvt.s32.f32 %v1891
    %1894 = vrot.lane.b32.xlu0 %v1857, 112
    %v1895 = vpop.permute.xlu0 %1894
    %v1898 = vsel %vm951, %v1892, 0
    %1900 = vmatprep.subr.mxu0 0.0
    %1901 = vmatpush1.msra.mxu0 %v119
    %1902 = vmatprep.subr.mxu0 0.0
    %1903 = vmatpush1.msra.mxu0 %v120
    %1904 = vmatprep.subr.mxu0 0.0
    %1905 = vmatpush1.msra.mxu0 0.0
    %1906 = vmatprep.subr.mxu0 0.0
    %1907 = vmatpush1.msra.mxu0 0.0
    %1908 = vmatprep.subr.mxu0 0.0
    %1909 = vmatpush1.msra.mxu0 0.0
    %1910 = vmatprep.subr.mxu0 0.0
    %1911 = vmatpush1.msra.mxu0 0.0
    %1912 = vmatprep.subr.mxu0 0.0
    %1913 = vmatpush1.msra.mxu0 0.0
    %1914 = vmatprep.subr.mxu0 0.0
    %1915 = vmatpush1.msra.mxu0 0.0
    %1916 = vmatprep.subr.mxu0 0.0
    %1917 = vmatpush1.msra.mxu0 0.0
    %1918 = vmatprep.subr.mxu0 0.0
    %1919 = vmatpush1.msra.mxu0 0.0
    %1920 = vmatprep.subr.mxu0 0.0
    %1921 = vmatpush1.msra.mxu0 0.0
    %1922 = vmatprep.subr.mxu0 0.0
    %1923 = vmatpush1.msra.mxu0 0.0
    %1924 = vmatprep.subr.mxu0 0.0
    %1925 = vmatpush1.msra.mxu0 0.0
    %1926 = vmatprep.subr.mxu0 0.0
    %1927 = vmatpush1.msra.mxu0 0.0
    %1928 = vmatprep.subr.mxu0 0.0
    %1929 = vmatpush1.msra.mxu0 0.0
    %1930 = vmatprep.subr.mxu0 0.0
    %1931 = vmatpush1.msra.mxu0 0.0
    %1932 = vmatprep.subr.mxu0 0.0
    %1933 = vmatpush1.msra.mxu0 0.0
    %1934 = vmatprep.subr.mxu0 0.0
    %1935 = vmatpush1.msra.mxu0 0.0
    %1936 = vmatprep.subr.mxu0 0.0
    %1937 = vmatpush1.msra.mxu0 0.0
    %1938 = vmatprep.subr.mxu0 0.0
    %1939 = vmatpush1.msra.mxu0 0.0
    %1940 = vmatprep.subr.mxu0 0.0
    %1941 = vmatpush1.msra.mxu0 0.0
    %1942 = vmatprep.subr.mxu0 0.0
    %1943 = vmatpush1.msra.mxu0 0.0
    %1944 = vmatprep.subr.mxu0 0.0
    %1945 = vmatpush1.msra.mxu0 0.0
    %1946 = vmatprep.subr.mxu0 0.0
    %1947 = vmatpush1.msra.mxu0 0.0
    %1948 = vmatprep.subr.mxu0 0.0
    %1949 = vmatpush1.msra.mxu0 0.0
    %1950 = vmatprep.subr.mxu0 0.0
    %1951 = vmatpush1.msra.mxu0 0.0
    %1952 = vmatprep.subr.mxu0 0.0
    %1953 = vmatpush1.msra.mxu0 0.0
    %1954 = vmatprep.subr.mxu0 0.0
    %1955 = vmatpush1.msra.mxu0 0.0
    %1956 = vmatprep.subr.mxu0 0.0
    %1957 = vmatpush1.msra.mxu0 0.0
    %1958 = vmatprep.subr.mxu0 0.0
    %1959 = vmatpush1.msra.mxu0 0.0
    %1960 = vmatprep.subr.mxu0 0.0
    %1961 = vmatpush1.msra.mxu0 0.0
    %1962 = vmatprep.subr.mxu0 0.0
    %1963 = vmatpush1.msra.mxu0 0.0
    %1964 = vmatprep.mubr.f32.mxu0 0.0
    %1965 = vmatmul.mubr.f32.gmra.mrb[0].mxu0 %v1898
    %v1966 = vpop.f32.mrb[0].mxu0
    %v1967 = vadd.f32 %v1895, %v1966
    %v1968 = vpop.f32.mrb[0].mxu0
    %1969 = vdwg.mxu0
    %v1970 = vmax.f32 %v1967, 0.0
    %v1972 = vsel %vm596, %v1970, 0
    %1974 = vmatprep.subr.mxu0 0.0
    %1975 = vmatpush1.msra.mxu0 %v121
    %1976 = vmatprep.subr.mxu0 0.0
    %1977 = vmatpush1.msra.mxu0 %v122
    %1978 = vmatprep.subr.mxu0 0.0
    %1979 = vmatpush1.msra.mxu0 %v123
    %1980 = vmatprep.subr.mxu0 0.0
    %1981 = vmatpush1.msra.mxu0 %v124
    %1982 = vmatprep.subr.mxu0 0.0
    %1983 = vmatpush1.msra.mxu0 0.0
    %1984 = vmatprep.subr.mxu0 0.0
    %1985 = vmatpush1.msra.mxu0 0.0
    %1986 = vmatprep.subr.mxu0 0.0
    %1987 = vmatpush1.msra.mxu0 0.0
    %1988 = vmatprep.subr.mxu0 0.0
    %1989 = vmatpush1.msra.mxu0 0.0
    %1990 = vmatprep.subr.mxu0 0.0
    %1991 = vmatpush1.msra.mxu0 0.0
    %1992 = vmatprep.subr.mxu0 0.0
    %1993 = vmatpush1.msra.mxu0 0.0
    %1994 = vmatprep.subr.mxu0 0.0
    %1995 = vmatpush1.msra.mxu0 0.0
    %1996 = vmatprep.subr.mxu0 0.0
    %1997 = vmatpush1.msra.mxu0 0.0
    %1998 = vmatprep.subr.mxu0 0.0
    %1999 = vmatpush1.msra.mxu0 0.0
    %2000 = vmatprep.subr.mxu0 0.0
    %2001 = vmatpush1.msra.mxu0 0.0
    %2002 = vmatprep.subr.mxu0 0.0
    %2003 = vmatpush1.msra.mxu0 0.0
    %2004 = vmatprep.subr.mxu0 0.0
    %2005 = vmatpush1.msra.mxu0 0.0
    %2006 = vmatprep.subr.mxu0 0.0
    %2007 = vmatpush1.msra.mxu0 0.0
    %2008 = vmatprep.subr.mxu0 0.0
    %2009 = vmatpush1.msra.mxu0 0.0
    %2010 = vmatprep.subr.mxu0 0.0
    %2011 = vmatpush1.msra.mxu0 0.0
    %2012 = vmatprep.subr.mxu0 0.0
    %2013 = vmatpush1.msra.mxu0 0.0
    %2014 = vmatprep.subr.mxu0 0.0
    %2015 = vmatpush1.msra.mxu0 0.0
    %2016 = vmatprep.subr.mxu0 0.0
    %2017 = vmatpush1.msra.mxu0 0.0
    %2018 = vmatprep.subr.mxu0 0.0
    %2019 = vmatpush1.msra.mxu0 0.0
    %2020 = vmatprep.subr.mxu0 0.0
    %2021 = vmatpush1.msra.mxu0 0.0
    %2022 = vmatprep.subr.mxu0 0.0
    %2023 = vmatpush1.msra.mxu0 0.0
    %2024 = vmatprep.subr.mxu0 0.0
    %2025 = vmatpush1.msra.mxu0 0.0
    %2026 = vmatprep.subr.mxu0 0.0
    %2027 = vmatpush1.msra.mxu0 0.0
    %2028 = vmatprep.subr.mxu0 0.0
    %2029 = vmatpush1.msra.mxu0 0.0
    %2030 = vmatprep.subr.mxu0 0.0
    %2031 = vmatpush1.msra.mxu0 0.0
    %2032 = vmatprep.subr.mxu0 0.0
    %2033 = vmatpush1.msra.mxu0 0.0
    %2034 = vmatprep.subr.mxu0 0.0
    %2035 = vmatpush1.msra.mxu0 0.0
    %2036 = vmatprep.subr.mxu0 0.0
    %2037 = vmatpush1.msra.mxu0 0.0
    %2038 = vmatprep.mubr.f32.mxu0 0.0
    %2039 = vmatmul.mubr.f32.gmra.mrb[0].mxu0 %v1972
    %v2040 = vpop.f32.mrb[0].mxu0
    %v2041 = vadd.f32 %v1069, %v2040
    %v2042 = vpop.f32.mrb[0].mxu0
    %2043 = vdwg.mxu0
    %v2044 = vxor.u32 %v2041, 2147483648
    %v2045 = vmul.f32 %v2044, 1.442695
    %v2046 = vpow.pop %v2045
    %v2047 = vadd.f32 %v2046, 1.0
    %v2048 = vrcp.pop %v2047
    %v2049 = vmul.f32 1.0, %v2048
    %2051 = vrot.lane.b32.xlu0 %v2049, 16
    %v2052 = vpop.permute.xlu0 %2051
    %v2054 = vsel %vm951, %v1872, %v2052
    %v2055 = vstv %s1163
    %vm2056 = vcmp.lt.s32.totalorder %v244, %v2055
    %v2057 = vsel %vm2056, 1, 0
    %vm2058 = vcmp.eq.s32.totalorder %v2057, 1
    %v2059 = vsel %vm2058, %v2054, 0.0
    %s2060 = scalar_lea.vmem [#allocation13], %s1677
    %2061 = vst.msk [vmem:[%s2060] sm:$0xff] %vm126, %v2059
    %s2062 = sld [smem:[#allocation3 + $0x2]]
    %s2063 = sld [smem:[#allocation3 + $0x5]]
    %s2064 = sld [smem:[#allocation3 + $0x8]]
    %s2065 = ssub.s32 %s2062, 1
    // While loop
    $region72: #{tpu_custom_call.1} parent=1 // loop_pre_header
      _
    $region73: #{tpu_custom_call.1} parent=1 // loop_header
      %s2067 = sphi 0, %s2069
      %p2068 = scmp.ge.s32.totalorder %s2067, %s2065
      %v2072 = vphi %v1789, %v2408
    $region74: #{tpu_custom_call.1} parent=1 // loop_header_branch
      %2071 = sbr.rel (%p2068) target = $region78
    $region75: #{tpu_custom_call.1} parent=1 // loop_body
      %2074 = vrot.lane.b32.xlu0 %v2072, 96
      %v2075 = vpop.permute.xlu0 %2074
      %v2076 = vsel %vm596, %v2075, 0
      %2078 = vmatprep.subr.mxu0 0.0
      %2079 = vmatpush1.msra.mxu0 %v106
      %2080 = vmatprep.subr.mxu0 0.0
      %2081 = vmatpush1.msra.mxu0 %v107
      %2082 = vmatprep.subr.mxu0 0.0
      %2083 = vmatpush1.msra.mxu0 %v108
      %2084 = vmatprep.subr.mxu0 0.0
      %2085 = vmatpush1.msra.mxu0 %v109
      %2086 = vmatprep.subr.mxu0 0.0
      %2087 = vmatpush1.msra.mxu0 0.0
      %2088 = vmatprep.subr.mxu0 0.0
      %2089 = vmatpush1.msra.mxu0 0.0
      %2090 = vmatprep.subr.mxu0 0.0
      %2091 = vmatpush1.msra.mxu0 0.0
      %2092 = vmatprep.subr.mxu0 0.0
      %2093 = vmatpush1.msra.mxu0 0.0
      %2094 = vmatprep.subr.mxu0 0.0
      %2095 = vmatpush1.msra.mxu0 0.0
      %2096 = vmatprep.subr.mxu0 0.0
      %2097 = vmatpush1.msra.mxu0 0.0
      %2098 = vmatprep.subr.mxu0 0.0
      %2099 = vmatpush1.msra.mxu0 0.0
      %2100 = vmatprep.subr.mxu0 0.0
      %2101 = vmatpush1.msra.mxu0 0.0
      %2102 = vmatprep.subr.mxu0 0.0
      %2103 = vmatpush1.msra.mxu0 0.0
      %2104 = vmatprep.subr.mxu0 0.0
      %2105 = vmatpush1.msra.mxu0 0.0
      %2106 = vmatprep.subr.mxu0 0.0
      %2107 = vmatpush1.msra.mxu0 0.0
      %2108 = vmatprep.subr.mxu0 0.0
      %2109 = vmatpush1.msra.mxu0 0.0
      %2110 = vmatprep.subr.mxu0 0.0
      %2111 = vmatpush1.msra.mxu0 0.0
      %2112 = vmatprep.subr.mxu0 0.0
      %2113 = vmatpush1.msra.mxu0 0.0
      %2114 = vmatprep.subr.mxu0 0.0
      %2115 = vmatpush1.msra.mxu0 0.0
      %2116 = vmatprep.subr.mxu0 0.0
      %2117 = vmatpush1.msra.mxu0 0.0
      %2118 = vmatprep.subr.mxu0 0.0
      %2119 = vmatpush1.msra.mxu0 0.0
      %2120 = vmatprep.subr.mxu0 0.0
      %2121 = vmatpush1.msra.mxu0 0.0
      %2122 = vmatprep.subr.mxu0 0.0
      %2123 = vmatpush1.msra.mxu0 0.0
      %2124 = vmatprep.subr.mxu0 0.0
      %2125 = vmatpush1.msra.mxu0 0.0
      %2126 = vmatprep.subr.mxu0 0.0
      %2127 = vmatpush1.msra.mxu0 0.0
      %2128 = vmatprep.subr.mxu0 0.0
      %2129 = vmatpush1.msra.mxu0 0.0
      %2130 = vmatprep.subr.mxu0 0.0
      %2131 = vmatpush1.msra.mxu0 0.0
      %2132 = vmatprep.subr.mxu0 0.0
      %2133 = vmatpush1.msra.mxu0 0.0
      %2134 = vmatprep.subr.mxu0 0.0
      %2135 = vmatpush1.msra.mxu0 0.0
      %2136 = vmatprep.subr.mxu0 0.0
      %2137 = vmatpush1.msra.mxu0 0.0
      %2138 = vmatprep.subr.mxu0 0.0
      %2139 = vmatpush1.msra.mxu0 0.0
      %2140 = vmatprep.subr.mxu0 0.0
      %2141 = vmatpush1.msra.mxu0 0.0
      %2142 = vmatprep.mubr.f32.mxu0 0.0
      %2143 = vmatmul.mubr.f32.gmra.mrb[0].mxu0 %v2076
      %v2144 = vpop.f32.mrb[0].mxu0
      %v2145 = vadd.f32 0.0, %v2144
      %v2146 = vpop.f32.mrb[0].mxu0
      %2147 = vdwg.mxu0
      %v2148 = vxor.u32 %v2145, 2147483648
      %v2149 = vmul.f32 %v2148, 1.442695
      %v2150 = vpow.pop %v2149
      %v2151 = vadd.f32 %v2150, 1.0
      %v2152 = vrcp.pop %v2151
      %v2153 = vmul.f32 1.0, %v2152
      %v2154 = vmul.f32 %v2153, %v2072
      %2156 = vrot.lane.b32.xlu0 %v2154, 96
      %v2157 = vpop.permute.xlu0 %2156
      %v2158 = vsel %vm596, %v2157, 0
      %2160 = vmatprep.subr.mxu0 0.0
      %2161 = vmatpush1.msra.mxu0 %v110
      %2162 = vmatprep.subr.mxu0 0.0
      %2163 = vmatpush1.msra.mxu0 %v111
      %2164 = vmatprep.subr.mxu0 0.0
      %2165 = vmatpush1.msra.mxu0 %v112
      %2166 = vmatprep.subr.mxu0 0.0
      %2167 = vmatpush1.msra.mxu0 %v113
      %2168 = vmatprep.subr.mxu0 0.0
      %2169 = vmatpush1.msra.mxu0 0.0
      %2170 = vmatprep.subr.mxu0 0.0
      %2171 = vmatpush1.msra.mxu0 0.0
      %2172 = vmatprep.subr.mxu0 0.0
      %2173 = vmatpush1.msra.mxu0 0.0
      %2174 = vmatprep.subr.mxu0 0.0
      %2175 = vmatpush1.msra.mxu0 0.0
      %2176 = vmatprep.subr.mxu0 0.0
      %2177 = vmatpush1.msra.mxu0 0.0
      %2178 = vmatprep.subr.mxu0 0.0
      %2179 = vmatpush1.msra.mxu0 0.0
      %2180 = vmatprep.subr.mxu0 0.0
      %2181 = vmatpush1.msra.mxu0 0.0
      %2182 = vmatprep.subr.mxu0 0.0
      %2183 = vmatpush1.msra.mxu0 0.0
      %2184 = vmatprep.subr.mxu0 0.0
      %2185 = vmatpush1.msra.mxu0 0.0
      %2186 = vmatprep.subr.mxu0 0.0
      %2187 = vmatpush1.msra.mxu0 0.0
      %2188 = vmatprep.subr.mxu0 0.0
      %2189 = vmatpush1.msra.mxu0 0.0
      %2190 = vmatprep.subr.mxu0 0.0
      %2191 = vmatpush1.msra.mxu0 0.0
      %2192 = vmatprep.subr.mxu0 0.0
      %2193 = vmatpush1.msra.mxu0 0.0
      %2194 = vmatprep.subr.mxu0 0.0
      %2195 = vmatpush1.msra.mxu0 0.0
      %2196 = vmatprep.subr.mxu0 0.0
      %2197 = vmatpush1.msra.mxu0 0.0
      %2198 = vmatprep.subr.mxu0 0.0
      %2199 = vmatpush1.msra.mxu0 0.0
      %2200 = vmatprep.subr.mxu0 0.0
      %2201 = vmatpush1.msra.mxu0 0.0
      %2202 = vmatprep.subr.mxu0 0.0
      %2203 = vmatpush1.msra.mxu0 0.0
      %2204 = vmatprep.subr.mxu0 0.0
      %2205 = vmatpush1.msra.mxu0 0.0
      %2206 = vmatprep.subr.mxu0 0.0
      %2207 = vmatpush1.msra.mxu0 0.0
      %2208 = vmatprep.subr.mxu0 0.0
      %2209 = vmatpush1.msra.mxu0 0.0
      %2210 = vmatprep.subr.mxu0 0.0
      %2211 = vmatpush1.msra.mxu0 0.0
      %2212 = vmatprep.subr.mxu0 0.0
      %2213 = vmatpush1.msra.mxu0 0.0
      %2214 = vmatprep.subr.mxu0 0.0
      %2215 = vmatpush1.msra.mxu0 0.0
      %2216 = vmatprep.subr.mxu0 0.0
      %2217 = vmatpush1.msra.mxu0 0.0
      %2218 = vmatprep.subr.mxu0 0.0
      %2219 = vmatpush1.msra.mxu0 0.0
      %2220 = vmatprep.subr.mxu0 0.0
      %2221 = vmatpush1.msra.mxu0 0.0
      %2222 = vmatprep.subr.mxu0 0.0
      %2223 = vmatpush1.msra.mxu0 0.0
      %2224 = vmatprep.mubr.f32.mxu0 0.0
      %2225 = vmatmul.mubr.f32.gmra.mrb[0].mxu0 %v2158
      %v2226 = vpop.f32.mrb[0].mxu0
      %v2227 = vadd.f32 0.0, %v2226
      %v2228 = vpop.f32.mrb[0].mxu0
      %2229 = vdwg.mxu0
      %v2230 = vtanh.pop %v2227
      %v2231 = vsub.f32 1.0, %v2153
      %v2232 = vmul.f32 %v2231, 0.5
      %v2234 = vsub.f32 %v2230, %v2075
      %v2235 = vmul.f32 %v2232, %v2234
      %2237 = vrot.lane.b32.xlu0 %v2235, 32
      %v2238 = vpop.permute.xlu0 %2237
      %v2240 = vadd.f32 %v2072, %v2238
      %2242 = vrot.lane.b32.xlu0 %v2240, 96
      %v2243 = vpop.permute.xlu0 %2242
      %v2244 = vsel %vm596, %v2243, 0
      %2246 = vmatprep.subr.mxu0 0.0
      %2247 = vmatpush1.msra.mxu0 %v106
      %2248 = vmatprep.subr.mxu0 0.0
      %2249 = vmatpush1.msra.mxu0 %v107
      %2250 = vmatprep.subr.mxu0 0.0
      %2251 = vmatpush1.msra.mxu0 %v108
      %2252 = vmatprep.subr.mxu0 0.0
      %2253 = vmatpush1.msra.mxu0 %v109
      %2254 = vmatprep.subr.mxu0 0.0
      %2255 = vmatpush1.msra.mxu0 0.0
      %2256 = vmatprep.subr.mxu0 0.0
      %2257 = vmatpush1.msra.mxu0 0.0
      %2258 = vmatprep.subr.mxu0 0.0
      %2259 = vmatpush1.msra.mxu0 0.0
      %2260 = vmatprep.subr.mxu0 0.0
      %2261 = vmatpush1.msra.mxu0 0.0
      %2262 = vmatprep.subr.mxu0 0.0
      %2263 = vmatpush1.msra.mxu0 0.0
      %2264 = vmatprep.subr.mxu0 0.0
      %2265 = vmatpush1.msra.mxu0 0.0
      %2266 = vmatprep.subr.mxu0 0.0
      %2267 = vmatpush1.msra.mxu0 0.0
      %2268 = vmatprep.subr.mxu0 0.0
      %2269 = vmatpush1.msra.mxu0 0.0
      %2270 = vmatprep.subr.mxu0 0.0
      %2271 = vmatpush1.msra.mxu0 0.0
      %2272 = vmatprep.subr.mxu0 0.0
      %2273 = vmatpush1.msra.mxu0 0.0
      %2274 = vmatprep.subr.mxu0 0.0
      %2275 = vmatpush1.msra.mxu0 0.0
      %2276 = vmatprep.subr.mxu0 0.0
      %2277 = vmatpush1.msra.mxu0 0.0
      %2278 = vmatprep.subr.mxu0 0.0
      %2279 = vmatpush1.msra.mxu0 0.0
      %2280 = vmatprep.subr.mxu0 0.0
      %2281 = vmatpush1.msra.mxu0 0.0
      %2282 = vmatprep.subr.mxu0 0.0
      %2283 = vmatpush1.msra.mxu0 0.0
      %2284 = vmatprep.subr.mxu0 0.0
      %2285 = vmatpush1.msra.mxu0 0.0
      %2286 = vmatprep.subr.mxu0 0.0
      %2287 = vmatpush1.msra.mxu0 0.0
      %2288 = vmatprep.subr.mxu0 0.0
      %2289 = vmatpush1.msra.mxu0 0.0
      %2290 = vmatprep.subr.mxu0 0.0
      %2291 = vmatpush1.msra.mxu0 0.0
      %2292 = vmatprep.subr.mxu0 0.0
      %2293 = vmatpush1.msra.mxu0 0.0
      %2294 = vmatprep.subr.mxu0 0.0
      %2295 = vmatpush1.msra.mxu0 0.0
      %2296 = vmatprep.subr.mxu0 0.0
      %2297 = vmatpush1.msra.mxu0 0.0
      %2298 = vmatprep.subr.mxu0 0.0
      %2299 = vmatpush1.msra.mxu0 0.0
      %2300 = vmatprep.subr.mxu0 0.0
      %2301 = vmatpush1.msra.mxu0 0.0
      %2302 = vmatprep.subr.mxu0 0.0
      %2303 = vmatpush1.msra.mxu0 0.0
      %2304 = vmatprep.subr.mxu0 0.0
      %2305 = vmatpush1.msra.mxu0 0.0
      %2306 = vmatprep.subr.mxu0 0.0
      %2307 = vmatpush1.msra.mxu0 0.0
      %2308 = vmatprep.subr.mxu0 0.0
      %2309 = vmatpush1.msra.mxu0 0.0
      %2310 = vmatprep.mubr.f32.mxu0 0.0
      %2311 = vmatmul.mubr.f32.gmra.mrb[0].mxu0 %v2244
      %v2312 = vpop.f32.mrb[0].mxu0
      %v2313 = vadd.f32 0.0, %v2312
      %v2314 = vpop.f32.mrb[0].mxu0
      %2315 = vdwg.mxu0
      %v2316 = vxor.u32 %v2313, 2147483648
      %v2317 = vmul.f32 %v2316, 1.442695
      %v2318 = vpow.pop %v2317
      %v2319 = vadd.f32 %v2318, 1.0
      %v2320 = vrcp.pop %v2319
      %v2321 = vmul.f32 1.0, %v2320
      %v2322 = vmul.f32 %v2321, %v2240
      %2324 = vrot.lane.b32.xlu0 %v2322, 96
      %v2325 = vpop.permute.xlu0 %2324
      %v2326 = vsel %vm596, %v2325, 0
      %2328 = vmatprep.subr.mxu0 0.0
      %2329 = vmatpush1.msra.mxu0 %v110
      %2330 = vmatprep.subr.mxu0 0.0
      %2331 = vmatpush1.msra.mxu0 %v111
      %2332 = vmatprep.subr.mxu0 0.0
      %2333 = vmatpush1.msra.mxu0 %v112
      %2334 = vmatprep.subr.mxu0 0.0
      %2335 = vmatpush1.msra.mxu0 %v113
      %2336 = vmatprep.subr.mxu0 0.0
      %2337 = vmatpush1.msra.mxu0 0.0
      %2338 = vmatprep.subr.mxu0 0.0
      %2339 = vmatpush1.msra.mxu0 0.0
      %2340 = vmatprep.subr.mxu0 0.0
      %2341 = vmatpush1.msra.mxu0 0.0
      %2342 = vmatprep.subr.mxu0 0.0
      %2343 = vmatpush1.msra.mxu0 0.0
      %2344 = vmatprep.subr.mxu0 0.0
      %2345 = vmatpush1.msra.mxu0 0.0
      %2346 = vmatprep.subr.mxu0 0.0
      %2347 = vmatpush1.msra.mxu0 0.0
      %2348 = vmatprep.subr.mxu0 0.0
      %2349 = vmatpush1.msra.mxu0 0.0
      %2350 = vmatprep.subr.mxu0 0.0
      %2351 = vmatpush1.msra.mxu0 0.0
      %2352 = vmatprep.subr.mxu0 0.0
      %2353 = vmatpush1.msra.mxu0 0.0
      %2354 = vmatprep.subr.mxu0 0.0
      %2355 = vmatpush1.msra.mxu0 0.0
      %2356 = vmatprep.subr.mxu0 0.0
      %2357 = vmatpush1.msra.mxu0 0.0
      %2358 = vmatprep.subr.mxu0 0.0
      %2359 = vmatpush1.msra.mxu0 0.0
      %2360 = vmatprep.subr.mxu0 0.0
      %2361 = vmatpush1.msra.mxu0 0.0
      %2362 = vmatprep.subr.mxu0 0.0
      %2363 = vmatpush1.msra.mxu0 0.0
      %2364 = vmatprep.subr.mxu0 0.0
      %2365 = vmatpush1.msra.mxu0 0.0
      %2366 = vmatprep.subr.mxu0 0.0
      %2367 = vmatpush1.msra.mxu0 0.0
      %2368 = vmatprep.subr.mxu0 0.0
      %2369 = vmatpush1.msra.mxu0 0.0
      %2370 = vmatprep.subr.mxu0 0.0
      %2371 = vmatpush1.msra.mxu0 0.0
      %2372 = vmatprep.subr.mxu0 0.0
      %2373 = vmatpush1.msra.mxu0 0.0
      %2374 = vmatprep.subr.mxu0 0.0
      %2375 = vmatpush1.msra.mxu0 0.0
      %2376 = vmatprep.subr.mxu0 0.0
      %2377 = vmatpush1.msra.mxu0 0.0
      %2378 = vmatprep.subr.mxu0 0.0
      %2379 = vmatpush1.msra.mxu0 0.0
      %2380 = vmatprep.subr.mxu0 0.0
      %2381 = vmatpush1.msra.mxu0 0.0
      %2382 = vmatprep.subr.mxu0 0.0
      %2383 = vmatpush1.msra.mxu0 0.0
      %2384 = vmatprep.subr.mxu0 0.0
      %2385 = vmatpush1.msra.mxu0 0.0
      %2386 = vmatprep.subr.mxu0 0.0
      %2387 = vmatpush1.msra.mxu0 0.0
      %2388 = vmatprep.subr.mxu0 0.0
      %2389 = vmatpush1.msra.mxu0 0.0
      %2390 = vmatprep.subr.mxu0 0.0
      %2391 = vmatpush1.msra.mxu0 0.0
      %2392 = vmatprep.mubr.f32.mxu0 0.0
      %2393 = vmatmul.mubr.f32.gmra.mrb[0].mxu0 %v2326
      %v2394 = vpop.f32.mrb[0].mxu0
      %v2395 = vadd.f32 0.0, %v2394
      %v2396 = vpop.f32.mrb[0].mxu0
      %2397 = vdwg.mxu0
      %v2398 = vtanh.pop %v2395
      %v2399 = vsub.f32 1.0, %v2321
      %v2400 = vmul.f32 %v2399, 0.5
      %v2402 = vsub.f32 %v2398, %v2243
      %v2403 = vmul.f32 %v2400, %v2402
      %2405 = vrot.lane.b32.xlu0 %v2403, 32
      %v2406 = vpop.permute.xlu0 %2405
      %v2408 = vadd.f32 %v2240, %v2406
    $region76: #{tpu_custom_call.1} parent=1 // loop_footer
      %s2069 = sadd.s32 %s2067, 1
    $region77: #{tpu_custom_call.1} parent=1 // loop_footer_branch
      %2066 = sbr.rel target = $region73
    $region78: #{tpu_custom_call.1} parent=1 // loop_exit
      _
    %2410 = vrot.lane.b32.xlu0 %v2072, 96
    %v2411 = vpop.permute.xlu0 %2410
    %v2412 = vsel %vm596, %v2411, 0
    %2414 = vmatprep.subr.mxu0 0.0
    %2415 = vmatpush1.msra.mxu0 %v106
    %2416 = vmatprep.subr.mxu0 0.0
    %2417 = vmatpush1.msra.mxu0 %v107
    %2418 = vmatprep.subr.mxu0 0.0
    %2419 = vmatpush1.msra.mxu0 %v108
    %2420 = vmatprep.subr.mxu0 0.0
    %2421 = vmatpush1.msra.mxu0 %v109
    %2422 = vmatprep.subr.mxu0 0.0
    %2423 = vmatpush1.msra.mxu0 0.0
    %2424 = vmatprep.subr.mxu0 0.0
    %2425 = vmatpush1.msra.mxu0 0.0
    %2426 = vmatprep.subr.mxu0 0.0
    %2427 = vmatpush1.msra.mxu0 0.0
    %2428 = vmatprep.subr.mxu0 0.0
    %2429 = vmatpush1.msra.mxu0 0.0
    %2430 = vmatprep.subr.mxu0 0.0
    %2431 = vmatpush1.msra.mxu0 0.0
    %2432 = vmatprep.subr.mxu0 0.0
    %2433 = vmatpush1.msra.mxu0 0.0
    %2434 = vmatprep.subr.mxu0 0.0
    %2435 = vmatpush1.msra.mxu0 0.0
    %2436 = vmatprep.subr.mxu0 0.0
    %2437 = vmatpush1.msra.mxu0 0.0
    %2438 = vmatprep.subr.mxu0 0.0
    %2439 = vmatpush1.msra.mxu0 0.0
    %2440 = vmatprep.subr.mxu0 0.0
    %2441 = vmatpush1.msra.mxu0 0.0
    %2442 = vmatprep.subr.mxu0 0.0
    %2443 = vmatpush1.msra.mxu0 0.0
    %2444 = vmatprep.subr.mxu0 0.0
    %2445 = vmatpush1.msra.mxu0 0.0
    %2446 = vmatprep.subr.mxu0 0.0
    %2447 = vmatpush1.msra.mxu0 0.0
    %2448 = vmatprep.subr.mxu0 0.0
    %2449 = vmatpush1.msra.mxu0 0.0
    %2450 = vmatprep.subr.mxu0 0.0
    %2451 = vmatpush1.msra.mxu0 0.0
    %2452 = vmatprep.subr.mxu0 0.0
    %2453 = vmatpush1.msra.mxu0 0.0
    %2454 = vmatprep.subr.mxu0 0.0
    %2455 = vmatpush1.msra.mxu0 0.0
    %2456 = vmatprep.subr.mxu0 0.0
    %2457 = vmatpush1.msra.mxu0 0.0
    %2458 = vmatprep.subr.mxu0 0.0
    %2459 = vmatpush1.msra.mxu0 0.0
    %2460 = vmatprep.subr.mxu0 0.0
    %2461 = vmatpush1.msra.mxu0 0.0
    %2462 = vmatprep.subr.mxu0 0.0
    %2463 = vmatpush1.msra.mxu0 0.0
    %2464 = vmatprep.subr.mxu0 0.0
    %2465 = vmatpush1.msra.mxu0 0.0
    %2466 = vmatprep.subr.mxu0 0.0
    %2467 = vmatpush1.msra.mxu0 0.0
    %2468 = vmatprep.subr.mxu0 0.0
    %2469 = vmatpush1.msra.mxu0 0.0
    %2470 = vmatprep.subr.mxu0 0.0
    %2471 = vmatpush1.msra.mxu0 0.0
    %2472 = vmatprep.subr.mxu0 0.0
    %2473 = vmatpush1.msra.mxu0 0.0
    %2474 = vmatprep.subr.mxu0 0.0
    %2475 = vmatpush1.msra.mxu0 0.0
    %2476 = vmatprep.subr.mxu0 0.0
    %2477 = vmatpush1.msra.mxu0 0.0
    %2478 = vmatprep.mubr.f32.mxu0 0.0
    %2479 = vmatmul.mubr.f32.gmra.mrb[0].mxu0 %v2412
    %v2480 = vpop.f32.mrb[0].mxu0
    %v2481 = vadd.f32 0.0, %v2480
    %v2482 = vpop.f32.mrb[0].mxu0
    %2483 = vdwg.mxu0
    %v2484 = vxor.u32 %v2481, 2147483648
    %v2485 = vmul.f32 %v2484, 1.442695
    %v2486 = vpow.pop %v2485
    %v2487 = vadd.f32 %v2486, 1.0
    %v2488 = vrcp.pop %v2487
    %v2489 = vmul.f32 1.0, %v2488
    %v2490 = vmul.f32 %v2489, %v2072
    %2492 = vrot.lane.b32.xlu0 %v2490, 96
    %v2493 = vpop.permute.xlu0 %2492
    %v2494 = vsel %vm596, %v2493, 0
    %2496 = vmatprep.subr.mxu0 0.0
    %2497 = vmatpush1.msra.mxu0 %v110
    %2498 = vmatprep.subr.mxu0 0.0
    %2499 = vmatpush1.msra.mxu0 %v111
    %2500 = vmatprep.subr.mxu0 0.0
    %2501 = vmatpush1.msra.mxu0 %v112
    %2502 = vmatprep.subr.mxu0 0.0
    %2503 = vmatpush1.msra.mxu0 %v113
    %2504 = vmatprep.subr.mxu0 0.0
    %2505 = vmatpush1.msra.mxu0 0.0
    %2506 = vmatprep.subr.mxu0 0.0
    %2507 = vmatpush1.msra.mxu0 0.0
    %2508 = vmatprep.subr.mxu0 0.0
    %2509 = vmatpush1.msra.mxu0 0.0
    %2510 = vmatprep.subr.mxu0 0.0
    %2511 = vmatpush1.msra.mxu0 0.0
    %2512 = vmatprep.subr.mxu0 0.0
    %2513 = vmatpush1.msra.mxu0 0.0
    %2514 = vmatprep.subr.mxu0 0.0
    %2515 = vmatpush1.msra.mxu0 0.0
    %2516 = vmatprep.subr.mxu0 0.0
    %2517 = vmatpush1.msra.mxu0 0.0
    %2518 = vmatprep.subr.mxu0 0.0
    %2519 = vmatpush1.msra.mxu0 0.0
    %2520 = vmatprep.subr.mxu0 0.0
    %2521 = vmatpush1.msra.mxu0 0.0
    %2522 = vmatprep.subr.mxu0 0.0
    %2523 = vmatpush1.msra.mxu0 0.0
    %2524 = vmatprep.subr.mxu0 0.0
    %2525 = vmatpush1.msra.mxu0 0.0
    %2526 = vmatprep.subr.mxu0 0.0
    %2527 = vmatpush1.msra.mxu0 0.0
    %2528 = vmatprep.subr.mxu0 0.0
    %2529 = vmatpush1.msra.mxu0 0.0
    %2530 = vmatprep.subr.mxu0 0.0
    %2531 = vmatpush1.msra.mxu0 0.0
    %2532 = vmatprep.subr.mxu0 0.0
    %2533 = vmatpush1.msra.mxu0 0.0
    %2534 = vmatprep.subr.mxu0 0.0
    %2535 = vmatpush1.msra.mxu0 0.0
    %2536 = vmatprep.subr.mxu0 0.0
    %2537 = vmatpush1.msra.mxu0 0.0
    %2538 = vmatprep.subr.mxu0 0.0
    %2539 = vmatpush1.msra.mxu0 0.0
    %2540 = vmatprep.subr.mxu0 0.0
    %2541 = vmatpush1.msra.mxu0 0.0
    %2542 = vmatprep.subr.mxu0 0.0
    %2543 = vmatpush1.msra.mxu0 0.0
    %2544 = vmatprep.subr.mxu0 0.0
    %2545 = vmatpush1.msra.mxu0 0.0
    %2546 = vmatprep.subr.mxu0 0.0
    %2547 = vmatpush1.msra.mxu0 0.0
    %2548 = vmatprep.subr.mxu0 0.0
    %2549 = vmatpush1.msra.mxu0 0.0
    %2550 = vmatprep.subr.mxu0 0.0
    %2551 = vmatpush1.msra.mxu0 0.0
    %2552 = vmatprep.subr.mxu0 0.0
    %2553 = vmatpush1.msra.mxu0 0.0
    %2554 = vmatprep.subr.mxu0 0.0
    %2555 = vmatpush1.msra.mxu0 0.0
    %2556 = vmatprep.subr.mxu0 0.0
    %2557 = vmatpush1.msra.mxu0 0.0
    %2558 = vmatprep.subr.mxu0 0.0
    %2559 = vmatpush1.msra.mxu0 0.0
    %2560 = vmatprep.mubr.f32.mxu0 0.0
    %2561 = vmatmul.mubr.f32.gmra.mrb[0].mxu0 %v2494
    %v2562 = vpop.f32.mrb[0].mxu0
    %v2563 = vadd.f32 0.0, %v2562
    %v2564 = vpop.f32.mrb[0].mxu0
    %2565 = vdwg.mxu0
    %v2566 = vtanh.pop %v2563
    %v2567 = vsub.f32 1.0, %v2489
    %v2568 = vmul.f32 %v2567, 0.5
    %v2570 = vsub.f32 %v2566, %v2411
    %v2571 = vmul.f32 %v2568, %v2570
    %2573 = vrot.lane.b32.xlu0 %v2571, 32
    %v2574 = vpop.permute.xlu0 %2573
    %v2576 = vadd.f32 %v2072, %v2574
    %s2577 = smul.u32 %s2064, 8
    %s2578 = scalar_lea.vmem [#allocation5], %s2577
    %v2579 = vld [vmem:[%s2578] sm:$0xff]
    %2581 = vrot.lane.b32.xlu0 %v2576, 104
    %v2582 = vpop.permute.xlu0 %2581
    %v2584 = vsel %vm136, %v2579, %v2582
    %v2586 = vsel %vm144, %v2584, 0
    %2588 = vmatprep.subr.mxu0 0.0
    %2589 = vmatpush1.msra.mxu0 %v100
    %2590 = vmatprep.subr.mxu0 0.0
    %2591 = vmatpush1.msra.mxu0 %v101
    %2592 = vmatprep.subr.mxu0 0.0
    %2593 = vmatpush1.msra.mxu0 %v102
    %2594 = vmatprep.subr.mxu0 0.0
    %2595 = vmatpush1.msra.mxu0 %v103
    %2596 = vmatprep.subr.mxu0 0.0
    %2597 = vmatpush1.msra.mxu0 %v104
    %2598 = vmatprep.subr.mxu0 0.0
    %2599 = vmatpush1.msra.mxu0 0.0
    %2600 = vmatprep.subr.mxu0 0.0
    %2601 = vmatpush1.msra.mxu0 0.0
    %2602 = vmatprep.subr.mxu0 0.0
    %2603 = vmatpush1.msra.mxu0 0.0
    %2604 = vmatprep.subr.mxu0 0.0
    %2605 = vmatpush1.msra.mxu0 0.0
    %2606 = vmatprep.subr.mxu0 0.0
    %2607 = vmatpush1.msra.mxu0 0.0
    %2608 = vmatprep.subr.mxu0 0.0
    %2609 = vmatpush1.msra.mxu0 0.0
    %2610 = vmatprep.subr.mxu0 0.0
    %2611 = vmatpush1.msra.mxu0 0.0
    %2612 = vmatprep.subr.mxu0 0.0
    %2613 = vmatpush1.msra.mxu0 0.0
    %2614 = vmatprep.subr.mxu0 0.0
    %2615 = vmatpush1.msra.mxu0 0.0
    %2616 = vmatprep.subr.mxu0 0.0
    %2617 = vmatpush1.msra.mxu0 0.0
    %2618 = vmatprep.subr.mxu0 0.0
    %2619 = vmatpush1.msra.mxu0 0.0
    %2620 = vmatprep.subr.mxu0 0.0
    %2621 = vmatpush1.msra.mxu0 0.0
    %2622 = vmatprep.subr.mxu0 0.0
    %2623 = vmatpush1.msra.mxu0 0.0
    %2624 = vmatprep.subr.mxu0 0.0
    %2625 = vmatpush1.msra.mxu0 0.0
    %2626 = vmatprep.subr.mxu0 0.0
    %2627 = vmatpush1.msra.mxu0 0.0
    %2628 = vmatprep.subr.mxu0 0.0
    %2629 = vmatpush1.msra.mxu0 0.0
    %2630 = vmatprep.subr.mxu0 0.0
    %2631 = vmatpush1.msra.mxu0 0.0
    %2632 = vmatprep.subr.mxu0 0.0
    %2633 = vmatpush1.msra.mxu0 0.0
    %2634 = vmatprep.subr.mxu0 0.0
    %2635 = vmatpush1.msra.mxu0 0.0
    %2636 = vmatprep.subr.mxu0 0.0
    %2637 = vmatpush1.msra.mxu0 0.0
    %2638 = vmatprep.subr.mxu0 0.0
    %2639 = vmatpush1.msra.mxu0 0.0
    %2640 = vmatprep.subr.mxu0 0.0
    %2641 = vmatpush1.msra.mxu0 0.0
    %2642 = vmatprep.subr.mxu0 0.0
    %2643 = vmatpush1.msra.mxu0 0.0
    %2644 = vmatprep.subr.mxu0 0.0
    %2645 = vmatpush1.msra.mxu0 0.0
    %2646 = vmatprep.subr.mxu0 0.0
    %2647 = vmatpush1.msra.mxu0 0.0
    %2648 = vmatprep.subr.mxu0 0.0
    %2649 = vmatpush1.msra.mxu0 0.0
    %2650 = vmatprep.subr.mxu0 0.0
    %2651 = vmatpush1.msra.mxu0 0.0
    %2652 = vmatprep.mubr.f32.mxu0 0.0
    %2653 = vmatmul.mubr.f32.gmra.mrb[0].mxu0 %v2586
    %v2654 = vpop.f32.mrb[0].mxu0
    %v2655 = vadd.f32 %v142, %v2654
    %v2656 = vpop.f32.mrb[0].mxu0
    %2657 = vdwg.mxu0
    %v2658 = vxor.u32 %v2655, 2147483648
    %v2659 = vmul.f32 %v2658, 1.442695
    %v2660 = vpow.pop %v2659
    %v2661 = vadd.f32 %v2660, 1.0
    %v2662 = vrcp.pop %v2661
    %v2663 = vmul.f32 1.0, %v2662
    %2665 = vrot.lane.b32.xlu0 %v2655, 32
    %v2666 = vpop.permute.xlu0 %2665
    %v2668 = vmul.f32 %v2663, %v2666
    %2670 = vrot.lane.b32.xlu0 %v2668, 64
    %v2671 = vpop.permute.xlu0 %2670
    %v2673 = vadd.f32 %v2655, %v2671
    %v2674 = vtanh.pop %v2673
    %v2675 = vsub.f32 1.0, %v2663
    %2677 = vrot.lane.b32.xlu0 %v2674, 96
    %v2678 = vpop.permute.xlu0 %2677
    %v2680 = vmul.f32 %v2675, %v2678
    %v2681 = vmul.f32 %v2663, %v2576
    %v2682 = vadd.f32 %v2680, %v2681
    %vm2683 = vcmp.ne.f32.partialorder %v2579, -1.0
    %v2684 = vsel %vm2683, 1, 0
    %2685 = vset.pattern.permute.xlu0 7
    %2686 = vperm.xlu0 %2685, %v2684
    %v2687 = vpop.permute.xlu0 %2686
    %vm2688 = vcmp.eq.s32.totalorder %v2687, 1
    %v2689 = vsel %vm2688, %v2682, %v2576
    %2691 = vrot.lane.b32.xlu0 %v2689, 96
    %v2692 = vpop.permute.xlu0 %2691
    %v2693 = vsel %vm596, %v2692, 0
    %2695 = vmatprep.subr.mxu0 0.0
    %2696 = vmatpush1.msra.mxu0 %v114
    %2697 = vmatprep.subr.mxu0 0.0
    %2698 = vmatpush1.msra.mxu0 %v115
    %2699 = vmatprep.subr.mxu0 0.0
    %2700 = vmatpush1.msra.mxu0 %v116
    %2701 = vmatprep.subr.mxu0 0.0
    %2702 = vmatpush1.msra.mxu0 %v117
    %2703 = vmatprep.subr.mxu0 0.0
    %2704 = vmatpush1.msra.mxu0 0.0
    %2705 = vmatprep.subr.mxu0 0.0
    %2706 = vmatpush1.msra.mxu0 0.0
    %2707 = vmatprep.subr.mxu0 0.0
    %2708 = vmatpush1.msra.mxu0 0.0
    %2709 = vmatprep.subr.mxu0 0.0
    %2710 = vmatpush1.msra.mxu0 0.0
    %2711 = vmatprep.subr.mxu0 0.0
    %2712 = vmatpush1.msra.mxu0 0.0
    %2713 = vmatprep.subr.mxu0 0.0
    %2714 = vmatpush1.msra.mxu0 0.0
    %2715 = vmatprep.subr.mxu0 0.0
    %2716 = vmatpush1.msra.mxu0 0.0
    %2717 = vmatprep.subr.mxu0 0.0
    %2718 = vmatpush1.msra.mxu0 0.0
    %2719 = vmatprep.subr.mxu0 0.0
    %2720 = vmatpush1.msra.mxu0 0.0
    %2721 = vmatprep.subr.mxu0 0.0
    %2722 = vmatpush1.msra.mxu0 0.0
    %2723 = vmatprep.subr.mxu0 0.0
    %2724 = vmatpush1.msra.mxu0 0.0
    %2725 = vmatprep.subr.mxu0 0.0
    %2726 = vmatpush1.msra.mxu0 0.0
    %2727 = vmatprep.subr.mxu0 0.0
    %2728 = vmatpush1.msra.mxu0 0.0
    %2729 = vmatprep.subr.mxu0 0.0
    %2730 = vmatpush1.msra.mxu0 0.0
    %2731 = vmatprep.subr.mxu0 0.0
    %2732 = vmatpush1.msra.mxu0 0.0
    %2733 = vmatprep.subr.mxu0 0.0
    %2734 = vmatpush1.msra.mxu0 0.0
    %2735 = vmatprep.subr.mxu0 0.0
    %2736 = vmatpush1.msra.mxu0 0.0
    %2737 = vmatprep.subr.mxu0 0.0
    %2738 = vmatpush1.msra.mxu0 0.0
    %2739 = vmatprep.subr.mxu0 0.0
    %2740 = vmatpush1.msra.mxu0 0.0
    %2741 = vmatprep.subr.mxu0 0.0
    %2742 = vmatpush1.msra.mxu0 0.0
    %2743 = vmatprep.subr.mxu0 0.0
    %2744 = vmatpush1.msra.mxu0 0.0
    %2745 = vmatprep.subr.mxu0 0.0
    %2746 = vmatpush1.msra.mxu0 0.0
    %2747 = vmatprep.subr.mxu0 0.0
    %2748 = vmatpush1.msra.mxu0 0.0
    %2749 = vmatprep.subr.mxu0 0.0
    %2750 = vmatpush1.msra.mxu0 0.0
    %2751 = vmatprep.subr.mxu0 0.0
    %2752 = vmatpush1.msra.mxu0 0.0
    %2753 = vmatprep.subr.mxu0 0.0
    %2754 = vmatpush1.msra.mxu0 0.0
    %2755 = vmatprep.subr.mxu0 0.0
    %2756 = vmatpush1.msra.mxu0 0.0
    %2757 = vmatprep.subr.mxu0 0.0
    %2758 = vmatpush1.msra.mxu0 0.0
    %2759 = vmatprep.mubr.f32.mxu0 0.0
    %2760 = vmatmul.mubr.f32.gmra.mrb[0].mxu0 %v2693
    %v2761 = vpop.f32.mrb[0].mxu0
    %v2762 = vadd.f32 %v879, %v2761
    %v2763 = vpop.f32.mrb[0].mxu0
    %2764 = vdwg.mxu0
    %v2765 = vsel %vm951, %v2762, -inf
    %2766 = vmax.xlane.f32.xlu0 %v2765
    %v2767 = vpop.xlane.xlu0 %2766
    %v2768 = vsub.f32 %v2762, %v2767
    %v2769 = vmul.f32 %v2768, 1.442695
    %v2770 = vpow.pop %v2769
    %v2771 = vsel %vm951, %v2770, 0.0
    %2772 = vadd.xlane.f32.xlu0 %v2771
    %v2773 = vpop.xlane.xlu0 %2772
    %v2774 = vlog2.pop %v2773
    %v2775 = vmul.f32 %v2774, 0.6931472
    %v2776 = vadd.f32 %v2775, %v2767
    %v2777 = vsub.f32 %v2762, %v2776
    %vm2778 = vcmp.eq.f32.partialorder %v2762, %v2767
    %v2779 = vsel %vm2778, %v966, 16
    %v2780 = vsel %vm951, %v2779, 2147483647
    %v2781 = vand.u32 %v2780, 65535
    %v2782 = vshra.s32 %v2780, 16
    %v2783 = vcvt.s32.f32 %v2781
    %v2784 = vcvt.s32.f32 %v2782
    %2785 = vmin.xlane.f32.xlu0 %v2784
    %v2786 = vpop.xlane.xlu0 %2785
    %vm2787 = vcmp.eq.f32.partialorder %v2784, %v2786
    %v2788 = vsel %vm2787, %v2783, inf
    %2789 = vmin.xlane.f32.xlu0 %v2788
    %v2790 = vpop.xlane.xlu0 %2789
    %v2791 = vcvt.f32.s32 %v2790
    %v2792 = vcvt.f32.s32 %v2786
    %v2793 = vshll.u32 %v2792, 16
    %v2794 = vadd.s32 %v2793, %v2791
    %vm2795 = vcmp.eq.s32.totalorder %v966, %v2794
    %v2796 = vsel %vm2795, 1, 0
    %v2797 = vcvt.s32.f32 %v2796
    %2799 = vrot.lane.b32.xlu0 %v2762, 112
    %v2800 = vpop.permute.xlu0 %2799
    %v2803 = vsel %vm951, %v2797, 0
    %2805 = vmatprep.subr.mxu0 0.0
    %2806 = vmatpush1.msra.mxu0 %v119
    %2807 = vmatprep.subr.mxu0 0.0
    %2808 = vmatpush1.msra.mxu0 %v120
    %2809 = vmatprep.subr.mxu0 0.0
    %2810 = vmatpush1.msra.mxu0 0.0
    %2811 = vmatprep.subr.mxu0 0.0
    %2812 = vmatpush1.msra.mxu0 0.0
    %2813 = vmatprep.subr.mxu0 0.0
    %2814 = vmatpush1.msra.mxu0 0.0
    %2815 = vmatprep.subr.mxu0 0.0
    %2816 = vmatpush1.msra.mxu0 0.0
    %2817 = vmatprep.subr.mxu0 0.0
    %2818 = vmatpush1.msra.mxu0 0.0
    %2819 = vmatprep.subr.mxu0 0.0
    %2820 = vmatpush1.msra.mxu0 0.0
    %2821 = vmatprep.subr.mxu0 0.0
    %2822 = vmatpush1.msra.mxu0 0.0
    %2823 = vmatprep.subr.mxu0 0.0
    %2824 = vmatpush1.msra.mxu0 0.0
    %2825 = vmatprep.subr.mxu0 0.0
    %2826 = vmatpush1.msra.mxu0 0.0
    %2827 = vmatprep.subr.mxu0 0.0
    %2828 = vmatpush1.msra.mxu0 0.0
    %2829 = vmatprep.subr.mxu0 0.0
    %2830 = vmatpush1.msra.mxu0 0.0
    %2831 = vmatprep.subr.mxu0 0.0
    %2832 = vmatpush1.msra.mxu0 0.0
    %2833 = vmatprep.subr.mxu0 0.0
    %2834 = vmatpush1.msra.mxu0 0.0
    %2835 = vmatprep.subr.mxu0 0.0
    %2836 = vmatpush1.msra.mxu0 0.0
    %2837 = vmatprep.subr.mxu0 0.0
    %2838 = vmatpush1.msra.mxu0 0.0
    %2839 = vmatprep.subr.mxu0 0.0
    %2840 = vmatpush1.msra.mxu0 0.0
    %2841 = vmatprep.subr.mxu0 0.0
    %2842 = vmatpush1.msra.mxu0 0.0
    %2843 = vmatprep.subr.mxu0 0.0
    %2844 = vmatpush1.msra.mxu0 0.0
    %2845 = vmatprep.subr.mxu0 0.0
    %2846 = vmatpush1.msra.mxu0 0.0
    %2847 = vmatprep.subr.mxu0 0.0
    %2848 = vmatpush1.msra.mxu0 0.0
    %2849 = vmatprep.subr.mxu0 0.0
    %2850 = vmatpush1.msra.mxu0 0.0
    %2851 = vmatprep.subr.mxu0 0.0
    %2852 = vmatpush1.msra.mxu0 0.0
    %2853 = vmatprep.subr.mxu0 0.0
    %2854 = vmatpush1.msra.mxu0 0.0
    %2855 = vmatprep.subr.mxu0 0.0
    %2856 = vmatpush1.msra.mxu0 0.0
    %2857 = vmatprep.subr.mxu0 0.0
    %2858 = vmatpush1.msra.mxu0 0.0
    %2859 = vmatprep.subr.mxu0 0.0
    %2860 = vmatpush1.msra.mxu0 0.0
    %2861 = vmatprep.subr.mxu0 0.0
    %2862 = vmatpush1.msra.mxu0 0.0
    %2863 = vmatprep.subr.mxu0 0.0
    %2864 = vmatpush1.msra.mxu0 0.0
    %2865 = vmatprep.subr.mxu0 0.0
    %2866 = vmatpush1.msra.mxu0 0.0
    %2867 = vmatprep.subr.mxu0 0.0
    %2868 = vmatpush1.msra.mxu0 0.0
    %2869 = vmatprep.mubr.f32.mxu0 0.0
    %2870 = vmatmul.mubr.f32.gmra.mrb[0].mxu0 %v2803
    %v2871 = vpop.f32.mrb[0].mxu0
    %v2872 = vadd.f32 %v2800, %v2871
    %v2873 = vpop.f32.mrb[0].mxu0
    %2874 = vdwg.mxu0
    %v2875 = vmax.f32 %v2872, 0.0
    %v2877 = vsel %vm596, %v2875, 0
    %2879 = vmatprep.subr.mxu0 0.0
    %2880 = vmatpush1.msra.mxu0 %v121
    %2881 = vmatprep.subr.mxu0 0.0
    %2882 = vmatpush1.msra.mxu0 %v122
    %2883 = vmatprep.subr.mxu0 0.0
    %2884 = vmatpush1.msra.mxu0 %v123
    %2885 = vmatprep.subr.mxu0 0.0
    %2886 = vmatpush1.msra.mxu0 %v124
    %2887 = vmatprep.subr.mxu0 0.0
    %2888 = vmatpush1.msra.mxu0 0.0
    %2889 = vmatprep.subr.mxu0 0.0
    %2890 = vmatpush1.msra.mxu0 0.0
    %2891 = vmatprep.subr.mxu0 0.0
    %2892 = vmatpush1.msra.mxu0 0.0
    %2893 = vmatprep.subr.mxu0 0.0
    %2894 = vmatpush1.msra.mxu0 0.0
    %2895 = vmatprep.subr.mxu0 0.0
    %2896 = vmatpush1.msra.mxu0 0.0
    %2897 = vmatprep.subr.mxu0 0.0
    %2898 = vmatpush1.msra.mxu0 0.0
    %2899 = vmatprep.subr.mxu0 0.0
    %2900 = vmatpush1.msra.mxu0 0.0
    %2901 = vmatprep.subr.mxu0 0.0
    %2902 = vmatpush1.msra.mxu0 0.0
    %2903 = vmatprep.subr.mxu0 0.0
    %2904 = vmatpush1.msra.mxu0 0.0
    %2905 = vmatprep.subr.mxu0 0.0
    %2906 = vmatpush1.msra.mxu0 0.0
    %2907 = vmatprep.subr.mxu0 0.0
    %2908 = vmatpush1.msra.mxu0 0.0
    %2909 = vmatprep.subr.mxu0 0.0
    %2910 = vmatpush1.msra.mxu0 0.0
    %2911 = vmatprep.subr.mxu0 0.0
    %2912 = vmatpush1.msra.mxu0 0.0
    %2913 = vmatprep.subr.mxu0 0.0
    %2914 = vmatpush1.msra.mxu0 0.0
    %2915 = vmatprep.subr.mxu0 0.0
    %2916 = vmatpush1.msra.mxu0 0.0
    %2917 = vmatprep.subr.mxu0 0.0
    %2918 = vmatpush1.msra.mxu0 0.0
    %2919 = vmatprep.subr.mxu0 0.0
    %2920 = vmatpush1.msra.mxu0 0.0
    %2921 = vmatprep.subr.mxu0 0.0
    %2922 = vmatpush1.msra.mxu0 0.0
    %2923 = vmatprep.subr.mxu0 0.0
    %2924 = vmatpush1.msra.mxu0 0.0
    %2925 = vmatprep.subr.mxu0 0.0
    %2926 = vmatpush1.msra.mxu0 0.0
    %2927 = vmatprep.subr.mxu0 0.0
    %2928 = vmatpush1.msra.mxu0 0.0
    %2929 = vmatprep.subr.mxu0 0.0
    %2930 = vmatpush1.msra.mxu0 0.0
    %2931 = vmatprep.subr.mxu0 0.0
    %2932 = vmatpush1.msra.mxu0 0.0
    %2933 = vmatprep.subr.mxu0 0.0
    %2934 = vmatpush1.msra.mxu0 0.0
    %2935 = vmatprep.subr.mxu0 0.0
    %2936 = vmatpush1.msra.mxu0 0.0
    %2937 = vmatprep.subr.mxu0 0.0
    %2938 = vmatpush1.msra.mxu0 0.0
    %2939 = vmatprep.subr.mxu0 0.0
    %2940 = vmatpush1.msra.mxu0 0.0
    %2941 = vmatprep.subr.mxu0 0.0
    %2942 = vmatpush1.msra.mxu0 0.0
    %2943 = vmatprep.mubr.f32.mxu0 0.0
    %2944 = vmatmul.mubr.f32.gmra.mrb[0].mxu0 %v2877
    %v2945 = vpop.f32.mrb[0].mxu0
    %v2946 = vadd.f32 %v1069, %v2945
    %v2947 = vpop.f32.mrb[0].mxu0
    %2948 = vdwg.mxu0
    %v2949 = vxor.u32 %v2946, 2147483648
    %v2950 = vmul.f32 %v2949, 1.442695
    %v2951 = vpow.pop %v2950
    %v2952 = vadd.f32 %v2951, 1.0
    %v2953 = vrcp.pop %v2952
    %v2954 = vmul.f32 1.0, %v2953
    %2956 = vrot.lane.b32.xlu0 %v2954, 16
    %v2957 = vpop.permute.xlu0 %2956
    %v2959 = vsel %vm951, %v2777, %v2957
    %v2960 = vstv %s2063
    %vm2961 = vcmp.lt.s32.totalorder %v244, %v2960
    %v2962 = vsel %vm2961, 1, 0
    %vm2963 = vcmp.eq.s32.totalorder %v2962, 1
    %v2964 = vsel %vm2963, %v2959, 0.0
    %s2965 = scalar_lea.vmem [#allocation13], %s2577
    %2966 = vst.msk [vmem:[%s2965] sm:$0xff] %vm126, %v2964
    // Predicated region
    $region79: #{tpu_custom_call.1} parent=1 // pred_check
      _
    $region80: #{tpu_custom_call.1} parent=1 // pred_check_branch
      %2968 = sbr.rel (0) target = $region82
    $region81: #{tpu_custom_call.1} parent=1 // pred_region
      %s2970 = ssub.s32 1024, 1024
      %2971 = vsyncadd [#allocation7], %s2970
      %s2972 = sshll.u32 [#allocation13], 4
      %s2973 = int_to_ptr.vmem [resolvable:$true] %s2972
      %2978 = dma.vmem_to_hbm [thread:$0]  %s2973, 1024, %s11, [#allocation7], 128, 128, 8
    $region82: #{tpu_custom_call.1} parent=1 // pred_fallthru
      _
    // Predicated region
    $region83: #{tpu_custom_call.1} parent=1 // pred_check
      _
    $region84: #{tpu_custom_call.1} parent=1 // pred_check_branch
      %2980 = sbr.rel (0) target = $region86
    $region85: #{tpu_custom_call.1} parent=1 // pred_region
      %2981 = dma.done [#allocation7], 1024
    $region86: #{tpu_custom_call.1} parent=1 // pred_fallthru
      _
    %2982 = vsyncpa [#allocation6], 1
    %2983 = vsyncpa [#allocation9], 1
    %2984 = vsyncpa [#allocation12], 1
    %2985 = vsyncpa [#allocation7], 1

</llo_original>
